<compile_context>
chip_gen: v5e
topology: v5e:2x2
jax: 0.10.0
libtpu: 0.0.40
codegen_flags: <defaults>
</compile_context>

<pallas_src>
import functools

import jax
import jax.numpy as jnp
from jax import lax
from jax.experimental import pallas as pl
from jax.experimental.pallas import tpu as pltpu


# ------------------------------ fused kernel ---------------------------------


def _group_kernel(x_ref, mask_ref, w1_ref, b1_ref, w2_ref, b2_ref,
                  wd_ref, bd_ref, wut_ref, bu_ref, wf_ref, bf_ref,
                  o_ref, cur_ref, h_ref, patch_ref, *, C, Wp, P, M, inv_hw):
    """One RCAB step (grid = (batch, block)); trailing conv on the last block.

    x_ref / o_ref : (1, C, P) channel-major padded-flat blocks (zero borders).
    mask_ref      : (1, P) interior mask (1.0 on valid pixels, 0.0 on pad).
    w1/w2/wf      : (1, C, 9C) / (C, 9C) bf16 im2col conv weights.
    b1/b2/bf      : (1, C, 1) / (C, 1) f32 biases.
    wd/bd/wut/bu  : channel-attention weights (wd: (1,C,Cr), wut: (1,C,Cr)).
    cur_ref,h_ref : VMEM (C, 2M+P) f32 margin-extended activation scratches.
    patch_ref     : VMEM (9C, P) bf16 im2col scratch.
    """
    blk = pl.program_id(1)
    last = pl.num_programs(1) - 1
    mask = mask_ref[...]                                   # (1, P)

    def conv3x3(src_ref, w_bf16):
        # patch[t*C:(t+1)*C, p] = src[:, p + d_t]  (padded-flat tap shift)
        for t in range(9):
            ky, kx = divmod(t, 3)
            d = (ky - 1) * Wp + (kx - 1)
            patch_ref[t * C:(t + 1) * C, :] = (
                src_ref[:, M + d:M + d + P].astype(jnp.bfloat16))
        return jnp.dot(w_bf16, patch_ref[...],
                       preferred_element_type=jnp.float32)  # (C, P) f32

    @pl.when(blk == 0)
    def _init():
        # Zero only the lane margins (interior is fully rewritten each block).
        zeros_m = jnp.zeros((C, M), jnp.float32)
        cur_ref[:, :M] = zeros_m
        cur_ref[:, M + P:] = zeros_m
        h_ref[:, :M] = zeros_m
        h_ref[:, M + P:] = zeros_m
        cur_ref[:, M:M + P] = x_ref[0]          # x already has zero borders

    # ---------------- RCAB: conv3x3 + ReLU ----------------------------------
    h = jnp.maximum(conv3x3(cur_ref, w1_ref[0]) + b1_ref[0], 0.0) * mask
    h_ref[:, M:M + P] = h

    # ---------------- conv3x3 + channel attention + block residual ----------
    res = (conv3x3(h_ref, w2_ref[0]) + b2_ref[0]) * mask            # (C, P)

    pooled = jnp.sum(res, axis=1, keepdims=True) * inv_hw            # (C, 1)
    z = jnp.maximum(jnp.sum(wd_ref[0] * pooled, axis=0, keepdims=True)
                    + bd_ref[0], 0.0)                                # (1, Cr)
    y = jax.nn.sigmoid(jnp.sum(wut_ref[0] * z, axis=1, keepdims=True)
                       + bu_ref[0])                                  # (C, 1)

    cur_ref[:, M:M + P] = res * y + cur_ref[:, M:M + P]

    # ---------------- trailing group conv + group residual ------------------
    @pl.when(blk == last)
    def _final():
        out = (conv3x3(cur_ref, wf_ref[...]) + bf_ref[...]) * mask + x_ref[0]
        o_ref[0] = out


# ------------------------------ wrapper --------------------------------------


def residual_group_forward(x, params):
    """x: (B, H, W, C) NHWC float32."""
    B, H, W, C = x.shape
    blocks = params["blocks"]
    nb = len(blocks)
    Cr = blocks[0]["wd"].shape[1]
    Hp, Wp = H + 2, W + 2
    P = Hp * Wp
    M = ((Wp + 2 + 127) // 128) * 128           # 128-aligned lane margin >= Wp+1

    def conv_w(w):  # (9, Ci, Co) -> (Co, 9*Ci) im2col weight, bf16
        return jnp.transpose(w, (2, 0, 1)).reshape(C, 9 * C).astype(jnp.bfloat16)

    W1 = jnp.stack([conv_w(b["w1"]) for b in blocks])              # (nb,C,9C) bf16
    B1 = jnp.stack([b["b1"].reshape(C, 1) for b in blocks])        # (nb,C,1)
    W2 = jnp.stack([conv_w(b["w2"]) for b in blocks])
    B2 = jnp.stack([b["b2"].reshape(C, 1) for b in blocks])
    WD = jnp.stack([b["wd"] for b in blocks])                      # (nb,C,Cr)
    BD = jnp.stack([b["bd"].reshape(1, Cr) for b in blocks])       # (nb,1,Cr)
    WUT = jnp.stack([b["wu"].T for b in blocks])                   # (nb,C,Cr)
    BU = jnp.stack([b["bu"].reshape(C, 1) for b in blocks])        # (nb,C,1)
    WF = conv_w(params["wf"])                                      # (C,9C) bf16
    BF = params["bf"].reshape(C, 1)                                # (C,1)

    # Channel-major, zero-padded, flattened input (layout plumbing in XLA).
    xp = jnp.pad(x, ((0, 0), (1, 1), (1, 1), (0, 0)))
    xcm = jnp.transpose(xp, (0, 3, 1, 2)).reshape(B, C, P)

    # Interior mask over the padded-flat spatial axis.
    yy = jnp.arange(P, dtype=jnp.int32) // Wp
    xx = jnp.arange(P, dtype=jnp.int32) % Wp
    mask = (((yy >= 1) & (yy <= H) & (xx >= 1) & (xx <= W))
            .astype(jnp.float32))[None, :]                         # (1, P)

    nconv = 2 * nb + 1
    cost = pl.CostEstimate(
        flops=2 * B * nconv * 9 * C * C * P + 4 * B * nb * C * Cr,
        transcendentals=B * nb * C,
        bytes_accessed=(8 * x.size
                        + B * nb * (2 * 2 * 9 * C * C + 8 * C * Cr + 12 * C)
                        + 2 * 9 * C * C))

    vmem_bytes = (2 * C * (2 * M + P) * 4 + 9 * C * P * 2      # scratches
                  + 4 * C * P * 4                               # x/out blocks
                  + 8 * 9 * C * C * 2                           # streamed weights
                  + (2 << 20))                                  # headroom
    vmem_limit = int(min(64 << 20, max(32 << 20, 2 * vmem_bytes)))

    kern = functools.partial(_group_kernel, C=C, Wp=Wp, P=P, M=M,
                             inv_hw=1.0 / float(H * W))

    blkmap = lambda b, k: (k, 0, 0)

    out_cm = pl.pallas_call(
        kern,
        out_shape=jax.ShapeDtypeStruct((B, C, P), jnp.float32),
        grid_spec=pltpu.PrefetchScalarGridSpec(
            num_scalar_prefetch=0,
            grid=(B, nb),
            in_specs=[
                pl.BlockSpec((1, C, P), lambda b, k: (b, 0, 0)),     # x
                pl.BlockSpec((1, P), lambda b, k: (0, 0)),           # mask
                pl.BlockSpec((1, C, 9 * C), blkmap),                 # W1
                pl.BlockSpec((1, C, 1), blkmap),                     # B1
                pl.BlockSpec((1, C, 9 * C), blkmap),                 # W2
                pl.BlockSpec((1, C, 1), blkmap),                     # B2
                pl.BlockSpec((1, C, Cr), blkmap),                    # WD
                pl.BlockSpec((1, 1, Cr), blkmap),                    # BD
                pl.BlockSpec((1, C, Cr), blkmap),                    # WU^T
                pl.BlockSpec((1, C, 1), blkmap),                     # BU
                pl.BlockSpec((C, 9 * C), lambda b, k: (0, 0)),       # WF
                pl.BlockSpec((C, 1), lambda b, k: (0, 0)),           # BF
            ],
            out_specs=pl.BlockSpec((1, C, P), lambda b, k: (b, 0, 0)),
            scratch_shapes=[
                pltpu.VMEM((C, 2 * M + P), jnp.float32),   # cur (margined)
                pltpu.VMEM((C, 2 * M + P), jnp.float32),   # h   (margined)
                pltpu.VMEM((9 * C, P), jnp.bfloat16),      # im2col patches
            ]),
        compiler_params=pltpu.CompilerParams(
            dimension_semantics=("parallel", "arbitrary"),
            vmem_limit_bytes=vmem_limit),
        cost_estimate=cost,
    )(xcm, mask, W1, B1, W2, B2, WD, BD, WUT, BU, WF, BF)

    out = out_cm.reshape(B, C, Hp, Wp)[:, :, 1:H + 1, 1:W + 1]
    return jnp.transpose(out, (0, 2, 3, 1))


# ------------------------- reference (pure JAX) -------------------------------


def _conv3x3_ref(x, w, b, conv_dtype):
    whwio = w.reshape(3, 3, w.shape[1], w.shape[2]).astype(conv_dtype)
    y = lax.conv_general_dilated(x.astype(conv_dtype), whwio, (1, 1), "SAME",
                                 dimension_numbers=("NHWC", "HWIO", "NHWC"),
                                 preferred_element_type=jnp.float32)
    return y + b.reshape(1, 1, 1, -1)


def residual_group_ref(x, params, conv_dtype=jnp.float32):
    out = x
    for blk in params["blocks"]:
        h = jnp.maximum(_conv3x3_ref(out, blk["w1"], blk["b1"], conv_dtype), 0.0)
        res = _conv3x3_ref(h, blk["w2"], blk["b2"], conv_dtype)
        pooled = jnp.mean(res, axis=(1, 2), keepdims=True)
        z = jnp.maximum(
            jnp.einsum("bhwc,cd->bhwd", pooled, blk["wd"],
                       precision=lax.Precision.HIGHEST)
            + blk["bd"].reshape(1, 1, 1, -1), 0.0)
        y = jax.nn.sigmoid(
            jnp.einsum("bhwc,cd->bhwd", z, blk["wu"],
                       precision=lax.Precision.HIGHEST)
            + blk["bu"].reshape(1, 1, 1, -1))
        out = res * y + out
    out = _conv3x3_ref(out, params["wf"], params["bf"], conv_dtype) + x
    return out


# ------------------------------ parameters -----------------------------------


def init_params(key, n_feat, reduction, n_resblocks):
    cr = n_feat // reduction
    keys = jax.random.split(key, 4 * n_resblocks + 1)
    s_conv = 1.0 / (3.0 * (n_feat ** 0.5))
    s_d = 1.0 / (n_feat ** 0.5)
    s_u = 1.0 / (cr ** 0.5)
    blocks = []
    idx = 0
    for _ in range(n_resblocks):
        k1, k2, k3, k4 = keys[idx:idx + 4]
        idx += 4
        blocks.append(dict(
            w1=jax.random.normal(k1, (9, n_feat, n_feat), jnp.float32) * s_conv,
            b1=jnp.full((1, n_feat), 0.01, jnp.float32),
            w2=jax.random.normal(k2, (9, n_feat, n_feat), jnp.float32) * s_conv,
            b2=jnp.full((1, n_feat), -0.01, jnp.float32),
            wd=jax.random.normal(k3, (n_feat, cr), jnp.float32) * s_d,
            bd=jnp.zeros((1, cr), jnp.float32),
            wu=jax.random.normal(k4, (cr, n_feat), jnp.float32) * s_u,
            bu=jnp.zeros((1, n_feat), jnp.float32),
        ))
    return dict(
        blocks=blocks,
        wf=jax.random.normal(keys[idx], (9, n_feat, n_feat), jnp.float32) * s_conv,
        bf=jnp.zeros((1, n_feat), jnp.float32),
    )


# --------------------------------- main --------------------------------------


if __name__ == "__main__":
    B, H, W = 2, 16, 16
    n_feat, reduction, n_resblocks = 16, 4, 2

    key = jax.random.PRNGKey(0)
    kx, kp = jax.random.split(key)
    x = jax.random.normal(kx, (B, H, W, n_feat), jnp.float32)
    params = init_params(kp, n_feat, reduction, n_resblocks)

    out = jax.block_until_ready(residual_group_forward(x, params))

    # Tight check vs. a reference that also runs the convs in bf16 (same
    # rounding as the kernel's MXU path), loose sanity check vs. full f32.
    ref_bf16 = residual_group_ref(x, params, jnp.bfloat16)
    ref_f32 = residual_group_ref(x, params, jnp.float32)
    err_bf = float(jnp.max(jnp.abs(out - ref_bf16)))
    err_f32 = float(jnp.max(jnp.abs(out - ref_f32)))
    assert jnp.allclose(out, ref_bf16, atol=2e-3, rtol=2e-3), (
        f"mismatch vs bf16-conv reference: max abs err {err_bf}")
    assert jnp.allclose(out, ref_f32, atol=1e-1, rtol=1e-1), (
        f"mismatch vs f32 reference: max abs err {err_f32}")

    print("KERNEL_OK")
</pallas_src>

<mosaic_0001>
module attributes {stable_mosaic.version = 11 : i64} {
  func.func @_group_kernel(%arg0: i32, %arg1: i32, %arg2: memref<1x16x324xf32, #tpu.memory_space<vmem>>, %arg3: memref<1x324xf32, #tpu.memory_space<vmem>>, %arg4: memref<1x16x144xbf16, #tpu.memory_space<vmem>>, %arg5: memref<1x16x1xf32, #tpu.memory_space<vmem>>, %arg6: memref<1x16x144xbf16, #tpu.memory_space<vmem>>, %arg7: memref<1x16x1xf32, #tpu.memory_space<vmem>>, %arg8: memref<1x16x4xf32, #tpu.memory_space<vmem>>, %arg9: memref<1x1x4xf32, #tpu.memory_space<vmem>>, %arg10: memref<1x16x4xf32, #tpu.memory_space<vmem>>, %arg11: memref<1x16x1xf32, #tpu.memory_space<vmem>>, %arg12: memref<16x144xbf16, #tpu.memory_space<vmem>>, %arg13: memref<16x1xf32, #tpu.memory_space<vmem>>, %arg14: memref<1x16x324xf32, #tpu.memory_space<vmem>>, %arg15: memref<16x580xf32, #tpu.memory_space<vmem>>, %arg16: memref<16x580xf32, #tpu.memory_space<vmem>>, %arg17: memref<144x324xbf16, #tpu.memory_space<vmem>>) attributes {dimension_semantics = [#tpu.dimension_semantics<parallel>, #tpu.dimension_semantics<arbitrary>], iteration_bounds = array<i64: 2, 2>, scalar_prefetch = 0 : i64, scratch_operands = 3 : i64, tpu.core_type = #tpu.core_type<tc>, window_params = [{transform_indices = @transform_0, window_bounds = array<i64: 1, 16, 324>}, {pipeline_mode = #tpu.pipeline_mode<synchronous>, transform_indices = @transform_1, window_bounds = array<i64: 1, 324>}, {transform_indices = @transform_2, window_bounds = array<i64: 1, 16, 144>}, {transform_indices = @transform_3, window_bounds = array<i64: 1, 16, 1>}, {transform_indices = @transform_4, window_bounds = array<i64: 1, 16, 144>}, {transform_indices = @transform_5, window_bounds = array<i64: 1, 16, 1>}, {transform_indices = @transform_6, window_bounds = array<i64: 1, 16, 4>}, {transform_indices = @transform_7, window_bounds = array<i64: 1, 1, 4>}, {transform_indices = @transform_8, window_bounds = array<i64: 1, 16, 4>}, {transform_indices = @transform_9, window_bounds = array<i64: 1, 16, 1>}, {pipeline_mode = #tpu.pipeline_mode<synchronous>, transform_indices = @transform_10, window_bounds = array<i64: 16, 144>}, {pipeline_mode = #tpu.pipeline_mode<synchronous>, transform_indices = @transform_11, window_bounds = array<i64: 16, 1>}, {transform_indices = @transform_12, window_bounds = array<i64: 1, 16, 324>}]} {
    %c0 = arith.constant 0 : index
    %c0_0 = arith.constant 0 : index
    %0 = vector.load %arg3[%c0, %c0_0] : memref<1x324xf32, #tpu.memory_space<vmem>>, vector<1x324xf32>
    %c0_i32 = arith.constant 0 : i32
    %1 = arith.cmpi eq, %arg1, %c0_i32 : i32
    %2 = arith.extui %1 : i1 to i32
    %c0_i32_1 = arith.constant 0 : i32
    %3 = arith.cmpi ne, %2, %c0_i32_1 : i32
    scf.if %3 {
      %cst_101 = arith.constant 0.000000e+00 : f32
      %118 = vector.broadcast %cst_101 : f32 to vector<16x128xf32>
      %c0_102 = arith.constant 0 : index
      %c0_103 = arith.constant 0 : index
      %119 = vector.load %arg15[%c0_102, %c0_103] : memref<16x580xf32, #tpu.memory_space<vmem>>, vector<16x128xf32>
      tpu.vector_store %arg15[%c0_102, %c0_103], %118 {strides = array<i32>} : memref<16x580xf32, #tpu.memory_space<vmem>>, vector<16x128xf32>,
      %c0_104 = arith.constant 0 : index
      %c452 = arith.constant 452 : index
      %120 = vector.load %arg15[%c0_104, %c452] : memref<16x580xf32, #tpu.memory_space<vmem>>, vector<16x128xf32>
      tpu.vector_store %arg15[%c0_104, %c452], %118 {strides = array<i32>} : memref<16x580xf32, #tpu.memory_space<vmem>>, vector<16x128xf32>,
      %c0_105 = arith.constant 0 : index
      %c0_106 = arith.constant 0 : index
      %121 = vector.load %arg16[%c0_105, %c0_106] : memref<16x580xf32, #tpu.memory_space<vmem>>, vector<16x128xf32>
      tpu.vector_store %arg16[%c0_105, %c0_106], %118 {strides = array<i32>} : memref<16x580xf32, #tpu.memory_space<vmem>>, vector<16x128xf32>,
      %c0_107 = arith.constant 0 : index
      %c452_108 = arith.constant 452 : index
      %122 = vector.load %arg16[%c0_107, %c452_108] : memref<16x580xf32, #tpu.memory_space<vmem>>, vector<16x128xf32>
      tpu.vector_store %arg16[%c0_107, %c452_108], %118 {strides = array<i32>} : memref<16x580xf32, #tpu.memory_space<vmem>>, vector<16x128xf32>,
      %c0_109 = arith.constant 0 : index
      %c0_110 = arith.constant 0 : index
      %c0_111 = arith.constant 0 : index
      %123 = vector.load %arg2[%c0_109, %c0_110, %c0_111] : memref<1x16x324xf32, #tpu.memory_space<vmem>>, vector<1x16x324xf32>
      %124 = vector.shape_cast %123 : vector<1x16x324xf32> to vector<16x324xf32>
      %c0_112 = arith.constant 0 : index
      %c128_113 = arith.constant 128 : index
      %125 = vector.load %arg15[%c0_112, %c128_113] : memref<16x580xf32, #tpu.memory_space<vmem>>, vector<16x324xf32>
      tpu.vector_store %arg15[%c0_112, %c128_113], %124 {strides = array<i32>} : memref<16x580xf32, #tpu.memory_space<vmem>>, vector<16x324xf32>,
    } else {
    }
    %c0_2 = arith.constant 0 : index
    %c0_3 = arith.constant 0 : index
    %c0_4 = arith.constant 0 : index
    %4 = vector.load %arg4[%c0_2, %c0_3, %c0_4] : memref<1x16x144xbf16, #tpu.memory_space<vmem>>, vector<1x16x144xbf16>
    %5 = vector.shape_cast %4 : vector<1x16x144xbf16> to vector<16x144xbf16>
    %c0_5 = arith.constant 0 : index
    %c109 = arith.constant 109 : index
    %6 = vector.load %arg15[%c0_5, %c109] : memref<16x580xf32, #tpu.memory_space<vmem>>, vector<16x324xf32>
    %7 = arith.truncf %6 : vector<16x324xf32> to vector<16x324xbf16>
    %c0_6 = arith.constant 0 : index
    %c0_7 = arith.constant 0 : index
    %8 = vector.load %arg17[%c0_6, %c0_7] : memref<144x324xbf16, #tpu.memory_space<vmem>>, vector<16x324xbf16>
    tpu.vector_store %arg17[%c0_6, %c0_7], %7 {strides = array<i32>} : memref<144x324xbf16, #tpu.memory_space<vmem>>, vector<16x324xbf16>,
    %c0_8 = arith.constant 0 : index
    %c110 = arith.constant 110 : index
    %9 = vector.load %arg15[%c0_8, %c110] : memref<16x580xf32, #tpu.memory_space<vmem>>, vector<16x324xf32>
    %10 = arith.truncf %9 : vector<16x324xf32> to vector<16x324xbf16>
    %c16 = arith.constant 16 : index
    %c0_9 = arith.constant 0 : index
    %11 = vector.load %arg17[%c16, %c0_9] : memref<144x324xbf16, #tpu.memory_space<vmem>>, vector<16x324xbf16>
    tpu.vector_store %arg17[%c16, %c0_9], %10 {strides = array<i32>} : memref<144x324xbf16, #tpu.memory_space<vmem>>, vector<16x324xbf16>,
    %c0_10 = arith.constant 0 : index
    %c111 = arith.constant 111 : index
    %12 = vector.load %arg15[%c0_10, %c111] : memref<16x580xf32, #tpu.memory_space<vmem>>, vector<16x324xf32>
    %13 = arith.truncf %12 : vector<16x324xf32> to vector<16x324xbf16>
    %c32 = arith.constant 32 : index
    %c0_11 = arith.constant 0 : index
    %14 = vector.load %arg17[%c32, %c0_11] : memref<144x324xbf16, #tpu.memory_space<vmem>>, vector<16x324xbf16>
    tpu.vector_store %arg17[%c32, %c0_11], %13 {strides = array<i32>} : memref<144x324xbf16, #tpu.memory_space<vmem>>, vector<16x324xbf16>,
    %c0_12 = arith.constant 0 : index
    %c127 = arith.constant 127 : index
    %15 = vector.load %arg15[%c0_12, %c127] : memref<16x580xf32, #tpu.memory_space<vmem>>, vector<16x324xf32>
    %16 = arith.truncf %15 : vector<16x324xf32> to vector<16x324xbf16>
    %c48 = arith.constant 48 : index
    %c0_13 = arith.constant 0 : index
    %17 = vector.load %arg17[%c48, %c0_13] : memref<144x324xbf16, #tpu.memory_space<vmem>>, vector<16x324xbf16>
    tpu.vector_store %arg17[%c48, %c0_13], %16 {strides = array<i32>} : memref<144x324xbf16, #tpu.memory_space<vmem>>, vector<16x324xbf16>,
    %c0_14 = arith.constant 0 : index
    %c128 = arith.constant 128 : index
    %18 = vector.load %arg15[%c0_14, %c128] : memref<16x580xf32, #tpu.memory_space<vmem>>, vector<16x324xf32>
    %19 = arith.truncf %18 : vector<16x324xf32> to vector<16x324xbf16>
    %c64 = arith.constant 64 : index
    %c0_15 = arith.constant 0 : index
    %20 = vector.load %arg17[%c64, %c0_15] : memref<144x324xbf16, #tpu.memory_space<vmem>>, vector<16x324xbf16>
    tpu.vector_store %arg17[%c64, %c0_15], %19 {strides = array<i32>} : memref<144x324xbf16, #tpu.memory_space<vmem>>, vector<16x324xbf16>,
    %c0_16 = arith.constant 0 : index
    %c129 = arith.constant 129 : index
    %21 = vector.load %arg15[%c0_16, %c129] : memref<16x580xf32, #tpu.memory_space<vmem>>, vector<16x324xf32>
    %22 = arith.truncf %21 : vector<16x324xf32> to vector<16x324xbf16>
    %c80 = arith.constant 80 : index
    %c0_17 = arith.constant 0 : index
    %23 = vector.load %arg17[%c80, %c0_17] : memref<144x324xbf16, #tpu.memory_space<vmem>>, vector<16x324xbf16>
    tpu.vector_store %arg17[%c80, %c0_17], %22 {strides = array<i32>} : memref<144x324xbf16, #tpu.memory_space<vmem>>, vector<16x324xbf16>,
    %c0_18 = arith.constant 0 : index
    %c145 = arith.constant 145 : index
    %24 = vector.load %arg15[%c0_18, %c145] : memref<16x580xf32, #tpu.memory_space<vmem>>, vector<16x324xf32>
    %25 = arith.truncf %24 : vector<16x324xf32> to vector<16x324xbf16>
    %c96 = arith.constant 96 : index
    %c0_19 = arith.constant 0 : index
    %26 = vector.load %arg17[%c96, %c0_19] : memref<144x324xbf16, #tpu.memory_space<vmem>>, vector<16x324xbf16>
    tpu.vector_store %arg17[%c96, %c0_19], %25 {strides = array<i32>} : memref<144x324xbf16, #tpu.memory_space<vmem>>, vector<16x324xbf16>,
    %c0_20 = arith.constant 0 : index
    %c146 = arith.constant 146 : index
    %27 = vector.load %arg15[%c0_20, %c146] : memref<16x580xf32, #tpu.memory_space<vmem>>, vector<16x324xf32>
    %28 = arith.truncf %27 : vector<16x324xf32> to vector<16x324xbf16>
    %c112 = arith.constant 112 : index
    %c0_21 = arith.constant 0 : index
    %29 = vector.load %arg17[%c112, %c0_21] : memref<144x324xbf16, #tpu.memory_space<vmem>>, vector<16x324xbf16>
    tpu.vector_store %arg17[%c112, %c0_21], %28 {strides = array<i32>} : memref<144x324xbf16, #tpu.memory_space<vmem>>, vector<16x324xbf16>,
    %c0_22 = arith.constant 0 : index
    %c147 = arith.constant 147 : index
    %30 = vector.load %arg15[%c0_22, %c147] : memref<16x580xf32, #tpu.memory_space<vmem>>, vector<16x324xf32>
    %31 = arith.truncf %30 : vector<16x324xf32> to vector<16x324xbf16>
    %c128_23 = arith.constant 128 : index
    %c0_24 = arith.constant 0 : index
    %32 = vector.load %arg17[%c128_23, %c0_24] : memref<144x324xbf16, #tpu.memory_space<vmem>>, vector<16x324xbf16>
    tpu.vector_store %arg17[%c128_23, %c0_24], %31 {strides = array<i32>} : memref<144x324xbf16, #tpu.memory_space<vmem>>, vector<16x324xbf16>,
    %c0_25 = arith.constant 0 : index
    %c0_26 = arith.constant 0 : index
    %33 = vector.load %arg17[%c0_25, %c0_26] : memref<144x324xbf16, #tpu.memory_space<vmem>>, vector<144x324xbf16>
    %cst = arith.constant dense<0.000000e+00> : vector<16x324xf32>
    %34 = tpu.matmul %5, %33, %cst {dimension_numbers = #tpu.dot_dimension_numbers<[1], [0], [0], [1], [0, 0, 1, 1], [], []>} : vector<16x144xbf16>, vector<144x324xbf16>, vector<16x324xf32> -> vector<16x324xf32>
    %c0_27 = arith.constant 0 : index
    %c0_28 = arith.constant 0 : index
    %c0_29 = arith.constant 0 : index
    %35 = vector.load %arg5[%c0_27, %c0_28, %c0_29] : memref<1x16x1xf32, #tpu.memory_space<vmem>>, vector<1x16x1xf32>
    %36 = vector.shape_cast %35 : vector<1x16x1xf32> to vector<16x1xf32>
    %37 = vector.broadcast %36 : vector<16x1xf32> to vector<16x324xf32>
    %38 = arith.addf %34, %37 : vector<16x324xf32>
    %cst_30 = arith.constant 0.000000e+00 : f32
    %39 = vector.broadcast %cst_30 : f32 to vector<16x324xf32>
    %40 = arith.maximumf %38, %39 : vector<16x324xf32>
    %41 = vector.broadcast %0 : vector<1x324xf32> to vector<16x324xf32>
    %42 = arith.mulf %40, %41 : vector<16x324xf32>
    %c0_31 = arith.constant 0 : index
    %c128_32 = arith.constant 128 : index
    %43 = vector.load %arg16[%c0_31, %c128_32] : memref<16x580xf32, #tpu.memory_space<vmem>>, vector<16x324xf32>
    tpu.vector_store %arg16[%c0_31, %c128_32], %42 {strides = array<i32>} : memref<16x580xf32, #tpu.memory_space<vmem>>, vector<16x324xf32>,
    %c0_33 = arith.constant 0 : index
    %c0_34 = arith.constant 0 : index
    %c0_35 = arith.constant 0 : index
    %44 = vector.load %arg6[%c0_33, %c0_34, %c0_35] : memref<1x16x144xbf16, #tpu.memory_space<vmem>>, vector<1x16x144xbf16>
    %45 = vector.shape_cast %44 : vector<1x16x144xbf16> to vector<16x144xbf16>
    %c0_36 = arith.constant 0 : index
    %c109_37 = arith.constant 109 : index
    %46 = vector.load %arg16[%c0_36, %c109_37] : memref<16x580xf32, #tpu.memory_space<vmem>>, vector<16x324xf32>
    %47 = arith.truncf %46 : vector<16x324xf32> to vector<16x324xbf16>
    %c0_38 = arith.constant 0 : index
    %c0_39 = arith.constant 0 : index
    %48 = vector.load %arg17[%c0_38, %c0_39] : memref<144x324xbf16, #tpu.memory_space<vmem>>, vector<16x324xbf16>
    tpu.vector_store %arg17[%c0_38, %c0_39], %47 {strides = array<i32>} : memref<144x324xbf16, #tpu.memory_space<vmem>>, vector<16x324xbf16>,
    %c0_40 = arith.constant 0 : index
    %c110_41 = arith.constant 110 : index
    %49 = vector.load %arg16[%c0_40, %c110_41] : memref<16x580xf32, #tpu.memory_space<vmem>>, vector<16x324xf32>
    %50 = arith.truncf %49 : vector<16x324xf32> to vector<16x324xbf16>
    %c16_42 = arith.constant 16 : index
    %c0_43 = arith.constant 0 : index
    %51 = vector.load %arg17[%c16_42, %c0_43] : memref<144x324xbf16, #tpu.memory_space<vmem>>, vector<16x324xbf16>
    tpu.vector_store %arg17[%c16_42, %c0_43], %50 {strides = array<i32>} : memref<144x324xbf16, #tpu.memory_space<vmem>>, vector<16x324xbf16>,
    %c0_44 = arith.constant 0 : index
    %c111_45 = arith.constant 111 : index
    %52 = vector.load %arg16[%c0_44, %c111_45] : memref<16x580xf32, #tpu.memory_space<vmem>>, vector<16x324xf32>
    %53 = arith.truncf %52 : vector<16x324xf32> to vector<16x324xbf16>
    %c32_46 = arith.constant 32 : index
    %c0_47 = arith.constant 0 : index
    %54 = vector.load %arg17[%c32_46, %c0_47] : memref<144x324xbf16, #tpu.memory_space<vmem>>, vector<16x324xbf16>
    tpu.vector_store %arg17[%c32_46, %c0_47], %53 {strides = array<i32>} : memref<144x324xbf16, #tpu.memory_space<vmem>>, vector<16x324xbf16>,
    %c0_48 = arith.constant 0 : index
    %c127_49 = arith.constant 127 : index
    %55 = vector.load %arg16[%c0_48, %c127_49] : memref<16x580xf32, #tpu.memory_space<vmem>>, vector<16x324xf32>
    %56 = arith.truncf %55 : vector<16x324xf32> to vector<16x324xbf16>
    %c48_50 = arith.constant 48 : index
    %c0_51 = arith.constant 0 : index
    %57 = vector.load %arg17[%c48_50, %c0_51] : memref<144x324xbf16, #tpu.memory_space<vmem>>, vector<16x324xbf16>
    tpu.vector_store %arg17[%c48_50, %c0_51], %56 {strides = array<i32>} : memref<144x324xbf16, #tpu.memory_space<vmem>>, vector<16x324xbf16>,
    %c0_52 = arith.constant 0 : index
    %c128_53 = arith.constant 128 : index
    %58 = vector.load %arg16[%c0_52, %c128_53] : memref<16x580xf32, #tpu.memory_space<vmem>>, vector<16x324xf32>
    %59 = arith.truncf %58 : vector<16x324xf32> to vector<16x324xbf16>
    %c64_54 = arith.constant 64 : index
    %c0_55 = arith.constant 0 : index
    %60 = vector.load %arg17[%c64_54, %c0_55] : memref<144x324xbf16, #tpu.memory_space<vmem>>, vector<16x324xbf16>
    tpu.vector_store %arg17[%c64_54, %c0_55], %59 {strides = array<i32>} : memref<144x324xbf16, #tpu.memory_space<vmem>>, vector<16x324xbf16>,
    %c0_56 = arith.constant 0 : index
    %c129_57 = arith.constant 129 : index
    %61 = vector.load %arg16[%c0_56, %c129_57] : memref<16x580xf32, #tpu.memory_space<vmem>>, vector<16x324xf32>
    %62 = arith.truncf %61 : vector<16x324xf32> to vector<16x324xbf16>
    %c80_58 = arith.constant 80 : index
    %c0_59 = arith.constant 0 : index
    %63 = vector.load %arg17[%c80_58, %c0_59] : memref<144x324xbf16, #tpu.memory_space<vmem>>, vector<16x324xbf16>
    tpu.vector_store %arg17[%c80_58, %c0_59], %62 {strides = array<i32>} : memref<144x324xbf16, #tpu.memory_space<vmem>>, vector<16x324xbf16>,
    %c0_60 = arith.constant 0 : index
    %c145_61 = arith.constant 145 : index
    %64 = vector.load %arg16[%c0_60, %c145_61] : memref<16x580xf32, #tpu.memory_space<vmem>>, vector<16x324xf32>
    %65 = arith.truncf %64 : vector<16x324xf32> to vector<16x324xbf16>
    %c96_62 = arith.constant 96 : index
    %c0_63 = arith.constant 0 : index
    %66 = vector.load %arg17[%c96_62, %c0_63] : memref<144x324xbf16, #tpu.memory_space<vmem>>, vector<16x324xbf16>
    tpu.vector_store %arg17[%c96_62, %c0_63], %65 {strides = array<i32>} : memref<144x324xbf16, #tpu.memory_space<vmem>>, vector<16x324xbf16>,
    %c0_64 = arith.constant 0 : index
    %c146_65 = arith.constant 146 : index
    %67 = vector.load %arg16[%c0_64, %c146_65] : memref<16x580xf32, #tpu.memory_space<vmem>>, vector<16x324xf32>
    %68 = arith.truncf %67 : vector<16x324xf32> to vector<16x324xbf16>
    %c112_66 = arith.constant 112 : index
    %c0_67 = arith.constant 0 : index
    %69 = vector.load %arg17[%c112_66, %c0_67] : memref<144x324xbf16, #tpu.memory_space<vmem>>, vector<16x324xbf16>
    tpu.vector_store %arg17[%c112_66, %c0_67], %68 {strides = array<i32>} : memref<144x324xbf16, #tpu.memory_space<vmem>>, vector<16x324xbf16>,
    %c0_68 = arith.constant 0 : index
    %c147_69 = arith.constant 147 : index
    %70 = vector.load %arg16[%c0_68, %c147_69] : memref<16x580xf32, #tpu.memory_space<vmem>>, vector<16x324xf32>
    %71 = arith.truncf %70 : vector<16x324xf32> to vector<16x324xbf16>
    %c128_70 = arith.constant 128 : index
    %c0_71 = arith.constant 0 : index
    %72 = vector.load %arg17[%c128_70, %c0_71] : memref<144x324xbf16, #tpu.memory_space<vmem>>, vector<16x324xbf16>
    tpu.vector_store %arg17[%c128_70, %c0_71], %71 {strides = array<i32>} : memref<144x324xbf16, #tpu.memory_space<vmem>>, vector<16x324xbf16>,
    %c0_72 = arith.constant 0 : index
    %c0_73 = arith.constant 0 : index
    %73 = vector.load %arg17[%c0_72, %c0_73] : memref<144x324xbf16, #tpu.memory_space<vmem>>, vector<144x324xbf16>
    %cst_74 = arith.constant dense<0.000000e+00> : vector<16x324xf32>
    %74 = tpu.matmul %45, %73, %cst_74 {dimension_numbers = #tpu.dot_dimension_numbers<[1], [0], [0], [1], [0, 0, 1, 1], [], []>} : vector<16x144xbf16>, vector<144x324xbf16>, vector<16x324xf32> -> vector<16x324xf32>
    %c0_75 = arith.constant 0 : index
    %c0_76 = arith.constant 0 : index
    %c0_77 = arith.constant 0 : index
    %75 = vector.load %arg7[%c0_75, %c0_76, %c0_77] : memref<1x16x1xf32, #tpu.memory_space<vmem>>, vector<1x16x1xf32>
    %76 = vector.shape_cast %75 : vector<1x16x1xf32> to vector<16x1xf32>
    %77 = vector.broadcast %76 : vector<16x1xf32> to vector<16x324xf32>
    %78 = arith.addf %74, %77 : vector<16x324xf32>
    %79 = vector.broadcast %0 : vector<1x324xf32> to vector<16x324xf32>
    %80 = arith.mulf %78, %79 : vector<16x324xf32>
    %cst_78 = arith.constant dense<0.000000e+00> : vector<16xf32>
    %81 = vector.multi_reduction <add>, %80, %cst_78 [1] : vector<16x324xf32> to vector<16xf32>
    %82 = vector.shape_cast %81 : vector<16xf32> to vector<16x1xf32>
    %cst_79 = arith.constant 3.906250e-03 : f32
    %83 = vector.broadcast %cst_79 : f32 to vector<16x1xf32>
    %84 = arith.mulf %82, %83 : vector<16x1xf32>
    %c0_80 = arith.constant 0 : index
    %c0_81 = arith.constant 0 : index
    %c0_82 = arith.constant 0 : index
    %85 = vector.load %arg8[%c0_80, %c0_81, %c0_82] : memref<1x16x4xf32, #tpu.memory_space<vmem>>, vector<1x16x4xf32>
    %86 = vector.shape_cast %85 : vector<1x16x4xf32> to vector<16x4xf32>
    %87 = vector.broadcast %84 : vector<16x1xf32> to vector<16x4xf32>
    %88 = arith.mulf %86, %87 : vector<16x4xf32>
    %cst_83 = arith.constant dense<0.000000e+00> : vector<4xf32>
    %89 = vector.multi_reduction <add>, %88, %cst_83 [0] : vector<16x4xf32> to vector<4xf32>
    %90 = vector.shape_cast %89 : vector<4xf32> to vector<1x4xf32>
    %c0_84 = arith.constant 0 : index
    %c0_85 = arith.constant 0 : index
    %c0_86 = arith.constant 0 : index
    %91 = vector.load %arg9[%c0_84, %c0_85, %c0_86] : memref<1x1x4xf32, #tpu.memory_space<vmem>>, vector<1x1x4xf32>
    %92 = vector.shape_cast %91 : vector<1x1x4xf32> to vector<1x4xf32>
    %93 = arith.addf %90, %92 : vector<1x4xf32>
    %cst_87 = arith.constant 0.000000e+00 : f32
    %94 = vector.broadcast %cst_87 : f32 to vector<1x4xf32>
    %95 = arith.maximumf %93, %94 : vector<1x4xf32>
    %c0_88 = arith.constant 0 : index
    %c0_89 = arith.constant 0 : index
    %c0_90 = arith.constant 0 : index
    %96 = vector.load %arg10[%c0_88, %c0_89, %c0_90] : memref<1x16x4xf32, #tpu.memory_space<vmem>>, vector<1x16x4xf32>
    %97 = vector.shape_cast %96 : vector<1x16x4xf32> to vector<16x4xf32>
    %98 = vector.broadcast %95 : vector<1x4xf32> to vector<16x4xf32>
    %99 = arith.mulf %97, %98 : vector<16x4xf32>
    %cst_91 = arith.constant dense<0.000000e+00> : vector<16xf32>
    %100 = vector.multi_reduction <add>, %99, %cst_91 [1] : vector<16x4xf32> to vector<16xf32>
    %101 = vector.shape_cast %100 : vector<16xf32> to vector<16x1xf32>
    %c0_92 = arith.constant 0 : index
    %c0_93 = arith.constant 0 : index
    %c0_94 = arith.constant 0 : index
    %102 = vector.load %arg11[%c0_92, %c0_93, %c0_94] : memref<1x16x1xf32, #tpu.memory_space<vmem>>, vector<1x16x1xf32>
    %103 = vector.shape_cast %102 : vector<1x16x1xf32> to vector<16x1xf32>
    %104 = arith.addf %101, %103 : vector<16x1xf32>
    %105 = arith.negf %104 : vector<16x1xf32>
    %106 = math.exp %105 : vector<16x1xf32>
    %cst_95 = arith.constant 1.000000e+00 : f32
    %107 = vector.broadcast %cst_95 : f32 to vector<16x1xf32>
    %108 = arith.addf %107, %106 : vector<16x1xf32>
    %109 = arith.divf %107, %108 : vector<16x1xf32>
    %110 = vector.broadcast %109 : vector<16x1xf32> to vector<16x324xf32>
    %111 = arith.mulf %80, %110 : vector<16x324xf32>
    %c0_96 = arith.constant 0 : index
    %c128_97 = arith.constant 128 : index
    %112 = vector.load %arg15[%c0_96, %c128_97] : memref<16x580xf32, #tpu.memory_space<vmem>>, vector<16x324xf32>
    %113 = arith.addf %111, %112 : vector<16x324xf32>
    %c0_98 = arith.constant 0 : index
    %c128_99 = arith.constant 128 : index
    %114 = vector.load %arg15[%c0_98, %c128_99] : memref<16x580xf32, #tpu.memory_space<vmem>>, vector<16x324xf32>
    tpu.vector_store %arg15[%c0_98, %c128_99], %113 {strides = array<i32>} : memref<16x580xf32, #tpu.memory_space<vmem>>, vector<16x324xf32>,
    %c1_i32 = arith.constant 1 : i32
    %115 = arith.cmpi eq, %arg1, %c1_i32 : i32
    %116 = arith.extui %115 : i1 to i32
    %c0_i32_100 = arith.constant 0 : i32
    %117 = arith.cmpi ne, %116, %c0_i32_100 : i32
    scf.if %117 {
      %c0_101 = arith.constant 0 : index
      %c0_102 = arith.constant 0 : index
      %118 = vector.load %arg12[%c0_101, %c0_102] : memref<16x144xbf16, #tpu.memory_space<vmem>>, vector<16x144xbf16>
      %c0_103 = arith.constant 0 : index
      %c109_104 = arith.constant 109 : index
      %119 = vector.load %arg15[%c0_103, %c109_104] : memref<16x580xf32, #tpu.memory_space<vmem>>, vector<16x324xf32>
      %120 = arith.truncf %119 : vector<16x324xf32> to vector<16x324xbf16>
      %c0_105 = arith.constant 0 : index
      %c0_106 = arith.constant 0 : index
      %121 = vector.load %arg17[%c0_105, %c0_106] : memref<144x324xbf16, #tpu.memory_space<vmem>>, vector<16x324xbf16>
      tpu.vector_store %arg17[%c0_105, %c0_106], %120 {strides = array<i32>} : memref<144x324xbf16, #tpu.memory_space<vmem>>, vector<16x324xbf16>,
      %c0_107 = arith.constant 0 : index
      %c110_108 = arith.constant 110 : index
      %122 = vector.load %arg15[%c0_107, %c110_108] : memref<16x580xf32, #tpu.memory_space<vmem>>, vector<16x324xf32>
      %123 = arith.truncf %122 : vector<16x324xf32> to vector<16x324xbf16>
      %c16_109 = arith.constant 16 : index
      %c0_110 = arith.constant 0 : index
      %124 = vector.load %arg17[%c16_109, %c0_110] : memref<144x324xbf16, #tpu.memory_space<vmem>>, vector<16x324xbf16>
      tpu.vector_store %arg17[%c16_109, %c0_110], %123 {strides = array<i32>} : memref<144x324xbf16, #tpu.memory_space<vmem>>, vector<16x324xbf16>,
      %c0_111 = arith.constant 0 : index
      %c111_112 = arith.constant 111 : index
      %125 = vector.load %arg15[%c0_111, %c111_112] : memref<16x580xf32, #tpu.memory_space<vmem>>, vector<16x324xf32>
      %126 = arith.truncf %125 : vector<16x324xf32> to vector<16x324xbf16>
      %c32_113 = arith.constant 32 : index
      %c0_114 = arith.constant 0 : index
      %127 = vector.load %arg17[%c32_113, %c0_114] : memref<144x324xbf16, #tpu.memory_space<vmem>>, vector<16x324xbf16>
      tpu.vector_store %arg17[%c32_113, %c0_114], %126 {strides = array<i32>} : memref<144x324xbf16, #tpu.memory_space<vmem>>, vector<16x324xbf16>,
      %c0_115 = arith.constant 0 : index
      %c127_116 = arith.constant 127 : index
      %128 = vector.load %arg15[%c0_115, %c127_116] : memref<16x580xf32, #tpu.memory_space<vmem>>, vector<16x324xf32>
      %129 = arith.truncf %128 : vector<16x324xf32> to vector<16x324xbf16>
      %c48_117 = arith.constant 48 : index
      %c0_118 = arith.constant 0 : index
      %130 = vector.load %arg17[%c48_117, %c0_118] : memref<144x324xbf16, #tpu.memory_space<vmem>>, vector<16x324xbf16>
      tpu.vector_store %arg17[%c48_117, %c0_118], %129 {strides = array<i32>} : memref<144x324xbf16, #tpu.memory_space<vmem>>, vector<16x324xbf16>,
      %c0_119 = arith.constant 0 : index
      %c128_120 = arith.constant 128 : index
      %131 = vector.load %arg15[%c0_119, %c128_120] : memref<16x580xf32, #tpu.memory_space<vmem>>, vector<16x324xf32>
      %132 = arith.truncf %131 : vector<16x324xf32> to vector<16x324xbf16>
      %c64_121 = arith.constant 64 : index
      %c0_122 = arith.constant 0 : index
      %133 = vector.load %arg17[%c64_121, %c0_122] : memref<144x324xbf16, #tpu.memory_space<vmem>>, vector<16x324xbf16>
      tpu.vector_store %arg17[%c64_121, %c0_122], %132 {strides = array<i32>} : memref<144x324xbf16, #tpu.memory_space<vmem>>, vector<16x324xbf16>,
      %c0_123 = arith.constant 0 : index
      %c129_124 = arith.constant 129 : index
      %134 = vector.load %arg15[%c0_123, %c129_124] : memref<16x580xf32, #tpu.memory_space<vmem>>, vector<16x324xf32>
      %135 = arith.truncf %134 : vector<16x324xf32> to vector<16x324xbf16>
      %c80_125 = arith.constant 80 : index
      %c0_126 = arith.constant 0 : index
      %136 = vector.load %arg17[%c80_125, %c0_126] : memref<144x324xbf16, #tpu.memory_space<vmem>>, vector<16x324xbf16>
      tpu.vector_store %arg17[%c80_125, %c0_126], %135 {strides = array<i32>} : memref<144x324xbf16, #tpu.memory_space<vmem>>, vector<16x324xbf16>,
      %c0_127 = arith.constant 0 : index
      %c145_128 = arith.constant 145 : index
      %137 = vector.load %arg15[%c0_127, %c145_128] : memref<16x580xf32, #tpu.memory_space<vmem>>, vector<16x324xf32>
      %138 = arith.truncf %137 : vector<16x324xf32> to vector<16x324xbf16>
      %c96_129 = arith.constant 96 : index
      %c0_130 = arith.constant 0 : index
      %139 = vector.load %arg17[%c96_129, %c0_130] : memref<144x324xbf16, #tpu.memory_space<vmem>>, vector<16x324xbf16>
      tpu.vector_store %arg17[%c96_129, %c0_130], %138 {strides = array<i32>} : memref<144x324xbf16, #tpu.memory_space<vmem>>, vector<16x324xbf16>,
      %c0_131 = arith.constant 0 : index
      %c146_132 = arith.constant 146 : index
      %140 = vector.load %arg15[%c0_131, %c146_132] : memref<16x580xf32, #tpu.memory_space<vmem>>, vector<16x324xf32>
      %141 = arith.truncf %140 : vector<16x324xf32> to vector<16x324xbf16>
      %c112_133 = arith.constant 112 : index
      %c0_134 = arith.constant 0 : index
      %142 = vector.load %arg17[%c112_133, %c0_134] : memref<144x324xbf16, #tpu.memory_space<vmem>>, vector<16x324xbf16>
      tpu.vector_store %arg17[%c112_133, %c0_134], %141 {strides = array<i32>} : memref<144x324xbf16, #tpu.memory_space<vmem>>, vector<16x324xbf16>,
      %c0_135 = arith.constant 0 : index
      %c147_136 = arith.constant 147 : index
      %143 = vector.load %arg15[%c0_135, %c147_136] : memref<16x580xf32, #tpu.memory_space<vmem>>, vector<16x324xf32>
      %144 = arith.truncf %143 : vector<16x324xf32> to vector<16x324xbf16>
      %c128_137 = arith.constant 128 : index
      %c0_138 = arith.constant 0 : index
      %145 = vector.load %arg17[%c128_137, %c0_138] : memref<144x324xbf16, #tpu.memory_space<vmem>>, vector<16x324xbf16>
      tpu.vector_store %arg17[%c128_137, %c0_138], %144 {strides = array<i32>} : memref<144x324xbf16, #tpu.memory_space<vmem>>, vector<16x324xbf16>,
      %c0_139 = arith.constant 0 : index
      %c0_140 = arith.constant 0 : index
      %146 = vector.load %arg17[%c0_139, %c0_140] : memref<144x324xbf16, #tpu.memory_space<vmem>>, vector<144x324xbf16>
      %cst_141 = arith.constant dense<0.000000e+00> : vector<16x324xf32>
      %147 = tpu.matmul %118, %146, %cst_141 {dimension_numbers = #tpu.dot_dimension_numbers<[1], [0], [0], [1], [0, 0, 1, 1], [], []>} : vector<16x144xbf16>, vector<144x324xbf16>, vector<16x324xf32> -> vector<16x324xf32>
      %c0_142 = arith.constant 0 : index
      %c0_143 = arith.constant 0 : index
      %148 = vector.load %arg13[%c0_142, %c0_143] : memref<16x1xf32, #tpu.memory_space<vmem>>, vector<16x1xf32>
      %149 = vector.broadcast %148 : vector<16x1xf32> to vector<16x324xf32>
      %150 = arith.addf %147, %149 : vector<16x324xf32>
      %151 = vector.broadcast %0 : vector<1x324xf32> to vector<16x324xf32>
      %152 = arith.mulf %150, %151 : vector<16x324xf32>
      %c0_144 = arith.constant 0 : index
      %c0_145 = arith.constant 0 : index
      %c0_146 = arith.constant 0 : index
      %153 = vector.load %arg2[%c0_144, %c0_145, %c0_146] : memref<1x16x324xf32, #tpu.memory_space<vmem>>, vector<1x16x324xf32>
      %154 = vector.shape_cast %153 : vector<1x16x324xf32> to vector<16x324xf32>
      %155 = arith.addf %152, %154 : vector<16x324xf32>
      %c0_147 = arith.constant 0 : index
      %c0_148 = arith.constant 0 : index
      %c0_149 = arith.constant 0 : index
      %156 = vector.load %arg14[%c0_147, %c0_148, %c0_149] : memref<1x16x324xf32, #tpu.memory_space<vmem>>, vector<1x16x324xf32>
      %157 = vector.shape_cast %156 : vector<1x16x324xf32> to vector<16x324xf32>
      %158 = vector.shape_cast %155 : vector<16x324xf32> to vector<1x16x324xf32>
      tpu.vector_store %arg14[%c0_147, %c0_148, %c0_149], %158 {strides = array<i32>} : memref<1x16x324xf32, #tpu.memory_space<vmem>>, vector<1x16x324xf32>,
    } else {
    }
    return
  }
  func.func @transform_0(%arg0: i32, %arg1: i32) -> (i32, i32, i32) {
    %c0_i32 = arith.constant 0 : i32
    %c0_i32_0 = arith.constant 0 : i32
    %c0_i32_1 = arith.constant 0 : i32
    return %arg0, %c0_i32, %c0_i32_0 : i32, i32, i32
  }
  func.func @transform_1(%arg0: i32, %arg1: i32) -> (i32, i32) {
    %c0_i32 = arith.constant 0 : i32
    %c0_i32_0 = arith.constant 0 : i32
    %c0_i32_1 = arith.constant 0 : i32
    return %c0_i32, %c0_i32_0 : i32, i32
  }
  func.func @transform_2(%arg0: i32, %arg1: i32) -> (i32, i32, i32) {
    %c0_i32 = arith.constant 0 : i32
    %c0_i32_0 = arith.constant 0 : i32
    %c0_i32_1 = arith.constant 0 : i32
    return %arg1, %c0_i32, %c0_i32_0 : i32, i32, i32
  }
  func.func @transform_3(%arg0: i32, %arg1: i32) -> (i32, i32, i32) {
    %c0_i32 = arith.constant 0 : i32
    %c0_i32_0 = arith.constant 0 : i32
    %c0_i32_1 = arith.constant 0 : i32
    return %arg1, %c0_i32, %c0_i32_0 : i32, i32, i32
  }
  func.func @transform_4(%arg0: i32, %arg1: i32) -> (i32, i32, i32) {
    %c0_i32 = arith.constant 0 : i32
    %c0_i32_0 = arith.constant 0 : i32
    %c0_i32_1 = arith.constant 0 : i32
    return %arg1, %c0_i32, %c0_i32_0 : i32, i32, i32
  }
  func.func @transform_5(%arg0: i32, %arg1: i32) -> (i32, i32, i32) {
    %c0_i32 = arith.constant 0 : i32
    %c0_i32_0 = arith.constant 0 : i32
    %c0_i32_1 = arith.constant 0 : i32
    return %arg1, %c0_i32, %c0_i32_0 : i32, i32, i32
  }
  func.func @transform_6(%arg0: i32, %arg1: i32) -> (i32, i32, i32) {
    %c0_i32 = arith.constant 0 : i32
    %c0_i32_0 = arith.constant 0 : i32
    %c0_i32_1 = arith.constant 0 : i32
    return %arg1, %c0_i32, %c0_i32_0 : i32, i32, i32
  }
  func.func @transform_7(%arg0: i32, %arg1: i32) -> (i32, i32, i32) {
    %c0_i32 = arith.constant 0 : i32
    %c0_i32_0 = arith.constant 0 : i32
    %c0_i32_1 = arith.constant 0 : i32
    return %arg1, %c0_i32, %c0_i32_0 : i32, i32, i32
  }
  func.func @transform_8(%arg0: i32, %arg1: i32) -> (i32, i32, i32) {
    %c0_i32 = arith.constant 0 : i32
    %c0_i32_0 = arith.constant 0 : i32
    %c0_i32_1 = arith.constant 0 : i32
    return %arg1, %c0_i32, %c0_i32_0 : i32, i32, i32
  }
  func.func @transform_9(%arg0: i32, %arg1: i32) -> (i32, i32, i32) {
    %c0_i32 = arith.constant 0 : i32
    %c0_i32_0 = arith.constant 0 : i32
    %c0_i32_1 = arith.constant 0 : i32
    return %arg1, %c0_i32, %c0_i32_0 : i32, i32, i32
  }
  func.func @transform_10(%arg0: i32, %arg1: i32) -> (i32, i32) {
    %c0_i32 = arith.constant 0 : i32
    %c0_i32_0 = arith.constant 0 : i32
    %c0_i32_1 = arith.constant 0 : i32
    return %c0_i32, %c0_i32_0 : i32, i32
  }
  func.func @transform_11(%arg0: i32, %arg1: i32) -> (i32, i32) {
    %c0_i32 = arith.constant 0 : i32
    %c0_i32_0 = arith.constant 0 : i32
    %c0_i32_1 = arith.constant 0 : i32
    return %c0_i32, %c0_i32_0 : i32, i32
  }
  func.func @transform_12(%arg0: i32, %arg1: i32) -> (i32, i32, i32) {
    %c0_i32 = arith.constant 0 : i32
    %c0_i32_0 = arith.constant 0 : i32
    %c0_i32_1 = arith.constant 0 : i32
    return %arg0, %c0_i32, %c0_i32_0 : i32, i32, i32
  }
}

</mosaic_0001>

<llo_original>
// kernel: tpu_custom_call.1
$region0: #{tpu_custom_call.1}
  #allocation0 [shape = 'u32[]', space=smem, size = 0x4, offset = 0x4, fixed_abs, tag = 'smem constant byte address 0x4 - core index']
  #allocation1 [shape = 'u32[72,128]{1,0:T(1,128)}', space=vmem, size = 0x9000, scoped, tag = 'internal scratch']
  #allocation2 [shape = 'f32[16,580]{1,0:T(8,128)}', space=vmem, size = 0xa000, scoped, tag = 'scratch operand']
  #allocation3 [shape = 'f32[16,580]{1,0:T(8,128)}', space=vmem, size = 0xa000, scoped, tag = 'scratch operand']
  #allocation4 [shape = 'bf16[144,324]{1,0:T(8,128)(2,1)}', space=vmem, size = 0x1b000, scoped, tag = 'scratch operand']
  %s0 = inlined_call_operand.vmem [shape: f32[2,16,324], index: 0, kind: input, shape index: {}]
  %s1 = inlined_call_operand.vmem [shape: f32[1,324], index: 1, kind: input, shape index: {}]
  %s2 = inlined_call_operand.vmem [shape: bf16[2,16,144], index: 2, kind: input, shape index: {}]
  %s3 = inlined_call_operand.vmem [shape: f32[2,16,1], index: 3, kind: input, shape index: {}]
  %s4 = inlined_call_operand.vmem [shape: bf16[2,16,144], index: 4, kind: input, shape index: {}]
  %s5 = inlined_call_operand.vmem [shape: f32[2,16,1], index: 5, kind: input, shape index: {}]
  %s6 = inlined_call_operand.vmem [shape: f32[2,16,4], index: 6, kind: input, shape index: {}]
  %s7 = inlined_call_operand.vmem [shape: f32[2,1,4], index: 7, kind: input, shape index: {}]
  %s8 = inlined_call_operand.vmem [shape: f32[2,16,4], index: 8, kind: input, shape index: {}]
  %s9 = inlined_call_operand.vmem [shape: f32[2,16,1], index: 9, kind: input, shape index: {}]
  %s10 = inlined_call_operand.vmem [shape: bf16[16,144], index: 10, kind: input, shape index: {}]
  %s11 = inlined_call_operand.vmem [shape: f32[16,1], index: 11, kind: input, shape index: {}]
  %s12 = inlined_call_operand.hbm [shape: f32[2,16,324], index: 12, kind: output, shape index: {}]
  %s13 = sld [smem:[#allocation0]]
  $region89: #{tpu_custom_call.1} parent=0
    _
  %s15 = ssub.s32 1, %s13
  %s16 = scalar_select 0, %s15, %s13
  $region1: #{tpu_custom_call.1} parent=0
    #allocation5 [shape = 'u8[49152]{0}', space=vmem, size = 0xc000, scoped, tag = 'output window, operand 0']
    #allocation6 [shape = 's32[2]{0}', space=sflag, size = 0x8, scoped, tag = 'scoped memory for tpu_custom_call.1']
    %17 = vsyncpa [#allocation6], 0
    %s18 = scalar_lea.sflag [#allocation6], 1
    %19 = vsyncpa %s18, 0
    loop: start=0, step=1, limit=6
    $region2: #{tpu_custom_call.1} parent=1 // loop_pre_header
      _
    $region3: #{tpu_custom_call.1} parent=1 // loop_header
      %s21 = sphi 0, %s25
      %p22 = scmp.ge.s32.totalorder %s21, 6
      %s28 = sphi 0, %s40
      %s29 = sphi 0, %s36
      %s30 = sphi 0, %s28
      %s31 = sphi 0, %s29
      %s32 = sphi 0, %s30
      %s33 = sphi 0, %s31
      %s43 = sphi 0, %s45
      %s46 = sphi 0, %s43
      %s47 = sphi 0, %s46
      %s63 = sphi 0, %s47
      %s67 = sphi 0, %s67
      %s69 = sphi 0, %s67
      %s70 = sphi 0, %s69
      %s84 = sphi 0, %s70
      %s90 = sphi 0, %s92
      %s93 = sphi 0, %s90
      %s94 = sphi 0, %s93
      %s110 = sphi 0, %s94
      %s116 = sphi 0, %s118
      %s119 = sphi 0, %s116
      %s120 = sphi 0, %s119
      %s136 = sphi 0, %s120
      %s142 = sphi 0, %s144
      %s145 = sphi 0, %s142
      %s146 = sphi 0, %s145
      %s162 = sphi 0, %s146
      %s168 = sphi 0, %s170
      %s171 = sphi 0, %s168
      %s172 = sphi 0, %s171
      %s188 = sphi 0, %s172
      %s194 = sphi 0, %s196
      %s197 = sphi 0, %s194
      %s198 = sphi 0, %s197
      %s214 = sphi 0, %s198
      %s220 = sphi 0, %s222
      %s223 = sphi 0, %s220
      %s224 = sphi 0, %s223
      %s240 = sphi 0, %s224
      %s246 = sphi 0, %s248
      %s249 = sphi 0, %s246
      %s250 = sphi 0, %s249
      %s266 = sphi 0, %s250
      %s272 = sphi 0, %s274
      %s275 = sphi 0, %s272
      %s276 = sphi 0, %s275
      %s292 = sphi 0, %s276
      %s296 = sphi 0, %s296
      %s298 = sphi 0, %s296
      %s299 = sphi 0, %s298
      %s313 = sphi 0, %s299
      %s317 = sphi 0, %s317
      %s319 = sphi 0, %s317
      %s320 = sphi 0, %s319
      %s334 = sphi 0, %s320
      %s340 = sphi 0, %s342
      %s343 = sphi 0, %s340
      %s344 = sphi 0, %s343
      %s360 = sphi 0, %s344
    $region4: #{tpu_custom_call.1} parent=1 // loop_header_branch
      %24 = sbr.rel (%p22) target = $region8
    $region5: #{tpu_custom_call.1} parent=1 // loop_body
      %s26 = ssub.s32 %s21, 1
      %s27 = ssub.s32 %s21, 2
      %s34 = sadd.s32 1, %s29
      %p35 = scmp.ge.s32.totalorder %s34, 2
      %s36 = scalar_select %p35, 0, %s34
      %s37 = sadd.s32 1, %s28
      %s38 = scalar_select %p35, %s37, %s28
      %p39 = scmp.ge.s32.totalorder %s38, 2
      %s40 = scalar_select %p39, 0, %s38
      %s41 = ssub.s32 %s28, %s40
      %p42 = scmp.eq.s32.totalorder %s41, 0
      %s44 = sadd.s32 %s43, 1
      %s45 = scalar_select %p42, %s43, %s44
      %p48 = pneg %p42
      %p49 = scmp.eq.s32.totalorder %s21, 3
      %p50 = por %p48, %p49
      %p51 = scmp.ne.s32.totalorder %s43, %s46
      %p52 = scmp.eq.s32.totalorder %s21, 0
      %p53 = por %p51, %p52
      %p54 = scmp.ne.s32.totalorder %s43, %s46
      %p55 = scmp.eq.s32.totalorder %s26, 3
      %p56 = por %p54, %p55
      %p57 = scmp.ne.s32.totalorder %s46, %s47
      %p58 = scmp.eq.s32.totalorder %s26, 0
      %p59 = por %p57, %p58
      %p60 = scmp.ne.s32.totalorder %s46, %s47
      %p61 = scmp.eq.s32.totalorder %s27, 3
      %p62 = por %p60, %p61
      %p64 = scmp.ne.s32.totalorder %s47, %s63
      %p65 = scmp.eq.s32.totalorder %s27, 0
      %p66 = por %p64, %p65
      %s68 = sadd.s32 %s67, 1
      %p71 = scmp.eq.s32.totalorder %s21, 3
      %p72 = scmp.ne.s32.totalorder %s67, %s69
      %p73 = scmp.eq.s32.totalorder %s21, 0
      %p74 = por %p72, %p73
      %p75 = scmp.ne.s32.totalorder %s67, %s69
      %p76 = scmp.eq.s32.totalorder %s26, 3
      %p77 = por %p75, %p76
      %p78 = scmp.ne.s32.totalorder %s69, %s70
      %p79 = scmp.eq.s32.totalorder %s26, 0
      %p80 = por %p78, %p79
      %p81 = scmp.ne.s32.totalorder %s69, %s70
      %p82 = scmp.eq.s32.totalorder %s27, 3
      %p83 = por %p81, %p82
      %p85 = scmp.ne.s32.totalorder %s70, %s84
      %p86 = scmp.eq.s32.totalorder %s27, 0
      %p87 = por %p85, %p86
      %s88 = ssub.s32 %s29, %s36
      %p89 = scmp.eq.s32.totalorder %s88, 0
      %s91 = sadd.s32 %s90, 1
      %s92 = scalar_select %p89, %s90, %s91
      %p95 = pneg %p89
      %p96 = scmp.eq.s32.totalorder %s21, 3
      %p97 = por %p95, %p96
      %p98 = scmp.ne.s32.totalorder %s90, %s93
      %p99 = scmp.eq.s32.totalorder %s21, 0
      %p100 = por %p98, %p99
      %p101 = scmp.ne.s32.totalorder %s90, %s93
      %p102 = scmp.eq.s32.totalorder %s26, 3
      %p103 = por %p101, %p102
      %p104 = scmp.ne.s32.totalorder %s93, %s94
      %p105 = scmp.eq.s32.totalorder %s26, 0
      %p106 = por %p104, %p105
      %p107 = scmp.ne.s32.totalorder %s93, %s94
      %p108 = scmp.eq.s32.totalorder %s27, 3
      %p109 = por %p107, %p108
      %p111 = scmp.ne.s32.totalorder %s94, %s110
      %p112 = scmp.eq.s32.totalorder %s27, 0
      %p113 = por %p111, %p112
      %s114 = ssub.s32 %s29, %s36
      %p115 = scmp.eq.s32.totalorder %s114, 0
      %s117 = sadd.s32 %s116, 1
      %s118 = scalar_select %p115, %s116, %s117
      %p121 = pneg %p115
      %p122 = scmp.eq.s32.totalorder %s21, 3
      %p123 = por %p121, %p122
      %p124 = scmp.ne.s32.totalorder %s116, %s119
      %p125 = scmp.eq.s32.totalorder %s21, 0
      %p126 = por %p124, %p125
      %p127 = scmp.ne.s32.totalorder %s116, %s119
      %p128 = scmp.eq.s32.totalorder %s26, 3
      %p129 = por %p127, %p128
      %p130 = scmp.ne.s32.totalorder %s119, %s120
      %p131 = scmp.eq.s32.totalorder %s26, 0
      %p132 = por %p130, %p131
      %p133 = scmp.ne.s32.totalorder %s119, %s120
      %p134 = scmp.eq.s32.totalorder %s27, 3
      %p135 = por %p133, %p134
      %p137 = scmp.ne.s32.totalorder %s120, %s136
      %p138 = scmp.eq.s32.totalorder %s27, 0
      %p139 = por %p137, %p138
      %s140 = ssub.s32 %s29, %s36
      %p141 = scmp.eq.s32.totalorder %s140, 0
      %s143 = sadd.s32 %s142, 1
      %s144 = scalar_select %p141, %s142, %s143
      %p147 = pneg %p141
      %p148 = scmp.eq.s32.totalorder %s21, 3
      %p149 = por %p147, %p148
      %p150 = scmp.ne.s32.totalorder %s142, %s145
      %p151 = scmp.eq.s32.totalorder %s21, 0
      %p152 = por %p150, %p151
      %p153 = scmp.ne.s32.totalorder %s142, %s145
      %p154 = scmp.eq.s32.totalorder %s26, 3
      %p155 = por %p153, %p154
      %p156 = scmp.ne.s32.totalorder %s145, %s146
      %p157 = scmp.eq.s32.totalorder %s26, 0
      %p158 = por %p156, %p157
      %p159 = scmp.ne.s32.totalorder %s145, %s146
      %p160 = scmp.eq.s32.totalorder %s27, 3
      %p161 = por %p159, %p160
      %p163 = scmp.ne.s32.totalorder %s146, %s162
      %p164 = scmp.eq.s32.totalorder %s27, 0
      %p165 = por %p163, %p164
      %s166 = ssub.s32 %s29, %s36
      %p167 = scmp.eq.s32.totalorder %s166, 0
      %s169 = sadd.s32 %s168, 1
      %s170 = scalar_select %p167, %s168, %s169
      %p173 = pneg %p167
      %p174 = scmp.eq.s32.totalorder %s21, 3
      %p175 = por %p173, %p174
      %p176 = scmp.ne.s32.totalorder %s168, %s171
      %p177 = scmp.eq.s32.totalorder %s21, 0
      %p178 = por %p176, %p177
      %p179 = scmp.ne.s32.totalorder %s168, %s171
      %p180 = scmp.eq.s32.totalorder %s26, 3
      %p181 = por %p179, %p180
      %p182 = scmp.ne.s32.totalorder %s171, %s172
      %p183 = scmp.eq.s32.totalorder %s26, 0
      %p184 = por %p182, %p183
      %p185 = scmp.ne.s32.totalorder %s171, %s172
      %p186 = scmp.eq.s32.totalorder %s27, 3
      %p187 = por %p185, %p186
      %p189 = scmp.ne.s32.totalorder %s172, %s188
      %p190 = scmp.eq.s32.totalorder %s27, 0
      %p191 = por %p189, %p190
      %s192 = ssub.s32 %s29, %s36
      %p193 = scmp.eq.s32.totalorder %s192, 0
      %s195 = sadd.s32 %s194, 1
      %s196 = scalar_select %p193, %s194, %s195
      %p199 = pneg %p193
      %p200 = scmp.eq.s32.totalorder %s21, 3
      %p201 = por %p199, %p200
      %p202 = scmp.ne.s32.totalorder %s194, %s197
      %p203 = scmp.eq.s32.totalorder %s21, 0
      %p204 = por %p202, %p203
      %p205 = scmp.ne.s32.totalorder %s194, %s197
      %p206 = scmp.eq.s32.totalorder %s26, 3
      %p207 = por %p205, %p206
      %p208 = scmp.ne.s32.totalorder %s197, %s198
      %p209 = scmp.eq.s32.totalorder %s26, 0
      %p210 = por %p208, %p209
      %p211 = scmp.ne.s32.totalorder %s197, %s198
      %p212 = scmp.eq.s32.totalorder %s27, 3
      %p213 = por %p211, %p212
      %p215 = scmp.ne.s32.totalorder %s198, %s214
      %p216 = scmp.eq.s32.totalorder %s27, 0
      %p217 = por %p215, %p216
      %s218 = ssub.s32 %s29, %s36
      %p219 = scmp.eq.s32.totalorder %s218, 0
      %s221 = sadd.s32 %s220, 1
      %s222 = scalar_select %p219, %s220, %s221
      %p225 = pneg %p219
      %p226 = scmp.eq.s32.totalorder %s21, 3
      %p227 = por %p225, %p226
      %p228 = scmp.ne.s32.totalorder %s220, %s223
      %p229 = scmp.eq.s32.totalorder %s21, 0
      %p230 = por %p228, %p229
      %p231 = scmp.ne.s32.totalorder %s220, %s223
      %p232 = scmp.eq.s32.totalorder %s26, 3
      %p233 = por %p231, %p232
      %p234 = scmp.ne.s32.totalorder %s223, %s224
      %p235 = scmp.eq.s32.totalorder %s26, 0
      %p236 = por %p234, %p235
      %p237 = scmp.ne.s32.totalorder %s223, %s224
      %p238 = scmp.eq.s32.totalorder %s27, 3
      %p239 = por %p237, %p238
      %p241 = scmp.ne.s32.totalorder %s224, %s240
      %p242 = scmp.eq.s32.totalorder %s27, 0
      %p243 = por %p241, %p242
      %s244 = ssub.s32 %s29, %s36
      %p245 = scmp.eq.s32.totalorder %s244, 0
      %s247 = sadd.s32 %s246, 1
      %s248 = scalar_select %p245, %s246, %s247
      %p251 = pneg %p245
      %p252 = scmp.eq.s32.totalorder %s21, 3
      %p253 = por %p251, %p252
      %p254 = scmp.ne.s32.totalorder %s246, %s249
      %p255 = scmp.eq.s32.totalorder %s21, 0
      %p256 = por %p254, %p255
      %p257 = scmp.ne.s32.totalorder %s246, %s249
      %p258 = scmp.eq.s32.totalorder %s26, 3
      %p259 = por %p257, %p258
      %p260 = scmp.ne.s32.totalorder %s249, %s250
      %p261 = scmp.eq.s32.totalorder %s26, 0
      %p262 = por %p260, %p261
      %p263 = scmp.ne.s32.totalorder %s249, %s250
      %p264 = scmp.eq.s32.totalorder %s27, 3
      %p265 = por %p263, %p264
      %p267 = scmp.ne.s32.totalorder %s250, %s266
      %p268 = scmp.eq.s32.totalorder %s27, 0
      %p269 = por %p267, %p268
      %s270 = ssub.s32 %s29, %s36
      %p271 = scmp.eq.s32.totalorder %s270, 0
      %s273 = sadd.s32 %s272, 1
      %s274 = scalar_select %p271, %s272, %s273
      %p277 = pneg %p271
      %p278 = scmp.eq.s32.totalorder %s21, 3
      %p279 = por %p277, %p278
      %p280 = scmp.ne.s32.totalorder %s272, %s275
      %p281 = scmp.eq.s32.totalorder %s21, 0
      %p282 = por %p280, %p281
      %p283 = scmp.ne.s32.totalorder %s272, %s275
      %p284 = scmp.eq.s32.totalorder %s26, 3
      %p285 = por %p283, %p284
      %p286 = scmp.ne.s32.totalorder %s275, %s276
      %p287 = scmp.eq.s32.totalorder %s26, 0
      %p288 = por %p286, %p287
      %p289 = scmp.ne.s32.totalorder %s275, %s276
      %p290 = scmp.eq.s32.totalorder %s27, 3
      %p291 = por %p289, %p290
      %p293 = scmp.ne.s32.totalorder %s276, %s292
      %p294 = scmp.eq.s32.totalorder %s27, 0
      %p295 = por %p293, %p294
      %s297 = sadd.s32 %s296, 1
      %p300 = scmp.eq.s32.totalorder %s21, 3
      %p301 = scmp.ne.s32.totalorder %s296, %s298
      %p302 = scmp.eq.s32.totalorder %s21, 0
      %p303 = por %p301, %p302
      %p304 = scmp.ne.s32.totalorder %s296, %s298
      %p305 = scmp.eq.s32.totalorder %s26, 3
      %p306 = por %p304, %p305
      %p307 = scmp.ne.s32.totalorder %s298, %s299
      %p308 = scmp.eq.s32.totalorder %s26, 0
      %p309 = por %p307, %p308
      %p310 = scmp.ne.s32.totalorder %s298, %s299
      %p311 = scmp.eq.s32.totalorder %s27, 3
      %p312 = por %p310, %p311
      %p314 = scmp.ne.s32.totalorder %s299, %s313
      %p315 = scmp.eq.s32.totalorder %s27, 0
      %p316 = por %p314, %p315
      %s318 = sadd.s32 %s317, 1
      %p321 = scmp.eq.s32.totalorder %s21, 3
      %p322 = scmp.ne.s32.totalorder %s317, %s319
      %p323 = scmp.eq.s32.totalorder %s21, 0
      %p324 = por %p322, %p323
      %p325 = scmp.ne.s32.totalorder %s317, %s319
      %p326 = scmp.eq.s32.totalorder %s26, 3
      %p327 = por %p325, %p326
      %p328 = scmp.ne.s32.totalorder %s319, %s320
      %p329 = scmp.eq.s32.totalorder %s26, 0
      %p330 = por %p328, %p329
      %p331 = scmp.ne.s32.totalorder %s319, %s320
      %p332 = scmp.eq.s32.totalorder %s27, 3
      %p333 = por %p331, %p332
      %p335 = scmp.ne.s32.totalorder %s320, %s334
      %p336 = scmp.eq.s32.totalorder %s27, 0
      %p337 = por %p335, %p336
      %s338 = ssub.s32 %s28, %s40
      %p339 = scmp.eq.s32.totalorder %s338, 0
      %s341 = sadd.s32 %s340, 1
      %s342 = scalar_select %p339, %s340, %s341
      %p345 = pneg %p339
      %p346 = scmp.eq.s32.totalorder %s21, 3
      %p347 = por %p345, %p346
      %p348 = scmp.ne.s32.totalorder %s340, %s343
      %p349 = scmp.eq.s32.totalorder %s21, 0
      %p350 = por %p348, %p349
      %p351 = scmp.ne.s32.totalorder %s340, %s343
      %p352 = scmp.eq.s32.totalorder %s26, 3
      %p353 = por %p351, %p352
      %p354 = scmp.ne.s32.totalorder %s343, %s344
      %p355 = scmp.eq.s32.totalorder %s26, 0
      %p356 = por %p354, %p355
      %p357 = scmp.ne.s32.totalorder %s343, %s344
      %p358 = scmp.eq.s32.totalorder %s27, 3
      %p359 = por %p357, %p358
      %p361 = scmp.ne.s32.totalorder %s344, %s360
      %p362 = scmp.eq.s32.totalorder %s27, 0
      %p363 = por %p361, %p362
      %p364 = scmp.le.s32.totalorder 1, %s21
      %p365 = scmp.lt.s32.totalorder %s21, 5
      %p366 = pnand %p364, %p365
      %p367 = pneg %p366
      // Predicated region
      $region9: #{tpu_custom_call.1} parent=5 // pred_check
        _
      $region10: #{tpu_custom_call.1} parent=5 // pred_check_branch
        %369 = sbr.rel (%p366) target = $region12
      $region11: #{tpu_custom_call.1} parent=5 // pred_region
        %s370 = ssub.s32 %s21, 1
        // Predicated region
        $region13: #{tpu_custom_call.1} parent=11 // pred_check
          %p371 = pneg %p80
        $region14: #{tpu_custom_call.1} parent=11 // pred_check_branch
          %373 = sbr.rel (%p371) target = $region16
        $region15: #{tpu_custom_call.1} parent=11 // pred_region
          _
        $region16: #{tpu_custom_call.1} parent=11 // pred_fallthru
          _
        // Predicated region
        $region17: #{tpu_custom_call.1} parent=11 // pred_check
          %p374 = pneg %p309
        $region18: #{tpu_custom_call.1} parent=11 // pred_check_branch
          %376 = sbr.rel (%p374) target = $region20
        $region19: #{tpu_custom_call.1} parent=11 // pred_region
          _
        $region20: #{tpu_custom_call.1} parent=11 // pred_fallthru
          _
        // Predicated region
        $region21: #{tpu_custom_call.1} parent=11 // pred_check
          %p377 = pneg %p330
        $region22: #{tpu_custom_call.1} parent=11 // pred_check_branch
          %379 = sbr.rel (%p377) target = $region24
        $region23: #{tpu_custom_call.1} parent=11 // pred_region
          _
        $region24: #{tpu_custom_call.1} parent=11 // pred_fallthru
          _
      $region12: #{tpu_custom_call.1} parent=5 // pred_fallthru
        _
      %p380 = scmp.lt.s32.totalorder %s21, 4
      // Predicated region
      $region25: #{tpu_custom_call.1} parent=5 // pred_check
        %p381 = pneg %p380
      $region26: #{tpu_custom_call.1} parent=5 // pred_check_branch
        %383 = sbr.rel (%p381) target = $region28
      $region27: #{tpu_custom_call.1} parent=5 // pred_region
        // Predicated region
        $region29: #{tpu_custom_call.1} parent=27 // pred_check
          %p384 = pneg %p53
        $region30: #{tpu_custom_call.1} parent=27 // pred_check_branch
          %386 = sbr.rel (%p384) target = $region32
        $region31: #{tpu_custom_call.1} parent=27 // pred_region
          %p387 = scmp.lt.s32.totalorder %s28, 1
          %s388 = scalar_select %p387, %s28, 1
          %s389 = smul.addr %s388, 6
          %s390 = smul.addr %s389, 8
          %s391 = scalar_lea.vmem %s0, %s390
        $region32: #{tpu_custom_call.1} parent=27 // pred_fallthru
          _
        // Predicated region
        $region33: #{tpu_custom_call.1} parent=27 // pred_check
          %p392 = pneg %p100
        $region34: #{tpu_custom_call.1} parent=27 // pred_check_branch
          %394 = sbr.rel (%p392) target = $region36
        $region35: #{tpu_custom_call.1} parent=27 // pred_region
          %p395 = scmp.lt.s32.totalorder %s29, 1
          %s396 = scalar_select %p395, %s29, 1
          %s397 = smul.addr %s396, 4
          %s398 = smul.addr %s397, 4
          %s399 = scalar_lea.vmem %s2, %s398
        $region36: #{tpu_custom_call.1} parent=27 // pred_fallthru
          _
        // Predicated region
        $region37: #{tpu_custom_call.1} parent=27 // pred_check
          %p400 = pneg %p126
        $region38: #{tpu_custom_call.1} parent=27 // pred_check_branch
          %402 = sbr.rel (%p400) target = $region40
        $region39: #{tpu_custom_call.1} parent=27 // pred_region
          %p403 = scmp.lt.s32.totalorder %s29, 1
          %s404 = scalar_select %p403, %s29, 1
          %s405 = smul.addr %s404, 2
          %s406 = smul.addr %s405, 8
          %s407 = scalar_lea.vmem %s3, %s406
        $region40: #{tpu_custom_call.1} parent=27 // pred_fallthru
          _
        // Predicated region
        $region41: #{tpu_custom_call.1} parent=27 // pred_check
          %p408 = pneg %p152
        $region42: #{tpu_custom_call.1} parent=27 // pred_check_branch
          %410 = sbr.rel (%p408) target = $region44
        $region43: #{tpu_custom_call.1} parent=27 // pred_region
          %p411 = scmp.lt.s32.totalorder %s29, 1
          %s412 = scalar_select %p411, %s29, 1
          %s413 = smul.addr %s412, 4
          %s414 = smul.addr %s413, 4
          %s415 = scalar_lea.vmem %s4, %s414
        $region44: #{tpu_custom_call.1} parent=27 // pred_fallthru
          _
        // Predicated region
        $region45: #{tpu_custom_call.1} parent=27 // pred_check
          %p416 = pneg %p178
        $region46: #{tpu_custom_call.1} parent=27 // pred_check_branch
          %418 = sbr.rel (%p416) target = $region48
        $region47: #{tpu_custom_call.1} parent=27 // pred_region
          %p419 = scmp.lt.s32.totalorder %s29, 1
          %s420 = scalar_select %p419, %s29, 1
          %s421 = smul.addr %s420, 2
          %s422 = smul.addr %s421, 8
          %s423 = scalar_lea.vmem %s5, %s422
        $region48: #{tpu_custom_call.1} parent=27 // pred_fallthru
          _
        // Predicated region
        $region49: #{tpu_custom_call.1} parent=27 // pred_check
          %p424 = pneg %p204
        $region50: #{tpu_custom_call.1} parent=27 // pred_check_branch
          %426 = sbr.rel (%p424) target = $region52
        $region51: #{tpu_custom_call.1} parent=27 // pred_region
          %p427 = scmp.lt.s32.totalorder %s29, 1
          %s428 = scalar_select %p427, %s29, 1
          %s429 = smul.addr %s428, 2
          %s430 = smul.addr %s429, 8
          %s431 = scalar_lea.vmem %s6, %s430
        $region52: #{tpu_custom_call.1} parent=27 // pred_fallthru
          _
        // Predicated region
        $region53: #{tpu_custom_call.1} parent=27 // pred_check
          %p432 = pneg %p230
        $region54: #{tpu_custom_call.1} parent=27 // pred_check_branch
          %434 = sbr.rel (%p432) target = $region56
        $region55: #{tpu_custom_call.1} parent=27 // pred_region
          %p435 = scmp.lt.s32.totalorder %s29, 1
          %s436 = scalar_select %p435, %s29, 1
          %s437 = scalar_lea.vmem %s7, %s436
        $region56: #{tpu_custom_call.1} parent=27 // pred_fallthru
          _
        // Predicated region
        $region57: #{tpu_custom_call.1} parent=27 // pred_check
          %p438 = pneg %p256
        $region58: #{tpu_custom_call.1} parent=27 // pred_check_branch
          %440 = sbr.rel (%p438) target = $region60
        $region59: #{tpu_custom_call.1} parent=27 // pred_region
          %p441 = scmp.lt.s32.totalorder %s29, 1
          %s442 = scalar_select %p441, %s29, 1
          %s443 = smul.addr %s442, 2
          %s444 = smul.addr %s443, 8
          %s445 = scalar_lea.vmem %s8, %s444
        $region60: #{tpu_custom_call.1} parent=27 // pred_fallthru
          _
        // Predicated region
        $region61: #{tpu_custom_call.1} parent=27 // pred_check
          %p446 = pneg %p282
        $region62: #{tpu_custom_call.1} parent=27 // pred_check_branch
          %448 = sbr.rel (%p446) target = $region64
        $region63: #{tpu_custom_call.1} parent=27 // pred_region
          %p449 = scmp.lt.s32.totalorder %s29, 1
          %s450 = scalar_select %p449, %s29, 1
          %s451 = smul.addr %s450, 2
          %s452 = smul.addr %s451, 8
          %s453 = scalar_lea.vmem %s9, %s452
        $region64: #{tpu_custom_call.1} parent=27 // pred_fallthru
          _
      $region28: #{tpu_custom_call.1} parent=5 // pred_fallthru
        _
      %p454 = scmp.le.s32.totalorder 1, %s21
      %p455 = scmp.lt.s32.totalorder %s21, 5
      %p456 = pnand %p454, %p455
      %p457 = pneg %p456
      // Predicated region
      $region65: #{tpu_custom_call.1} parent=5 // pred_check
        _
      $region66: #{tpu_custom_call.1} parent=5 // pred_check_branch
        %459 = sbr.rel (%p456) target = $region68
      $region67: #{tpu_custom_call.1} parent=5 // pred_region
        %s460 = ssub.s32 %s21, 1
        %p461 = scmp.lt.s32.totalorder %s30, 1
        %s462 = scalar_select %p461, %s30, 1
        %s463 = smul.addr %s462, 6
        %s464 = smul.addr %s463, 8
        %s465 = scalar_lea.vmem %s0, %s464
        %p466 = pneg %p59
        %p467 = pneg %p56
        %p468 = pneg %p80
        %p469 = pneg %p77
        %p470 = scmp.lt.s32.totalorder %s31, 1
        %s471 = scalar_select %p470, %s31, 1
        %s472 = smul.addr %s471, 4
        %s473 = smul.addr %s472, 4
        %s474 = scalar_lea.vmem %s2, %s473
        %p475 = pneg %p106
        %p476 = pneg %p103
        %p477 = scmp.lt.s32.totalorder %s31, 1
        %s478 = scalar_select %p477, %s31, 1
        %s479 = smul.addr %s478, 2
        %s480 = smul.addr %s479, 8
        %s481 = scalar_lea.vmem %s3, %s480
        %p482 = pneg %p132
        %p483 = pneg %p129
        %p484 = scmp.lt.s32.totalorder %s31, 1
        %s485 = scalar_select %p484, %s31, 1
        %s486 = smul.addr %s485, 4
        %s487 = smul.addr %s486, 4
        %s488 = scalar_lea.vmem %s4, %s487
        %p489 = pneg %p158
        %p490 = pneg %p155
        %p491 = scmp.lt.s32.totalorder %s31, 1
        %s492 = scalar_select %p491, %s31, 1
        %s493 = smul.addr %s492, 2
        %s494 = smul.addr %s493, 8
        %s495 = scalar_lea.vmem %s5, %s494
        %p496 = pneg %p184
        %p497 = pneg %p181
        %p498 = scmp.lt.s32.totalorder %s31, 1
        %s499 = scalar_select %p498, %s31, 1
        %s500 = smul.addr %s499, 2
        %s501 = smul.addr %s500, 8
        %s502 = scalar_lea.vmem %s6, %s501
        %p503 = pneg %p210
        %p504 = pneg %p207
        %p505 = scmp.lt.s32.totalorder %s31, 1
        %s506 = scalar_select %p505, %s31, 1
        %s507 = scalar_lea.vmem %s7, %s506
        %p508 = pneg %p236
        %p509 = pneg %p233
        %p510 = scmp.lt.s32.totalorder %s31, 1
        %s511 = scalar_select %p510, %s31, 1
        %s512 = smul.addr %s511, 2
        %s513 = smul.addr %s512, 8
        %s514 = scalar_lea.vmem %s8, %s513
        %p515 = pneg %p262
        %p516 = pneg %p259
        %p517 = scmp.lt.s32.totalorder %s31, 1
        %s518 = scalar_select %p517, %s31, 1
        %s519 = smul.addr %s518, 2
        %s520 = smul.addr %s519, 8
        %s521 = scalar_lea.vmem %s9, %s520
        %p522 = pneg %p288
        %p523 = pneg %p285
        %p524 = pneg %p309
        %p525 = pneg %p306
        %p526 = pneg %p330
        %p527 = pneg %p327
        %p528 = pneg %p356
        %p529 = pneg %p353
        %s530 = sand.u32 %s343, 1
        %s531 = scalar_lea.sflag [#allocation6], %s530
        %s532 = sand.u32 %s343, 1
        %s533 = smul.addr %s532, 48
        %s534 = scalar_lea.vmem [#allocation5], %s533
        %p535 = scmp.lt.s32.totalorder %s30, 1
        %s536 = scalar_select %p535, %s30, 1
        %s537 = smul.addr %s536, 6
        %s538 = smul.addr %s537, 8
        %s539 = scalar_lea.vmem %s0, %s538
        %p540 = scmp.lt.s32.totalorder %s31, 1
        %s541 = scalar_select %p540, %s31, 1
        %s542 = smul.addr %s541, 4
        %s543 = smul.addr %s542, 4
        %s544 = scalar_lea.vmem %s2, %s543
        %p545 = scmp.lt.s32.totalorder %s31, 1
        %s546 = scalar_select %p545, %s31, 1
        %s547 = smul.addr %s546, 2
        %s548 = smul.addr %s547, 8
        %s549 = scalar_lea.vmem %s3, %s548
        %p550 = scmp.lt.s32.totalorder %s31, 1
        %s551 = scalar_select %p550, %s31, 1
        %s552 = smul.addr %s551, 4
        %s553 = smul.addr %s552, 4
        %s554 = scalar_lea.vmem %s4, %s553
        %p555 = scmp.lt.s32.totalorder %s31, 1
        %s556 = scalar_select %p555, %s31, 1
        %s557 = smul.addr %s556, 2
        %s558 = smul.addr %s557, 8
        %s559 = scalar_lea.vmem %s5, %s558
        %p560 = scmp.lt.s32.totalorder %s31, 1
        %s561 = scalar_select %p560, %s31, 1
        %s562 = smul.addr %s561, 2
        %s563 = smul.addr %s562, 8
        %s564 = scalar_lea.vmem %s6, %s563
        %p565 = scmp.lt.s32.totalorder %s31, 1
        %s566 = scalar_select %p565, %s31, 1
        %s567 = scalar_lea.vmem %s7, %s566
        %p568 = scmp.lt.s32.totalorder %s31, 1
        %s569 = scalar_select %p568, %s31, 1
        %s570 = smul.addr %s569, 2
        %s571 = smul.addr %s570, 8
        %s572 = scalar_lea.vmem %s8, %s571
        %p573 = scmp.lt.s32.totalorder %s31, 1
        %s574 = scalar_select %p573, %s31, 1
        %s575 = smul.addr %s574, 2
        %s576 = smul.addr %s575, 8
        %s577 = scalar_lea.vmem %s9, %s576
        %v579 = vld [vmem:[%s1] sm:$0x7]
        %p580 = scmp.eq.s32.totalorder %s31, 0
        // Predicated region
        $region69: #{tpu_custom_call.1} parent=67 // pred_check
          %p581 = pneg %p580
        $region70: #{tpu_custom_call.1} parent=67 // pred_check_branch
          %583 = sbr.rel (%p581) target = $region72
        $region71: #{tpu_custom_call.1} parent=67 // pred_region
          %584 = vst [vmem:[#allocation2] sm:$0xff] 0.0
          %585 = vst [vmem:[#allocation2 + $0x28] sm:$0xff] 0.0
          %vm586 = vcmask 1048096
          %587 = vst.msk [vmem:[#allocation2 + $0x18] sm:$0xff] %vm586, 0.0
          %vm588 = vcmask 556032
          %589 = vst.msk [vmem:[#allocation2 + $0x20] sm:$0xff] %vm588, 0.0
          %590 = vst.msk [vmem:[#allocation2 + $0x40] sm:$0xff] %vm586, 0.0
          %591 = vst.msk [vmem:[#allocation2 + $0x48] sm:$0xff] %vm588, 0.0
          %592 = vst [vmem:[#allocation3] sm:$0xff] 0.0
          %593 = vst [vmem:[#allocation3 + $0x28] sm:$0xff] 0.0
          %594 = vst.msk [vmem:[#allocation3 + $0x18] sm:$0xff] %vm586, 0.0
          %595 = vst.msk [vmem:[#allocation3 + $0x20] sm:$0xff] %vm588, 0.0
          %596 = vst.msk [vmem:[#allocation3 + $0x40] sm:$0xff] %vm586, 0.0
          %597 = vst.msk [vmem:[#allocation3 + $0x48] sm:$0xff] %vm588, 0.0
          %v598 = vld [vmem:[%s539] sm:$0xff]
          %v599 = vld [vmem:[%s539 + $0x8] sm:$0xff]
          %v600 = vld [vmem:[%s539 + $0x10] sm:$0xff]
          %v601 = vld [vmem:[%s539 + $0x18] sm:$0xff]
          %v602 = vld [vmem:[%s539 + $0x20] sm:$0xff]
          %v603 = vld [vmem:[%s539 + $0x28] sm:$0xff]
          %604 = vst [vmem:[#allocation2 + $0x8] sm:$0xff] %v598
          %605 = vst [vmem:[#allocation2 + $0x10] sm:$0xff] %v599
          %606 = vst.msk [vmem:[#allocation2 + $0x18] sm:$0xff] %vm588, %v600
          %607 = vst [vmem:[#allocation2 + $0x30] sm:$0xff] %v601
          %608 = vst [vmem:[#allocation2 + $0x38] sm:$0xff] %v602
          %609 = vst.msk [vmem:[#allocation2 + $0x40] sm:$0xff] %vm588, %v603
        $region72: #{tpu_custom_call.1} parent=67 // pred_fallthru
          _
        %v610 = vld [vmem:[%s544] sm:$0xff]
        %v611 = vld [vmem:[%s544 + $0x8] sm:$0xff]
        %v612 = vld [vmem:[#allocation2] sm:$0xff]
        %v613 = vld [vmem:[#allocation2 + $0x8] sm:$0xff]
        %v614 = vld [vmem:[#allocation2 + $0x10] sm:$0xff]
        %v615 = vld [vmem:[#allocation2 + $0x18] sm:$0xff]
        %v616 = vld [vmem:[#allocation2 + $0x28] sm:$0xff]
        %v617 = vld [vmem:[#allocation2 + $0x30] sm:$0xff]
        %v618 = vld [vmem:[#allocation2 + $0x38] sm:$0xff]
        %v619 = vld [vmem:[#allocation2 + $0x40] sm:$0xff]
        %v620 = vpack.c.bf16 %v613, %v612
        %v621 = vpack.c.bf16 %v615, %v614
        %v622 = vpack.c.bf16 %v617, %v616
        %v623 = vpack.c.bf16 %v619, %v618
        %628 = vrot.lane.b32.xlu0 %v620, 19
        %v629 = vpop.permute.xlu0 %628
        %630 = vrot.lane.b32.xlu0 %v621, 19
        %v631 = vpop.permute.xlu0 %630
        %632 = vrot.lane.b32.xlu0 %v622, 19
        %v633 = vpop.permute.xlu0 %632
        %634 = vrot.lane.b32.xlu0 %v623, 19
        %v635 = vpop.permute.xlu0 %634
        %v636 = vrot.slane %v629, 4
        %v637 = vrot.slane %v631, 4
        %v638 = vrot.slane %v633, 4
        %v639 = vrot.slane %v635, 4
        %vm640 = vcmask 1043456
        %v641 = vsel %vm640, %v636, %v637
        %vm642 = vcmask 154624
        %v643 = vsel %vm642, %v629, %v641
        %v644 = vsel %vm642, %v631, %v637
        %v645 = vsel %vm640, %v638, %v639
        %v646 = vsel %vm642, %v633, %v645
        %v647 = vsel %vm642, %v635, %v639
        %652 = vst [vmem:[#allocation4] sm:$0xff] %v643
        %vm653 = vcmask 551936
        %654 = vst.msk [vmem:[#allocation4 + $0x8] sm:$0xf] %vm653, %v644
        %655 = vst [vmem:[#allocation4 + $0xc] sm:$0xff] %v646
        %656 = vst.msk [vmem:[#allocation4 + $0x14] sm:$0xf] %vm653, %v647
        %v657 = vld [vmem:[#allocation2] sm:$0xff]
        %v658 = vld [vmem:[#allocation2 + $0x8] sm:$0xff]
        %v659 = vld [vmem:[#allocation2 + $0x10] sm:$0xff]
        %v660 = vld [vmem:[#allocation2 + $0x18] sm:$0xff]
        %v661 = vld [vmem:[#allocation2 + $0x28] sm:$0xff]
        %v662 = vld [vmem:[#allocation2 + $0x30] sm:$0xff]
        %v663 = vld [vmem:[#allocation2 + $0x38] sm:$0xff]
        %v664 = vld [vmem:[#allocation2 + $0x40] sm:$0xff]
        %v665 = vpack.c.bf16 %v658, %v657
        %v666 = vpack.c.bf16 %v660, %v659
        %v667 = vpack.c.bf16 %v662, %v661
        %v668 = vpack.c.bf16 %v664, %v663
        %673 = vrot.lane.b32.xlu0 %v665, 18
        %v674 = vpop.permute.xlu0 %673
        %675 = vrot.lane.b32.xlu0 %v666, 18
        %v676 = vpop.permute.xlu0 %675
        %677 = vrot.lane.b32.xlu0 %v667, 18
        %v678 = vpop.permute.xlu0 %677
        %679 = vrot.lane.b32.xlu0 %v668, 18
        %v680 = vpop.permute.xlu0 %679
        %v681 = vrot.slane %v674, 4
        %v682 = vrot.slane %v676, 4
        %v683 = vrot.slane %v678, 4
        %v684 = vrot.slane %v680, 4
        %v685 = vsel %vm640, %v681, %v682
        %vm686 = vcmask 146432
        %v687 = vsel %vm686, %v674, %v685
        %v688 = vsel %vm686, %v676, %v682
        %v689 = vsel %vm640, %v683, %v684
        %v690 = vsel %vm686, %v678, %v689
        %v691 = vsel %vm686, %v680, %v684
        %696 = vst [vmem:[#allocation4 + $0x18] sm:$0xff] %v687
        %697 = vst.msk [vmem:[#allocation4 + $0x20] sm:$0xf] %vm653, %v688
        %698 = vst [vmem:[#allocation4 + $0x24] sm:$0xff] %v690
        %699 = vst.msk [vmem:[#allocation4 + $0x2c] sm:$0xf] %vm653, %v691
        %v700 = vld [vmem:[#allocation2] sm:$0xff]
        %v701 = vld [vmem:[#allocation2 + $0x8] sm:$0xff]
        %v702 = vld [vmem:[#allocation2 + $0x10] sm:$0xff]
        %v703 = vld [vmem:[#allocation2 + $0x18] sm:$0xff]
        %v704 = vld [vmem:[#allocation2 + $0x28] sm:$0xff]
        %v705 = vld [vmem:[#allocation2 + $0x30] sm:$0xff]
        %v706 = vld [vmem:[#allocation2 + $0x38] sm:$0xff]
        %v707 = vld [vmem:[#allocation2 + $0x40] sm:$0xff]
        %v708 = vpack.c.bf16 %v701, %v700
        %v709 = vpack.c.bf16 %v703, %v702
        %v710 = vpack.c.bf16 %v705, %v704
        %v711 = vpack.c.bf16 %v707, %v706
        %716 = vrot.lane.b32.xlu0 %v708, 17
        %v717 = vpop.permute.xlu0 %716
        %718 = vrot.lane.b32.xlu0 %v709, 17
        %v719 = vpop.permute.xlu0 %718
        %720 = vrot.lane.b32.xlu0 %v710, 17
        %v721 = vpop.permute.xlu0 %720
        %722 = vrot.lane.b32.xlu0 %v711, 17
        %v723 = vpop.permute.xlu0 %722
        %v724 = vrot.slane %v717, 4
        %v725 = vrot.slane %v719, 4
        %v726 = vrot.slane %v721, 4
        %v727 = vrot.slane %v723, 4
        %v728 = vsel %vm640, %v724, %v725
        %vm729 = vcmask 138240
        %v730 = vsel %vm729, %v717, %v728
        %v731 = vsel %vm729, %v719, %v725
        %v732 = vsel %vm640, %v726, %v727
        %v733 = vsel %vm729, %v721, %v732
        %v734 = vsel %vm729, %v723, %v727
        %739 = vst [vmem:[#allocation4 + $0x30] sm:$0xff] %v730
        %740 = vst.msk [vmem:[#allocation4 + $0x38] sm:$0xf] %vm653, %v731
        %741 = vst [vmem:[#allocation4 + $0x3c] sm:$0xff] %v733
        %742 = vst.msk [vmem:[#allocation4 + $0x44] sm:$0xf] %vm653, %v734
        %v743 = vld [vmem:[#allocation2] sm:$0xff]
        %v744 = vld [vmem:[#allocation2 + $0x8] sm:$0xff]
        %v745 = vld [vmem:[#allocation2 + $0x10] sm:$0xff]
        %v746 = vld [vmem:[#allocation2 + $0x18] sm:$0xff]
        %v747 = vld [vmem:[#allocation2 + $0x28] sm:$0xff]
        %v748 = vld [vmem:[#allocation2 + $0x30] sm:$0xff]
        %v749 = vld [vmem:[#allocation2 + $0x38] sm:$0xff]
        %v750 = vld [vmem:[#allocation2 + $0x40] sm:$0xff]
        %v751 = vpack.c.bf16 %v744, %v743
        %v752 = vpack.c.bf16 %v746, %v745
        %v753 = vpack.c.bf16 %v748, %v747
        %v754 = vpack.c.bf16 %v750, %v749
        %759 = vrot.lane.b32.xlu0 %v751, 1
        %v760 = vpop.permute.xlu0 %759
        %761 = vrot.lane.b32.xlu0 %v752, 1
        %v762 = vpop.permute.xlu0 %761
        %763 = vrot.lane.b32.xlu0 %v753, 1
        %v764 = vpop.permute.xlu0 %763
        %765 = vrot.lane.b32.xlu0 %v754, 1
        %v766 = vpop.permute.xlu0 %765
        %v767 = vrot.slane %v760, 4
        %v768 = vrot.slane %v762, 4
        %v769 = vrot.slane %v764, 4
        %v770 = vrot.slane %v766, 4
        %v771 = vsel %vm640, %v767, %v768
        %vm772 = vcmask 7168
        %v773 = vsel %vm772, %v760, %v771
        %v774 = vsel %vm772, %v762, %v768
        %v775 = vsel %vm640, %v769, %v770
        %v776 = vsel %vm772, %v764, %v775
        %v777 = vsel %vm772, %v766, %v770
        %782 = vst [vmem:[#allocation4 + $0x48] sm:$0xff] %v773
        %783 = vst.msk [vmem:[#allocation4 + $0x50] sm:$0xf] %vm653, %v774
        %784 = vst [vmem:[#allocation4 + $0x54] sm:$0xff] %v776
        %785 = vst.msk [vmem:[#allocation4 + $0x5c] sm:$0xf] %vm653, %v777
        %v786 = vld [vmem:[#allocation2 + $0x8] sm:$0xff]
        %v787 = vld [vmem:[#allocation2 + $0x10] sm:$0xff]
        %v788 = vld [vmem:[#allocation2 + $0x18] sm:$0xff]
        %v789 = vld [vmem:[#allocation2 + $0x30] sm:$0xff]
        %v790 = vld [vmem:[#allocation2 + $0x38] sm:$0xff]
        %v791 = vld [vmem:[#allocation2 + $0x40] sm:$0xff]
        %v792 = vpack.c.bf16 %v787, %v786
        %v793 = vpack.c.bf16 %v788, %v788
        %v794 = vpack.c.bf16 %v790, %v789
        %v795 = vpack.c.bf16 %v791, %v791
        %796 = vst [vmem:[#allocation4 + $0x60] sm:$0xff] %v792
        %797 = vst.msk [vmem:[#allocation4 + $0x68] sm:$0xf] %vm653, %v793
        %798 = vst [vmem:[#allocation4 + $0x6c] sm:$0xff] %v794
        %799 = vst.msk [vmem:[#allocation4 + $0x74] sm:$0xf] %vm653, %v795
        %v800 = vld [vmem:[#allocation2 + $0x8] sm:$0xff]
        %v801 = vld [vmem:[#allocation2 + $0x10] sm:$0xff]
        %v802 = vld [vmem:[#allocation2 + $0x18] sm:$0xff]
        %v803 = vld [vmem:[#allocation2 + $0x30] sm:$0xff]
        %v804 = vld [vmem:[#allocation2 + $0x38] sm:$0xff]
        %v805 = vld [vmem:[#allocation2 + $0x40] sm:$0xff]
        %v806 = vpack.c.bf16 %v801, %v800
        %v807 = vpack.c.bf16 %v802, %v802
        %v808 = vpack.c.bf16 %v804, %v803
        %v809 = vpack.c.bf16 %v805, %v805
        %814 = vrot.lane.b32.xlu0 %v806, 127
        %v815 = vpop.permute.xlu0 %814
        %816 = vrot.lane.b32.xlu0 %v807, 127
        %v817 = vpop.permute.xlu0 %816
        %818 = vrot.lane.b32.xlu0 %v808, 127
        %v819 = vpop.permute.xlu0 %818
        %820 = vrot.lane.b32.xlu0 %v809, 127
        %v821 = vpop.permute.xlu0 %820
        %v822 = vrot.slane %v815, 4
        %v823 = vrot.slane %v817, 4
        %v824 = vrot.slane %v819, 4
        %v825 = vrot.slane %v821, 4
        %v826 = vsel %vm640, %v822, %v823
        %vm827 = vcmask 1039360
        %v828 = vsel %vm827, %v815, %v826
        %v829 = vsel %vm640, %v824, %v825
        %v830 = vsel %vm827, %v819, %v829
        %835 = vst [vmem:[#allocation4 + $0x78] sm:$0xff] %v828
        %836 = vst.msk [vmem:[#allocation4 + $0x80] sm:$0xf] %vm653, %v817
        %837 = vst [vmem:[#allocation4 + $0x84] sm:$0xff] %v830
        %838 = vst.msk [vmem:[#allocation4 + $0x8c] sm:$0xf] %vm653, %v821
        %v839 = vld [vmem:[#allocation2 + $0x8] sm:$0xff]
        %v840 = vld [vmem:[#allocation2 + $0x10] sm:$0xff]
        %v841 = vld [vmem:[#allocation2 + $0x18] sm:$0xff]
        %v842 = vld [vmem:[#allocation2 + $0x30] sm:$0xff]
        %v843 = vld [vmem:[#allocation2 + $0x38] sm:$0xff]
        %v844 = vld [vmem:[#allocation2 + $0x40] sm:$0xff]
        %v845 = vpack.c.bf16 %v840, %v839
        %v846 = vpack.c.bf16 %v841, %v841
        %v847 = vpack.c.bf16 %v843, %v842
        %v848 = vpack.c.bf16 %v844, %v844
        %853 = vrot.lane.b32.xlu0 %v845, 111
        %v854 = vpop.permute.xlu0 %853
        %855 = vrot.lane.b32.xlu0 %v846, 111
        %v856 = vpop.permute.xlu0 %855
        %857 = vrot.lane.b32.xlu0 %v847, 111
        %v858 = vpop.permute.xlu0 %857
        %859 = vrot.lane.b32.xlu0 %v848, 111
        %v860 = vpop.permute.xlu0 %859
        %v861 = vrot.slane %v854, 4
        %v862 = vrot.slane %v856, 4
        %v863 = vrot.slane %v858, 4
        %v864 = vrot.slane %v860, 4
        %v865 = vsel %vm640, %v861, %v862
        %vm866 = vcmask 908288
        %v867 = vsel %vm866, %v854, %v865
        %v868 = vsel %vm640, %v863, %v864
        %v869 = vsel %vm866, %v858, %v868
        %874 = vst [vmem:[#allocation4 + $0x90] sm:$0xff] %v867
        %875 = vst.msk [vmem:[#allocation4 + $0x98] sm:$0xf] %vm653, %v856
        %876 = vst [vmem:[#allocation4 + $0x9c] sm:$0xff] %v869
        %877 = vst.msk [vmem:[#allocation4 + $0xa4] sm:$0xf] %vm653, %v860
        %v878 = vld [vmem:[#allocation2 + $0x8] sm:$0xff]
        %v879 = vld [vmem:[#allocation2 + $0x10] sm:$0xff]
        %v880 = vld [vmem:[#allocation2 + $0x18] sm:$0xff]
        %v881 = vld [vmem:[#allocation2 + $0x30] sm:$0xff]
        %v882 = vld [vmem:[#allocation2 + $0x38] sm:$0xff]
        %v883 = vld [vmem:[#allocation2 + $0x40] sm:$0xff]
        %v884 = vpack.c.bf16 %v879, %v878
        %v885 = vpack.c.bf16 %v880, %v880
        %v886 = vpack.c.bf16 %v882, %v881
        %v887 = vpack.c.bf16 %v883, %v883
        %892 = vrot.lane.b32.xlu0 %v884, 110
        %v893 = vpop.permute.xlu0 %892
        %894 = vrot.lane.b32.xlu0 %v885, 110
        %v895 = vpop.permute.xlu0 %894
        %896 = vrot.lane.b32.xlu0 %v886, 110
        %v897 = vpop.permute.xlu0 %896
        %898 = vrot.lane.b32.xlu0 %v887, 110
        %v899 = vpop.permute.xlu0 %898
        %v900 = vrot.slane %v893, 4
        %v901 = vrot.slane %v895, 4
        %v902 = vrot.slane %v897, 4
        %v903 = vrot.slane %v899, 4
        %v904 = vsel %vm640, %v900, %v901
        %vm905 = vcmask 900096
        %v906 = vsel %vm905, %v893, %v904
        %v907 = vsel %vm640, %v902, %v903
        %v908 = vsel %vm905, %v897, %v907
        %913 = vst [vmem:[#allocation4 + $0xa8] sm:$0xff] %v906
        %914 = vst.msk [vmem:[#allocation4 + $0xb0] sm:$0xf] %vm653, %v895
        %915 = vst [vmem:[#allocation4 + $0xb4] sm:$0xff] %v908
        %916 = vst.msk [vmem:[#allocation4 + $0xbc] sm:$0xf] %vm653, %v899
        %v917 = vld [vmem:[#allocation2 + $0x8] sm:$0xff]
        %v918 = vld [vmem:[#allocation2 + $0x10] sm:$0xff]
        %v919 = vld [vmem:[#allocation2 + $0x18] sm:$0xff]
        %v920 = vld [vmem:[#allocation2 + $0x30] sm:$0xff]
        %v921 = vld [vmem:[#allocation2 + $0x38] sm:$0xff]
        %v922 = vld [vmem:[#allocation2 + $0x40] sm:$0xff]
        %v923 = vpack.c.bf16 %v918, %v917
        %v924 = vpack.c.bf16 %v919, %v919
        %v925 = vpack.c.bf16 %v921, %v920
        %v926 = vpack.c.bf16 %v922, %v922
        %931 = vrot.lane.b32.xlu0 %v923, 109
        %v932 = vpop.permute.xlu0 %931
        %933 = vrot.lane.b32.xlu0 %v924, 109
        %v934 = vpop.permute.xlu0 %933
        %935 = vrot.lane.b32.xlu0 %v925, 109
        %v936 = vpop.permute.xlu0 %935
        %937 = vrot.lane.b32.xlu0 %v926, 109
        %v938 = vpop.permute.xlu0 %937
        %v939 = vrot.slane %v932, 4
        %v940 = vrot.slane %v934, 4
        %v941 = vrot.slane %v936, 4
        %v942 = vrot.slane %v938, 4
        %v943 = vsel %vm640, %v939, %v940
        %vm944 = vcmask 891904
        %v945 = vsel %vm944, %v932, %v943
        %v946 = vsel %vm640, %v941, %v942
        %v947 = vsel %vm944, %v936, %v946
        %952 = vst [vmem:[#allocation4 + $0xc0] sm:$0xff] %v945
        %953 = vst.msk [vmem:[#allocation4 + $0xc8] sm:$0xf] %vm653, %v934
        %954 = vst [vmem:[#allocation4 + $0xcc] sm:$0xff] %v947
        %955 = vst.msk [vmem:[#allocation4 + $0xd4] sm:$0xf] %vm653, %v938
        %v956 = vld [vmem:[#allocation4] sm:$0xff]
        %v957 = vld [vmem:[#allocation4 + $0x8] sm:$0xf]
        %v958 = vld [vmem:[#allocation4 + $0xc] sm:$0xff]
        %v959 = vld [vmem:[#allocation4 + $0x14] sm:$0xf]
        %v960 = vld [vmem:[#allocation4 + $0x18] sm:$0xff]
        %v961 = vld [vmem:[#allocation4 + $0x20] sm:$0xf]
        %v962 = vld [vmem:[#allocation4 + $0x24] sm:$0xff]
        %v963 = vld [vmem:[#allocation4 + $0x2c] sm:$0xf]
        %v964 = vld [vmem:[#allocation4 + $0x30] sm:$0xff]
        %v965 = vld [vmem:[#allocation4 + $0x38] sm:$0xf]
        %v966 = vld [vmem:[#allocation4 + $0x3c] sm:$0xff]
        %v967 = vld [vmem:[#allocation4 + $0x44] sm:$0xf]
        %v968 = vld [vmem:[#allocation4 + $0x48] sm:$0xff]
        %v969 = vld [vmem:[#allocation4 + $0x50] sm:$0xf]
        %v970 = vld [vmem:[#allocation4 + $0x54] sm:$0xff]
        %v971 = vld [vmem:[#allocation4 + $0x5c] sm:$0xf]
        %v972 = vld [vmem:[#allocation4 + $0x60] sm:$0xff]
        %v973 = vld [vmem:[#allocation4 + $0x68] sm:$0xf]
        %v974 = vld [vmem:[#allocation4 + $0x6c] sm:$0xff]
        %v975 = vld [vmem:[#allocation4 + $0x74] sm:$0xf]
        %v976 = vld [vmem:[#allocation4 + $0x78] sm:$0xff]
        %v977 = vld [vmem:[#allocation4 + $0x80] sm:$0xf]
        %v978 = vld [vmem:[#allocation4 + $0x84] sm:$0xff]
        %v979 = vld [vmem:[#allocation4 + $0x8c] sm:$0xf]
        %v980 = vld [vmem:[#allocation4 + $0x90] sm:$0xff]
        %v981 = vld [vmem:[#allocation4 + $0x98] sm:$0xf]
        %v982 = vld [vmem:[#allocation4 + $0x9c] sm:$0xff]
        %v983 = vld [vmem:[#allocation4 + $0xa4] sm:$0xf]
        %v984 = vld [vmem:[#allocation4 + $0xa8] sm:$0xff]
        %v985 = vld [vmem:[#allocation4 + $0xb0] sm:$0xf]
        %v986 = vld [vmem:[#allocation4 + $0xb4] sm:$0xff]
        %v987 = vld [vmem:[#allocation4 + $0xbc] sm:$0xf]
        %v988 = vld [vmem:[#allocation4 + $0xc0] sm:$0xff]
        %v989 = vld [vmem:[#allocation4 + $0xc8] sm:$0xf]
        %v990 = vld [vmem:[#allocation4 + $0xcc] sm:$0xff]
        %v991 = vld [vmem:[#allocation4 + $0xd4] sm:$0xf]
        %v992 = vld [vmem:[%s549] sm:$0xff]
        %v993 = vld [vmem:[%s549 + $0x8] sm:$0xff]
        %995 = vset.pattern.permute.xlu0 0
        %996 = vperm.xlu0 %995, %v992
        %v997 = vpop.permute.xlu0 %996
        %1000 = vset.pattern.permute.xlu0 0
        %1001 = vperm.xlu0 %1000, %v993
        %v1002 = vpop.permute.xlu0 %1001
        %v1006 = vunpack.c.l.b16 %v610
        %v1007 = vunpack.c.h.b16 %v610
        %v1008 = vunpack.c.l.b16 %v611
        %v1009 = vunpack.c.h.b16 %v611
        %v1010 = vpack.c.b16 %v1008, %v1006
        %v1011 = vpack.c.b16 %v1009, %v1007
        %v1049 = vunpack.c.l.b16 %v956
        %v1050 = vunpack.c.h.b16 %v956
        %v1051 = vunpack.c.l.b16 %v957
        %v1052 = vunpack.c.l.b16 %v958
        %v1053 = vunpack.c.h.b16 %v958
        %v1054 = vunpack.c.l.b16 %v959
        %v1055 = vunpack.c.l.b16 %v960
        %v1056 = vunpack.c.h.b16 %v960
        %v1057 = vunpack.c.l.b16 %v961
        %v1058 = vunpack.c.l.b16 %v962
        %v1059 = vunpack.c.h.b16 %v962
        %v1060 = vunpack.c.l.b16 %v963
        %v1061 = vunpack.c.l.b16 %v964
        %v1062 = vunpack.c.h.b16 %v964
        %v1063 = vunpack.c.l.b16 %v965
        %v1064 = vunpack.c.l.b16 %v966
        %v1065 = vunpack.c.h.b16 %v966
        %v1066 = vunpack.c.l.b16 %v967
        %v1067 = vunpack.c.l.b16 %v968
        %v1068 = vunpack.c.h.b16 %v968
        %v1069 = vunpack.c.l.b16 %v969
        %v1070 = vunpack.c.l.b16 %v970
        %v1071 = vunpack.c.h.b16 %v970
        %v1072 = vunpack.c.l.b16 %v971
        %v1073 = vunpack.c.l.b16 %v972
        %v1074 = vunpack.c.h.b16 %v972
        %v1075 = vunpack.c.l.b16 %v973
        %v1076 = vunpack.c.l.b16 %v974
        %v1077 = vunpack.c.h.b16 %v974
        %v1078 = vunpack.c.l.b16 %v975
        %v1079 = vunpack.c.l.b16 %v976
        %v1080 = vunpack.c.h.b16 %v976
        %v1081 = vunpack.c.l.b16 %v977
        %v1082 = vunpack.c.l.b16 %v978
        %v1083 = vunpack.c.h.b16 %v978
        %v1084 = vunpack.c.l.b16 %v979
        %v1085 = vunpack.c.l.b16 %v980
        %v1086 = vunpack.c.h.b16 %v980
        %v1087 = vunpack.c.l.b16 %v981
        %v1088 = vunpack.c.l.b16 %v982
        %v1089 = vunpack.c.h.b16 %v982
        %v1090 = vunpack.c.l.b16 %v983
        %v1091 = vunpack.c.l.b16 %v984
        %v1092 = vunpack.c.h.b16 %v984
        %v1093 = vunpack.c.l.b16 %v985
        %v1094 = vunpack.c.l.b16 %v986
        %v1095 = vunpack.c.h.b16 %v986
        %v1096 = vunpack.c.l.b16 %v987
        %v1097 = vunpack.c.l.b16 %v988
        %v1098 = vunpack.c.h.b16 %v988
        %v1099 = vunpack.c.l.b16 %v989
        %v1100 = vunpack.c.l.b16 %v990
        %v1101 = vunpack.c.h.b16 %v990
        %v1102 = vunpack.c.l.b16 %v991
        %v1103 = vpack.c.b16 %v1052, %v1049
        %v1104 = vpack.c.b16 %v1053, %v1050
        %v1105 = vpack.c.b16 %v1054, %v1051
        %v1106 = vpack.c.b16 %v1058, %v1055
        %v1107 = vpack.c.b16 %v1059, %v1056
        %v1108 = vpack.c.b16 %v1060, %v1057
        %v1109 = vpack.c.b16 %v1064, %v1061
        %v1110 = vpack.c.b16 %v1065, %v1062
        %v1111 = vpack.c.b16 %v1066, %v1063
        %v1112 = vpack.c.b16 %v1070, %v1067
        %v1113 = vpack.c.b16 %v1071, %v1068
        %v1114 = vpack.c.b16 %v1072, %v1069
        %v1115 = vpack.c.b16 %v1076, %v1073
        %v1116 = vpack.c.b16 %v1077, %v1074
        %v1117 = vpack.c.b16 %v1078, %v1075
        %v1118 = vpack.c.b16 %v1082, %v1079
        %v1119 = vpack.c.b16 %v1083, %v1080
        %v1120 = vpack.c.b16 %v1084, %v1081
        %v1121 = vpack.c.b16 %v1088, %v1085
        %v1122 = vpack.c.b16 %v1089, %v1086
        %v1123 = vpack.c.b16 %v1090, %v1087
        %v1124 = vpack.c.b16 %v1094, %v1091
        %v1125 = vpack.c.b16 %v1095, %v1092
        %v1126 = vpack.c.b16 %v1096, %v1093
        %v1127 = vpack.c.b16 %v1100, %v1097
        %v1128 = vpack.c.b16 %v1101, %v1098
        %v1129 = vpack.c.b16 %v1102, %v1099
        %vm1157 = vcmask 130048
        %v1159 = vsel %vm1157, %v1011, 0
        %1161 = vmatpush.bf16.msra.mxu0 %v1124
        %1162 = vmatpush.bf16.msra.mxu0 %v1121
        %1163 = vmatpush.bf16.msra.mxu0 %v1118
        %1164 = vmatpush.bf16.msra.mxu0 %v1115
        %1165 = vmatpush.bf16.msra.mxu0 %v1112
        %1166 = vmatpush.bf16.msra.mxu0 %v1109
        %1167 = vmatpush.bf16.msra.mxu0 %v1106
        %1168 = vmatpush.bf16.msra.mxu0 %v1103
        %1169 = vmatmul.bf16.gmra.mxu0 %v1010
        %v1170 = vpop.f32.mrf.mxu0
        %v1171 = vadd.f32 %v997, %v1170
        %v1172 = vpop.f32.mrf.mxu0
        %v1173 = vadd.f32 %v1002, %v1172
        %1174 = vdwg.mxu0
        %1175 = vmatpush.bf16.msra.mxu0 0
        %1176 = vmatpush.bf16.msra.mxu0 0
        %1177 = vmatpush.bf16.msra.mxu0 0
        %1178 = vmatpush.bf16.msra.mxu0 0
        %1179 = vmatpush.bf16.msra.mxu0 0
        %1180 = vmatpush.bf16.msra.mxu0 0
        %1181 = vmatpush.bf16.msra.mxu0 0
        %1182 = vmatpush.bf16.msra.mxu0 %v1127
        %1183 = vmatmul.bf16.gmra.mxu0 %v1159
        %v1184 = vpop.f32.mrf.mxu0
        %v1185 = vadd.f32 %v1171, %v1184
        %v1186 = vpop.f32.mrf.mxu0
        %v1187 = vadd.f32 %v1173, %v1186
        %1188 = vdwg.mxu0
        %1189 = vmatpush.bf16.msra.mxu0 %v1125
        %1190 = vmatpush.bf16.msra.mxu0 %v1122
        %1191 = vmatpush.bf16.msra.mxu0 %v1119
        %1192 = vmatpush.bf16.msra.mxu0 %v1116
        %1193 = vmatpush.bf16.msra.mxu0 %v1113
        %1194 = vmatpush.bf16.msra.mxu0 %v1110
        %1195 = vmatpush.bf16.msra.mxu0 %v1107
        %1196 = vmatpush.bf16.msra.mxu0 %v1104
        %1197 = vmatmul.bf16.gmra.mxu0 %v1010
        %v1198 = vpop.f32.mrf.mxu0
        %v1199 = vadd.f32 %v997, %v1198
        %v1200 = vpop.f32.mrf.mxu0
        %v1201 = vadd.f32 %v1002, %v1200
        %1202 = vdwg.mxu0
        %1203 = vmatpush.bf16.msra.mxu0 0
        %1204 = vmatpush.bf16.msra.mxu0 0
        %1205 = vmatpush.bf16.msra.mxu0 0
        %1206 = vmatpush.bf16.msra.mxu0 0
        %1207 = vmatpush.bf16.msra.mxu0 0
        %1208 = vmatpush.bf16.msra.mxu0 0
        %1209 = vmatpush.bf16.msra.mxu0 0
        %1210 = vmatpush.bf16.msra.mxu0 %v1128
        %1211 = vmatmul.bf16.gmra.mxu0 %v1159
        %v1212 = vpop.f32.mrf.mxu0
        %v1213 = vadd.f32 %v1199, %v1212
        %v1214 = vpop.f32.mrf.mxu0
        %v1215 = vadd.f32 %v1201, %v1214
        %1216 = vdwg.mxu0
        %1217 = vmatpush.bf16.msra.mxu0 %v1126
        %1218 = vmatpush.bf16.msra.mxu0 %v1123
        %1219 = vmatpush.bf16.msra.mxu0 %v1120
        %1220 = vmatpush.bf16.msra.mxu0 %v1117
        %1221 = vmatpush.bf16.msra.mxu0 %v1114
        %1222 = vmatpush.bf16.msra.mxu0 %v1111
        %1223 = vmatpush.bf16.msra.mxu0 %v1108
        %1224 = vmatpush.bf16.msra.mxu0 %v1105
        %1225 = vmatmul.bf16.gmra.mxu0 %v1010
        %v1226 = vpop.f32.mrf.mxu0
        %v1227 = vadd.f32 %v997, %v1226
        %v1228 = vpop.f32.mrf.mxu0
        %v1229 = vadd.f32 %v1002, %v1228
        %1230 = vdwg.mxu0
        %1231 = vmatpush.bf16.msra.mxu0 0
        %1232 = vmatpush.bf16.msra.mxu0 0
        %1233 = vmatpush.bf16.msra.mxu0 0
        %1234 = vmatpush.bf16.msra.mxu0 0
        %1235 = vmatpush.bf16.msra.mxu0 0
        %1236 = vmatpush.bf16.msra.mxu0 0
        %1237 = vmatpush.bf16.msra.mxu0 0
        %1238 = vmatpush.bf16.msra.mxu0 %v1129
        %1239 = vmatmul.bf16.gmra.mxu0 %v1159
        %v1240 = vpop.f32.mrf.mxu0
        %v1241 = vadd.f32 %v1227, %v1240
        %v1242 = vpop.f32.mrf.mxu0
        %v1243 = vadd.f32 %v1229, %v1242
        %1244 = vdwg.mxu0
        %v1245 = vmax.f32 %v1185, 0.0
        %v1246 = vmax.f32 %v1213, 0.0
        %v1247 = vmax.f32 %v1241, 0.0
        %v1248 = vmax.f32 %v1187, 0.0
        %v1249 = vmax.f32 %v1215, 0.0
        %v1250 = vmax.f32 %v1243, 0.0
        %v1252 = vperm.slane %v579, 0
        %v1253 = vperm.slane %v579, 1
        %v1254 = vperm.slane %v579, 2
        %v1258 = vmul.f32 %v1245, %v1252
        %v1259 = vmul.f32 %v1246, %v1253
        %v1260 = vmul.f32 %v1247, %v1254
        %v1261 = vmul.f32 %v1248, %v1252
        %v1262 = vmul.f32 %v1249, %v1253
        %v1263 = vmul.f32 %v1250, %v1254
        %1264 = vst [vmem:[#allocation3 + $0x8] sm:$0xff] %v1258
        %1265 = vst [vmem:[#allocation3 + $0x10] sm:$0xff] %v1259
        %vm1266 = vcmask 556032
        %1267 = vst.msk [vmem:[#allocation3 + $0x18] sm:$0xff] %vm1266, %v1260
        %1268 = vst [vmem:[#allocation3 + $0x30] sm:$0xff] %v1261
        %1269 = vst [vmem:[#allocation3 + $0x38] sm:$0xff] %v1262
        %1270 = vst.msk [vmem:[#allocation3 + $0x40] sm:$0xff] %vm1266, %v1263
        %v1271 = vld [vmem:[%s554] sm:$0xff]
        %v1272 = vld [vmem:[%s554 + $0x8] sm:$0xff]
        %v1273 = vld [vmem:[#allocation3] sm:$0xff]
        %v1274 = vld [vmem:[#allocation3 + $0x8] sm:$0xff]
        %v1275 = vld [vmem:[#allocation3 + $0x10] sm:$0xff]
        %v1276 = vld [vmem:[#allocation3 + $0x18] sm:$0xff]
        %v1277 = vld [vmem:[#allocation3 + $0x28] sm:$0xff]
        %v1278 = vld [vmem:[#allocation3 + $0x30] sm:$0xff]
        %v1279 = vld [vmem:[#allocation3 + $0x38] sm:$0xff]
        %v1280 = vld [vmem:[#allocation3 + $0x40] sm:$0xff]
        %v1281 = vpack.c.bf16 %v1274, %v1273
        %v1282 = vpack.c.bf16 %v1276, %v1275
        %v1283 = vpack.c.bf16 %v1278, %v1277
        %v1284 = vpack.c.bf16 %v1280, %v1279
        %1289 = vrot.lane.b32.xlu0 %v1281, 19
        %v1290 = vpop.permute.xlu0 %1289
        %1291 = vrot.lane.b32.xlu0 %v1282, 19
        %v1292 = vpop.permute.xlu0 %1291
        %1293 = vrot.lane.b32.xlu0 %v1283, 19
        %v1294 = vpop.permute.xlu0 %1293
        %1295 = vrot.lane.b32.xlu0 %v1284, 19
        %v1296 = vpop.permute.xlu0 %1295
        %v1297 = vrot.slane %v1290, 4
        %v1298 = vrot.slane %v1292, 4
        %v1299 = vrot.slane %v1294, 4
        %v1300 = vrot.slane %v1296, 4
        %v1301 = vsel %vm640, %v1297, %v1298
        %v1302 = vsel %vm642, %v1290, %v1301
        %v1303 = vsel %vm642, %v1292, %v1298
        %v1304 = vsel %vm640, %v1299, %v1300
        %v1305 = vsel %vm642, %v1294, %v1304
        %v1306 = vsel %vm642, %v1296, %v1300
        %1311 = vst [vmem:[#allocation4] sm:$0xff] %v1302
        %1312 = vst.msk [vmem:[#allocation4 + $0x8] sm:$0xf] %vm653, %v1303
        %1313 = vst [vmem:[#allocation4 + $0xc] sm:$0xff] %v1305
        %1314 = vst.msk [vmem:[#allocation4 + $0x14] sm:$0xf] %vm653, %v1306
        %v1315 = vld [vmem:[#allocation3] sm:$0xff]
        %v1316 = vld [vmem:[#allocation3 + $0x8] sm:$0xff]
        %v1317 = vld [vmem:[#allocation3 + $0x10] sm:$0xff]
        %v1318 = vld [vmem:[#allocation3 + $0x18] sm:$0xff]
        %v1319 = vld [vmem:[#allocation3 + $0x28] sm:$0xff]
        %v1320 = vld [vmem:[#allocation3 + $0x30] sm:$0xff]
        %v1321 = vld [vmem:[#allocation3 + $0x38] sm:$0xff]
        %v1322 = vld [vmem:[#allocation3 + $0x40] sm:$0xff]
        %v1323 = vpack.c.bf16 %v1316, %v1315
        %v1324 = vpack.c.bf16 %v1318, %v1317
        %v1325 = vpack.c.bf16 %v1320, %v1319
        %v1326 = vpack.c.bf16 %v1322, %v1321
        %1331 = vrot.lane.b32.xlu0 %v1323, 18
        %v1332 = vpop.permute.xlu0 %1331
        %1333 = vrot.lane.b32.xlu0 %v1324, 18
        %v1334 = vpop.permute.xlu0 %1333
        %1335 = vrot.lane.b32.xlu0 %v1325, 18
        %v1336 = vpop.permute.xlu0 %1335
        %1337 = vrot.lane.b32.xlu0 %v1326, 18
        %v1338 = vpop.permute.xlu0 %1337
        %v1339 = vrot.slane %v1332, 4
        %v1340 = vrot.slane %v1334, 4
        %v1341 = vrot.slane %v1336, 4
        %v1342 = vrot.slane %v1338, 4
        %v1343 = vsel %vm640, %v1339, %v1340
        %v1344 = vsel %vm686, %v1332, %v1343
        %v1345 = vsel %vm686, %v1334, %v1340
        %v1346 = vsel %vm640, %v1341, %v1342
        %v1347 = vsel %vm686, %v1336, %v1346
        %v1348 = vsel %vm686, %v1338, %v1342
        %1353 = vst [vmem:[#allocation4 + $0x18] sm:$0xff] %v1344
        %1354 = vst.msk [vmem:[#allocation4 + $0x20] sm:$0xf] %vm653, %v1345
        %1355 = vst [vmem:[#allocation4 + $0x24] sm:$0xff] %v1347
        %1356 = vst.msk [vmem:[#allocation4 + $0x2c] sm:$0xf] %vm653, %v1348
        %v1357 = vld [vmem:[#allocation3] sm:$0xff]
        %v1358 = vld [vmem:[#allocation3 + $0x8] sm:$0xff]
        %v1359 = vld [vmem:[#allocation3 + $0x10] sm:$0xff]
        %v1360 = vld [vmem:[#allocation3 + $0x18] sm:$0xff]
        %v1361 = vld [vmem:[#allocation3 + $0x28] sm:$0xff]
        %v1362 = vld [vmem:[#allocation3 + $0x30] sm:$0xff]
        %v1363 = vld [vmem:[#allocation3 + $0x38] sm:$0xff]
        %v1364 = vld [vmem:[#allocation3 + $0x40] sm:$0xff]
        %v1365 = vpack.c.bf16 %v1358, %v1357
        %v1366 = vpack.c.bf16 %v1360, %v1359
        %v1367 = vpack.c.bf16 %v1362, %v1361
        %v1368 = vpack.c.bf16 %v1364, %v1363
        %1373 = vrot.lane.b32.xlu0 %v1365, 17
        %v1374 = vpop.permute.xlu0 %1373
        %1375 = vrot.lane.b32.xlu0 %v1366, 17
        %v1376 = vpop.permute.xlu0 %1375
        %1377 = vrot.lane.b32.xlu0 %v1367, 17
        %v1378 = vpop.permute.xlu0 %1377
        %1379 = vrot.lane.b32.xlu0 %v1368, 17
        %v1380 = vpop.permute.xlu0 %1379
        %v1381 = vrot.slane %v1374, 4
        %v1382 = vrot.slane %v1376, 4
        %v1383 = vrot.slane %v1378, 4
        %v1384 = vrot.slane %v1380, 4
        %v1385 = vsel %vm640, %v1381, %v1382
        %v1386 = vsel %vm729, %v1374, %v1385
        %v1387 = vsel %vm729, %v1376, %v1382
        %v1388 = vsel %vm640, %v1383, %v1384
        %v1389 = vsel %vm729, %v1378, %v1388
        %v1390 = vsel %vm729, %v1380, %v1384
        %1395 = vst [vmem:[#allocation4 + $0x30] sm:$0xff] %v1386
        %1396 = vst.msk [vmem:[#allocation4 + $0x38] sm:$0xf] %vm653, %v1387
        %1397 = vst [vmem:[#allocation4 + $0x3c] sm:$0xff] %v1389
        %1398 = vst.msk [vmem:[#allocation4 + $0x44] sm:$0xf] %vm653, %v1390
        %v1399 = vld [vmem:[#allocation3] sm:$0xff]
        %v1400 = vld [vmem:[#allocation3 + $0x8] sm:$0xff]
        %v1401 = vld [vmem:[#allocation3 + $0x10] sm:$0xff]
        %v1402 = vld [vmem:[#allocation3 + $0x18] sm:$0xff]
        %v1403 = vld [vmem:[#allocation3 + $0x28] sm:$0xff]
        %v1404 = vld [vmem:[#allocation3 + $0x30] sm:$0xff]
        %v1405 = vld [vmem:[#allocation3 + $0x38] sm:$0xff]
        %v1406 = vld [vmem:[#allocation3 + $0x40] sm:$0xff]
        %v1407 = vpack.c.bf16 %v1400, %v1399
        %v1408 = vpack.c.bf16 %v1402, %v1401
        %v1409 = vpack.c.bf16 %v1404, %v1403
        %v1410 = vpack.c.bf16 %v1406, %v1405
        %1415 = vrot.lane.b32.xlu0 %v1407, 1
        %v1416 = vpop.permute.xlu0 %1415
        %1417 = vrot.lane.b32.xlu0 %v1408, 1
        %v1418 = vpop.permute.xlu0 %1417
        %1419 = vrot.lane.b32.xlu0 %v1409, 1
        %v1420 = vpop.permute.xlu0 %1419
        %1421 = vrot.lane.b32.xlu0 %v1410, 1
        %v1422 = vpop.permute.xlu0 %1421
        %v1423 = vrot.slane %v1416, 4
        %v1424 = vrot.slane %v1418, 4
        %v1425 = vrot.slane %v1420, 4
        %v1426 = vrot.slane %v1422, 4
        %v1427 = vsel %vm640, %v1423, %v1424
        %v1428 = vsel %vm772, %v1416, %v1427
        %v1429 = vsel %vm772, %v1418, %v1424
        %v1430 = vsel %vm640, %v1425, %v1426
        %v1431 = vsel %vm772, %v1420, %v1430
        %v1432 = vsel %vm772, %v1422, %v1426
        %1437 = vst [vmem:[#allocation4 + $0x48] sm:$0xff] %v1428
        %1438 = vst.msk [vmem:[#allocation4 + $0x50] sm:$0xf] %vm653, %v1429
        %1439 = vst [vmem:[#allocation4 + $0x54] sm:$0xff] %v1431
        %1440 = vst.msk [vmem:[#allocation4 + $0x5c] sm:$0xf] %vm653, %v1432
        %v1441 = vld [vmem:[#allocation3 + $0x8] sm:$0xff]
        %v1442 = vld [vmem:[#allocation3 + $0x10] sm:$0xff]
        %v1443 = vld [vmem:[#allocation3 + $0x18] sm:$0xff]
        %v1444 = vld [vmem:[#allocation3 + $0x30] sm:$0xff]
        %v1445 = vld [vmem:[#allocation3 + $0x38] sm:$0xff]
        %v1446 = vld [vmem:[#allocation3 + $0x40] sm:$0xff]
        %v1447 = vpack.c.bf16 %v1442, %v1441
        %v1448 = vpack.c.bf16 %v1443, %v1443
        %v1449 = vpack.c.bf16 %v1445, %v1444
        %v1450 = vpack.c.bf16 %v1446, %v1446
        %1451 = vst [vmem:[#allocation4 + $0x60] sm:$0xff] %v1447
        %1452 = vst.msk [vmem:[#allocation4 + $0x68] sm:$0xf] %vm653, %v1448
        %1453 = vst [vmem:[#allocation4 + $0x6c] sm:$0xff] %v1449
        %1454 = vst.msk [vmem:[#allocation4 + $0x74] sm:$0xf] %vm653, %v1450
        %v1455 = vld [vmem:[#allocation3 + $0x8] sm:$0xff]
        %v1456 = vld [vmem:[#allocation3 + $0x10] sm:$0xff]
        %v1457 = vld [vmem:[#allocation3 + $0x18] sm:$0xff]
        %v1458 = vld [vmem:[#allocation3 + $0x30] sm:$0xff]
        %v1459 = vld [vmem:[#allocation3 + $0x38] sm:$0xff]
        %v1460 = vld [vmem:[#allocation3 + $0x40] sm:$0xff]
        %v1461 = vpack.c.bf16 %v1456, %v1455
        %v1462 = vpack.c.bf16 %v1457, %v1457
        %v1463 = vpack.c.bf16 %v1459, %v1458
        %v1464 = vpack.c.bf16 %v1460, %v1460
        %1469 = vrot.lane.b32.xlu0 %v1461, 127
        %v1470 = vpop.permute.xlu0 %1469
        %1471 = vrot.lane.b32.xlu0 %v1462, 127
        %v1472 = vpop.permute.xlu0 %1471
        %1473 = vrot.lane.b32.xlu0 %v1463, 127
        %v1474 = vpop.permute.xlu0 %1473
        %1475 = vrot.lane.b32.xlu0 %v1464, 127
        %v1476 = vpop.permute.xlu0 %1475
        %v1477 = vrot.slane %v1470, 4
        %v1478 = vrot.slane %v1472, 4
        %v1479 = vrot.slane %v1474, 4
        %v1480 = vrot.slane %v1476, 4
        %v1481 = vsel %vm640, %v1477, %v1478
        %v1482 = vsel %vm827, %v1470, %v1481
        %v1483 = vsel %vm640, %v1479, %v1480
        %v1484 = vsel %vm827, %v1474, %v1483
        %1489 = vst [vmem:[#allocation4 + $0x78] sm:$0xff] %v1482
        %1490 = vst.msk [vmem:[#allocation4 + $0x80] sm:$0xf] %vm653, %v1472
        %1491 = vst [vmem:[#allocation4 + $0x84] sm:$0xff] %v1484
        %1492 = vst.msk [vmem:[#allocation4 + $0x8c] sm:$0xf] %vm653, %v1476
        %v1493 = vld [vmem:[#allocation3 + $0x8] sm:$0xff]
        %v1494 = vld [vmem:[#allocation3 + $0x10] sm:$0xff]
        %v1495 = vld [vmem:[#allocation3 + $0x18] sm:$0xff]
        %v1496 = vld [vmem:[#allocation3 + $0x30] sm:$0xff]
        %v1497 = vld [vmem:[#allocation3 + $0x38] sm:$0xff]
        %v1498 = vld [vmem:[#allocation3 + $0x40] sm:$0xff]
        %v1499 = vpack.c.bf16 %v1494, %v1493
        %v1500 = vpack.c.bf16 %v1495, %v1495
        %v1501 = vpack.c.bf16 %v1497, %v1496
        %v1502 = vpack.c.bf16 %v1498, %v1498
        %1507 = vrot.lane.b32.xlu0 %v1499, 111
        %v1508 = vpop.permute.xlu0 %1507
        %1509 = vrot.lane.b32.xlu0 %v1500, 111
        %v1510 = vpop.permute.xlu0 %1509
        %1511 = vrot.lane.b32.xlu0 %v1501, 111
        %v1512 = vpop.permute.xlu0 %1511
        %1513 = vrot.lane.b32.xlu0 %v1502, 111
        %v1514 = vpop.permute.xlu0 %1513
        %v1515 = vrot.slane %v1508, 4
        %v1516 = vrot.slane %v1510, 4
        %v1517 = vrot.slane %v1512, 4
        %v1518 = vrot.slane %v1514, 4
        %v1519 = vsel %vm640, %v1515, %v1516
        %v1520 = vsel %vm866, %v1508, %v1519
        %v1521 = vsel %vm640, %v1517, %v1518
        %v1522 = vsel %vm866, %v1512, %v1521
        %1527 = vst [vmem:[#allocation4 + $0x90] sm:$0xff] %v1520
        %1528 = vst.msk [vmem:[#allocation4 + $0x98] sm:$0xf] %vm653, %v1510
        %1529 = vst [vmem:[#allocation4 + $0x9c] sm:$0xff] %v1522
        %1530 = vst.msk [vmem:[#allocation4 + $0xa4] sm:$0xf] %vm653, %v1514
        %v1531 = vld [vmem:[#allocation3 + $0x8] sm:$0xff]
        %v1532 = vld [vmem:[#allocation3 + $0x10] sm:$0xff]
        %v1533 = vld [vmem:[#allocation3 + $0x18] sm:$0xff]
        %v1534 = vld [vmem:[#allocation3 + $0x30] sm:$0xff]
        %v1535 = vld [vmem:[#allocation3 + $0x38] sm:$0xff]
        %v1536 = vld [vmem:[#allocation3 + $0x40] sm:$0xff]
        %v1537 = vpack.c.bf16 %v1532, %v1531
        %v1538 = vpack.c.bf16 %v1533, %v1533
        %v1539 = vpack.c.bf16 %v1535, %v1534
        %v1540 = vpack.c.bf16 %v1536, %v1536
        %1545 = vrot.lane.b32.xlu0 %v1537, 110
        %v1546 = vpop.permute.xlu0 %1545
        %1547 = vrot.lane.b32.xlu0 %v1538, 110
        %v1548 = vpop.permute.xlu0 %1547
        %1549 = vrot.lane.b32.xlu0 %v1539, 110
        %v1550 = vpop.permute.xlu0 %1549
        %1551 = vrot.lane.b32.xlu0 %v1540, 110
        %v1552 = vpop.permute.xlu0 %1551
        %v1553 = vrot.slane %v1546, 4
        %v1554 = vrot.slane %v1548, 4
        %v1555 = vrot.slane %v1550, 4
        %v1556 = vrot.slane %v1552, 4
        %v1557 = vsel %vm640, %v1553, %v1554
        %v1558 = vsel %vm905, %v1546, %v1557
        %v1559 = vsel %vm640, %v1555, %v1556
        %v1560 = vsel %vm905, %v1550, %v1559
        %1565 = vst [vmem:[#allocation4 + $0xa8] sm:$0xff] %v1558
        %1566 = vst.msk [vmem:[#allocation4 + $0xb0] sm:$0xf] %vm653, %v1548
        %1567 = vst [vmem:[#allocation4 + $0xb4] sm:$0xff] %v1560
        %1568 = vst.msk [vmem:[#allocation4 + $0xbc] sm:$0xf] %vm653, %v1552
        %v1569 = vld [vmem:[#allocation3 + $0x8] sm:$0xff]
        %v1570 = vld [vmem:[#allocation3 + $0x10] sm:$0xff]
        %v1571 = vld [vmem:[#allocation3 + $0x18] sm:$0xff]
        %v1572 = vld [vmem:[#allocation3 + $0x30] sm:$0xff]
        %v1573 = vld [vmem:[#allocation3 + $0x38] sm:$0xff]
        %v1574 = vld [vmem:[#allocation3 + $0x40] sm:$0xff]
        %v1575 = vpack.c.bf16 %v1570, %v1569
        %v1576 = vpack.c.bf16 %v1571, %v1571
        %v1577 = vpack.c.bf16 %v1573, %v1572
        %v1578 = vpack.c.bf16 %v1574, %v1574
        %1583 = vrot.lane.b32.xlu0 %v1575, 109
        %v1584 = vpop.permute.xlu0 %1583
        %1585 = vrot.lane.b32.xlu0 %v1576, 109
        %v1586 = vpop.permute.xlu0 %1585
        %1587 = vrot.lane.b32.xlu0 %v1577, 109
        %v1588 = vpop.permute.xlu0 %1587
        %1589 = vrot.lane.b32.xlu0 %v1578, 109
        %v1590 = vpop.permute.xlu0 %1589
        %v1591 = vrot.slane %v1584, 4
        %v1592 = vrot.slane %v1586, 4
        %v1593 = vrot.slane %v1588, 4
        %v1594 = vrot.slane %v1590, 4
        %v1595 = vsel %vm640, %v1591, %v1592
        %v1596 = vsel %vm944, %v1584, %v1595
        %v1597 = vsel %vm640, %v1593, %v1594
        %v1598 = vsel %vm944, %v1588, %v1597
        %1603 = vst [vmem:[#allocation4 + $0xc0] sm:$0xff] %v1596
        %1604 = vst.msk [vmem:[#allocation4 + $0xc8] sm:$0xf] %vm653, %v1586
        %1605 = vst [vmem:[#allocation4 + $0xcc] sm:$0xff] %v1598
        %1606 = vst.msk [vmem:[#allocation4 + $0xd4] sm:$0xf] %vm653, %v1590
        %v1607 = vld [vmem:[#allocation4] sm:$0xff]
        %v1608 = vld [vmem:[#allocation4 + $0x8] sm:$0xf]
        %v1609 = vld [vmem:[#allocation4 + $0xc] sm:$0xff]
        %v1610 = vld [vmem:[#allocation4 + $0x14] sm:$0xf]
        %v1611 = vld [vmem:[#allocation4 + $0x18] sm:$0xff]
        %v1612 = vld [vmem:[#allocation4 + $0x20] sm:$0xf]
        %v1613 = vld [vmem:[#allocation4 + $0x24] sm:$0xff]
        %v1614 = vld [vmem:[#allocation4 + $0x2c] sm:$0xf]
        %v1615 = vld [vmem:[#allocation4 + $0x30] sm:$0xff]
        %v1616 = vld [vmem:[#allocation4 + $0x38] sm:$0xf]
        %v1617 = vld [vmem:[#allocation4 + $0x3c] sm:$0xff]
        %v1618 = vld [vmem:[#allocation4 + $0x44] sm:$0xf]
        %v1619 = vld [vmem:[#allocation4 + $0x48] sm:$0xff]
        %v1620 = vld [vmem:[#allocation4 + $0x50] sm:$0xf]
        %v1621 = vld [vmem:[#allocation4 + $0x54] sm:$0xff]
        %v1622 = vld [vmem:[#allocation4 + $0x5c] sm:$0xf]
        %v1623 = vld [vmem:[#allocation4 + $0x60] sm:$0xff]
        %v1624 = vld [vmem:[#allocation4 + $0x68] sm:$0xf]
        %v1625 = vld [vmem:[#allocation4 + $0x6c] sm:$0xff]
        %v1626 = vld [vmem:[#allocation4 + $0x74] sm:$0xf]
        %v1627 = vld [vmem:[#allocation4 + $0x78] sm:$0xff]
        %v1628 = vld [vmem:[#allocation4 + $0x80] sm:$0xf]
        %v1629 = vld [vmem:[#allocation4 + $0x84] sm:$0xff]
        %v1630 = vld [vmem:[#allocation4 + $0x8c] sm:$0xf]
        %v1631 = vld [vmem:[#allocation4 + $0x90] sm:$0xff]
        %v1632 = vld [vmem:[#allocation4 + $0x98] sm:$0xf]
        %v1633 = vld [vmem:[#allocation4 + $0x9c] sm:$0xff]
        %v1634 = vld [vmem:[#allocation4 + $0xa4] sm:$0xf]
        %v1635 = vld [vmem:[#allocation4 + $0xa8] sm:$0xff]
        %v1636 = vld [vmem:[#allocation4 + $0xb0] sm:$0xf]
        %v1637 = vld [vmem:[#allocation4 + $0xb4] sm:$0xff]
        %v1638 = vld [vmem:[#allocation4 + $0xbc] sm:$0xf]
        %v1639 = vld [vmem:[#allocation4 + $0xc0] sm:$0xff]
        %v1640 = vld [vmem:[#allocation4 + $0xc8] sm:$0xf]
        %v1641 = vld [vmem:[#allocation4 + $0xcc] sm:$0xff]
        %v1642 = vld [vmem:[#allocation4 + $0xd4] sm:$0xf]
        %v1643 = vld [vmem:[%s559] sm:$0xff]
        %v1644 = vld [vmem:[%s559 + $0x8] sm:$0xff]
        %1646 = vset.pattern.permute.xlu0 0
        %1647 = vperm.xlu0 %1646, %v1643
        %v1648 = vpop.permute.xlu0 %1647
        %1651 = vset.pattern.permute.xlu0 0
        %1652 = vperm.xlu0 %1651, %v1644
        %v1653 = vpop.permute.xlu0 %1652
        %v1657 = vunpack.c.l.b16 %v1271
        %v1658 = vunpack.c.h.b16 %v1271
        %v1659 = vunpack.c.l.b16 %v1272
        %v1660 = vunpack.c.h.b16 %v1272
        %v1661 = vpack.c.b16 %v1659, %v1657
        %v1662 = vpack.c.b16 %v1660, %v1658
        %v1700 = vunpack.c.l.b16 %v1607
        %v1701 = vunpack.c.h.b16 %v1607
        %v1702 = vunpack.c.l.b16 %v1608
        %v1703 = vunpack.c.l.b16 %v1609
        %v1704 = vunpack.c.h.b16 %v1609
        %v1705 = vunpack.c.l.b16 %v1610
        %v1706 = vunpack.c.l.b16 %v1611
        %v1707 = vunpack.c.h.b16 %v1611
        %v1708 = vunpack.c.l.b16 %v1612
        %v1709 = vunpack.c.l.b16 %v1613
        %v1710 = vunpack.c.h.b16 %v1613
        %v1711 = vunpack.c.l.b16 %v1614
        %v1712 = vunpack.c.l.b16 %v1615
        %v1713 = vunpack.c.h.b16 %v1615
        %v1714 = vunpack.c.l.b16 %v1616
        %v1715 = vunpack.c.l.b16 %v1617
        %v1716 = vunpack.c.h.b16 %v1617
        %v1717 = vunpack.c.l.b16 %v1618
        %v1718 = vunpack.c.l.b16 %v1619
        %v1719 = vunpack.c.h.b16 %v1619
        %v1720 = vunpack.c.l.b16 %v1620
        %v1721 = vunpack.c.l.b16 %v1621
        %v1722 = vunpack.c.h.b16 %v1621
        %v1723 = vunpack.c.l.b16 %v1622
        %v1724 = vunpack.c.l.b16 %v1623
        %v1725 = vunpack.c.h.b16 %v1623
        %v1726 = vunpack.c.l.b16 %v1624
        %v1727 = vunpack.c.l.b16 %v1625
        %v1728 = vunpack.c.h.b16 %v1625
        %v1729 = vunpack.c.l.b16 %v1626
        %v1730 = vunpack.c.l.b16 %v1627
        %v1731 = vunpack.c.h.b16 %v1627
        %v1732 = vunpack.c.l.b16 %v1628
        %v1733 = vunpack.c.l.b16 %v1629
        %v1734 = vunpack.c.h.b16 %v1629
        %v1735 = vunpack.c.l.b16 %v1630
        %v1736 = vunpack.c.l.b16 %v1631
        %v1737 = vunpack.c.h.b16 %v1631
        %v1738 = vunpack.c.l.b16 %v1632
        %v1739 = vunpack.c.l.b16 %v1633
        %v1740 = vunpack.c.h.b16 %v1633
        %v1741 = vunpack.c.l.b16 %v1634
        %v1742 = vunpack.c.l.b16 %v1635
        %v1743 = vunpack.c.h.b16 %v1635
        %v1744 = vunpack.c.l.b16 %v1636
        %v1745 = vunpack.c.l.b16 %v1637
        %v1746 = vunpack.c.h.b16 %v1637
        %v1747 = vunpack.c.l.b16 %v1638
        %v1748 = vunpack.c.l.b16 %v1639
        %v1749 = vunpack.c.h.b16 %v1639
        %v1750 = vunpack.c.l.b16 %v1640
        %v1751 = vunpack.c.l.b16 %v1641
        %v1752 = vunpack.c.h.b16 %v1641
        %v1753 = vunpack.c.l.b16 %v1642
        %v1754 = vpack.c.b16 %v1703, %v1700
        %v1755 = vpack.c.b16 %v1704, %v1701
        %v1756 = vpack.c.b16 %v1705, %v1702
        %v1757 = vpack.c.b16 %v1709, %v1706
        %v1758 = vpack.c.b16 %v1710, %v1707
        %v1759 = vpack.c.b16 %v1711, %v1708
        %v1760 = vpack.c.b16 %v1715, %v1712
        %v1761 = vpack.c.b16 %v1716, %v1713
        %v1762 = vpack.c.b16 %v1717, %v1714
        %v1763 = vpack.c.b16 %v1721, %v1718
        %v1764 = vpack.c.b16 %v1722, %v1719
        %v1765 = vpack.c.b16 %v1723, %v1720
        %v1766 = vpack.c.b16 %v1727, %v1724
        %v1767 = vpack.c.b16 %v1728, %v1725
        %v1768 = vpack.c.b16 %v1729, %v1726
        %v1769 = vpack.c.b16 %v1733, %v1730
        %v1770 = vpack.c.b16 %v1734, %v1731
        %v1771 = vpack.c.b16 %v1735, %v1732
        %v1772 = vpack.c.b16 %v1739, %v1736
        %v1773 = vpack.c.b16 %v1740, %v1737
        %v1774 = vpack.c.b16 %v1741, %v1738
        %v1775 = vpack.c.b16 %v1745, %v1742
        %v1776 = vpack.c.b16 %v1746, %v1743
        %v1777 = vpack.c.b16 %v1747, %v1744
        %v1778 = vpack.c.b16 %v1751, %v1748
        %v1779 = vpack.c.b16 %v1752, %v1749
        %v1780 = vpack.c.b16 %v1753, %v1750
        %v1809 = vsel %vm1157, %v1662, 0
        %1811 = vmatpush.bf16.msra.mxu0 %v1775
        %1812 = vmatpush.bf16.msra.mxu0 %v1772
        %1813 = vmatpush.bf16.msra.mxu0 %v1769
        %1814 = vmatpush.bf16.msra.mxu0 %v1766
        %1815 = vmatpush.bf16.msra.mxu0 %v1763
        %1816 = vmatpush.bf16.msra.mxu0 %v1760
        %1817 = vmatpush.bf16.msra.mxu0 %v1757
        %1818 = vmatpush.bf16.msra.mxu0 %v1754
        %1819 = vmatmul.bf16.gmra.mxu0 %v1661
        %v1820 = vpop.f32.mrf.mxu0
        %v1821 = vadd.f32 %v1648, %v1820
        %v1822 = vpop.f32.mrf.mxu0
        %v1823 = vadd.f32 %v1653, %v1822
        %1824 = vdwg.mxu0
        %1825 = vmatpush.bf16.msra.mxu0 0
        %1826 = vmatpush.bf16.msra.mxu0 0
        %1827 = vmatpush.bf16.msra.mxu0 0
        %1828 = vmatpush.bf16.msra.mxu0 0
        %1829 = vmatpush.bf16.msra.mxu0 0
        %1830 = vmatpush.bf16.msra.mxu0 0
        %1831 = vmatpush.bf16.msra.mxu0 0
        %1832 = vmatpush.bf16.msra.mxu0 %v1778
        %1833 = vmatmul.bf16.gmra.mxu0 %v1809
        %v1834 = vpop.f32.mrf.mxu0
        %v1835 = vadd.f32 %v1821, %v1834
        %v1836 = vpop.f32.mrf.mxu0
        %v1837 = vadd.f32 %v1823, %v1836
        %1838 = vdwg.mxu0
        %1839 = vmatpush.bf16.msra.mxu0 %v1776
        %1840 = vmatpush.bf16.msra.mxu0 %v1773
        %1841 = vmatpush.bf16.msra.mxu0 %v1770
        %1842 = vmatpush.bf16.msra.mxu0 %v1767
        %1843 = vmatpush.bf16.msra.mxu0 %v1764
        %1844 = vmatpush.bf16.msra.mxu0 %v1761
        %1845 = vmatpush.bf16.msra.mxu0 %v1758
        %1846 = vmatpush.bf16.msra.mxu0 %v1755
        %1847 = vmatmul.bf16.gmra.mxu0 %v1661
        %v1848 = vpop.f32.mrf.mxu0
        %v1849 = vadd.f32 %v1648, %v1848
        %v1850 = vpop.f32.mrf.mxu0
        %v1851 = vadd.f32 %v1653, %v1850
        %1852 = vdwg.mxu0
        %1853 = vmatpush.bf16.msra.mxu0 0
        %1854 = vmatpush.bf16.msra.mxu0 0
        %1855 = vmatpush.bf16.msra.mxu0 0
        %1856 = vmatpush.bf16.msra.mxu0 0
        %1857 = vmatpush.bf16.msra.mxu0 0
        %1858 = vmatpush.bf16.msra.mxu0 0
        %1859 = vmatpush.bf16.msra.mxu0 0
        %1860 = vmatpush.bf16.msra.mxu0 %v1779
        %1861 = vmatmul.bf16.gmra.mxu0 %v1809
        %v1862 = vpop.f32.mrf.mxu0
        %v1863 = vadd.f32 %v1849, %v1862
        %v1864 = vpop.f32.mrf.mxu0
        %v1865 = vadd.f32 %v1851, %v1864
        %1866 = vdwg.mxu0
        %1867 = vmatpush.bf16.msra.mxu0 %v1777
        %1868 = vmatpush.bf16.msra.mxu0 %v1774
        %1869 = vmatpush.bf16.msra.mxu0 %v1771
        %1870 = vmatpush.bf16.msra.mxu0 %v1768
        %1871 = vmatpush.bf16.msra.mxu0 %v1765
        %1872 = vmatpush.bf16.msra.mxu0 %v1762
        %1873 = vmatpush.bf16.msra.mxu0 %v1759
        %1874 = vmatpush.bf16.msra.mxu0 %v1756
        %1875 = vmatmul.bf16.gmra.mxu0 %v1661
        %v1876 = vpop.f32.mrf.mxu0
        %v1877 = vadd.f32 %v1648, %v1876
        %v1878 = vpop.f32.mrf.mxu0
        %v1879 = vadd.f32 %v1653, %v1878
        %1880 = vdwg.mxu0
        %1881 = vmatpush.bf16.msra.mxu0 0
        %1882 = vmatpush.bf16.msra.mxu0 0
        %1883 = vmatpush.bf16.msra.mxu0 0
        %1884 = vmatpush.bf16.msra.mxu0 0
        %1885 = vmatpush.bf16.msra.mxu0 0
        %1886 = vmatpush.bf16.msra.mxu0 0
        %1887 = vmatpush.bf16.msra.mxu0 0
        %1888 = vmatpush.bf16.msra.mxu0 %v1780
        %1889 = vmatmul.bf16.gmra.mxu0 %v1809
        %v1890 = vpop.f32.mrf.mxu0
        %v1891 = vadd.f32 %v1877, %v1890
        %v1892 = vpop.f32.mrf.mxu0
        %v1893 = vadd.f32 %v1879, %v1892
        %1894 = vdwg.mxu0
        %v1895 = vmul.f32 %v1835, %v1252
        %v1896 = vmul.f32 %v1863, %v1253
        %v1897 = vmul.f32 %v1891, %v1254
        %v1898 = vmul.f32 %v1837, %v1252
        %v1899 = vmul.f32 %v1865, %v1253
        %v1900 = vmul.f32 %v1893, %v1254
        %v1901 = vadd.f32 %v1895, %v1896
        %v1902 = vsel %vm1266, %v1897, 0.0
        %v1903 = vadd.f32 %v1901, %v1902
        %1904 = vadd.xlane.f32.xlu0 %v1903
        %v1905 = vpop.xlane.xlu0 %1904
        %v1906 = vadd.f32 %v1898, %v1899
        %v1907 = vsel %vm1266, %v1900, 0.0
        %v1908 = vadd.f32 %v1906, %v1907
        %1909 = vadd.xlane.f32.xlu0 %v1908
        %v1910 = vpop.xlane.xlu0 %1909
        %v1911 = vmul.f32 %v1905, 0.00390625
        %v1912 = vmul.f32 %v1910, 0.00390625
        %v1913 = vld [vmem:[%s564] sm:$0xff]
        %v1914 = vld [vmem:[%s564 + $0x8] sm:$0xff]
        %v1915 = vmul.f32 %v1913, %v1911
        %v1916 = vmul.f32 %v1914, %v1912
        %vm1917 = vcmask 31744
        %v1918 = vsel %vm1917, %v1915, 0.0
        %v1919 = vsel %vm1917, %v1916, 0.0
        %v1920 = vadd.f32 %v1918, %v1919
        %v1921 = vrot.slane %v1920, 4
        %v1922 = vadd.f32 %v1920, %v1921
        %v1923 = vrot.slane %v1922, 2
        %v1924 = vadd.f32 %v1922, %v1923
        %v1925 = vrot.slane %v1924, 1
        %v1926 = vadd.f32 %v1924, %v1925
        %v1927 = vld [vmem:[%s567] sm:$0x1]
        %v1928 = vadd.f32 %v1926, %v1927
        %v1929 = vmax.f32 %v1928, 0.0
        %v1930 = vld [vmem:[%s572] sm:$0xff]
        %v1931 = vld [vmem:[%s572 + $0x8] sm:$0xff]
        %v1932 = vperm.slane %v1929, 0
        %v1933 = vmul.f32 %v1930, %v1932
        %v1934 = vmul.f32 %v1931, %v1932
        %v1935 = vsel %vm1917, %v1933, 0.0
        %1936 = vadd.xlane.f32.xlu0 %v1935
        %v1937 = vpop.xlane.xlu0 %1936
        %v1938 = vsel %vm1917, %v1934, 0.0
        %1939 = vadd.xlane.f32.xlu0 %v1938
        %v1940 = vpop.xlane.xlu0 %1939
        %v1941 = vld [vmem:[%s577] sm:$0xff]
        %v1942 = vld [vmem:[%s577 + $0x8] sm:$0xff]
        %v1943 = vadd.f32 %v1937, %v1941
        %v1944 = vadd.f32 %v1940, %v1942
        %v1945 = vxor.u32 %v1943, 2147483648
        %v1946 = vxor.u32 %v1944, 2147483648
        %v1947 = vmul.f32 %v1945, 1.442695
        %v1948 = vpow.pop %v1947
        %v1949 = vmul.f32 %v1946, 1.442695
        %v1950 = vpow.pop %v1949
        %v1951 = vadd.f32 %v1948, 1.0
        %v1952 = vadd.f32 %v1950, 1.0
        %v1953 = vrcp.pop %v1951
        %v1954 = vmul.f32 %v1951, %v1953
        %v1955 = vsub.f32 1.0, %v1954
        %v1956 = vmul.f32 %v1953, %v1955
        %v1957 = vadd.f32 %v1953, %v1956
        %vm1958 = vweird.f32 %v1951
        %vm1959 = vweird.f32 %v1953
        %vm1960 = vmor %vm1958, %vm1959
        %v1961 = vsel %vm1960, %v1953, %v1957
        %v1962 = vand.u32 2147483647, %v1951
        %vm1963 = vcmp.eq.f32.partialorder %v1962, 8.507059e+37
        %v1964 = vand.u32 %v1951, 2147483648
        %v1965 = vor.u32 1.1754944e-38, %v1964
        %v1966 = vsel %vm1963, %v1965, %v1961
        %v1967 = vmul.f32 1.0, %v1966
        %v1968 = vrcp.pop %v1952
        %v1969 = vmul.f32 %v1952, %v1968
        %v1970 = vsub.f32 1.0, %v1969
        %v1971 = vmul.f32 %v1968, %v1970
        %v1972 = vadd.f32 %v1968, %v1971
        %vm1973 = vweird.f32 %v1952
        %vm1974 = vweird.f32 %v1968
        %vm1975 = vmor %vm1973, %vm1974
        %v1976 = vsel %vm1975, %v1968, %v1972
        %v1977 = vand.u32 2147483647, %v1952
        %vm1978 = vcmp.eq.f32.partialorder %v1977, 8.507059e+37
        %v1979 = vand.u32 %v1952, 2147483648
        %v1980 = vor.u32 1.1754944e-38, %v1979
        %v1981 = vsel %vm1978, %v1980, %v1976
        %v1982 = vmul.f32 1.0, %v1981
        %1984 = vset.pattern.permute.xlu0 0
        %1985 = vperm.xlu0 %1984, %v1967
        %v1986 = vpop.permute.xlu0 %1985
        %1989 = vset.pattern.permute.xlu0 0
        %1990 = vperm.xlu0 %1989, %v1982
        %v1991 = vpop.permute.xlu0 %1990
        %v1993 = vmul.f32 %v1895, %v1986
        %v1994 = vmul.f32 %v1896, %v1986
        %v1995 = vmul.f32 %v1897, %v1986
        %v1996 = vmul.f32 %v1898, %v1991
        %v1997 = vmul.f32 %v1899, %v1991
        %v1998 = vmul.f32 %v1900, %v1991
        %v1999 = vld [vmem:[#allocation2 + $0x8] sm:$0xff]
        %v2000 = vld [vmem:[#allocation2 + $0x10] sm:$0xff]
        %v2001 = vld [vmem:[#allocation2 + $0x18] sm:$0xff]
        %v2002 = vld [vmem:[#allocation2 + $0x30] sm:$0xff]
        %v2003 = vld [vmem:[#allocation2 + $0x38] sm:$0xff]
        %v2004 = vld [vmem:[#allocation2 + $0x40] sm:$0xff]
        %v2005 = vadd.f32 %v1993, %v1999
        %v2006 = vadd.f32 %v1994, %v2000
        %v2007 = vadd.f32 %v1995, %v2001
        %v2008 = vadd.f32 %v1996, %v2002
        %v2009 = vadd.f32 %v1997, %v2003
        %v2010 = vadd.f32 %v1998, %v2004
        %2011 = vst [vmem:[#allocation2 + $0x8] sm:$0xff] %v2005
        %2012 = vst [vmem:[#allocation2 + $0x10] sm:$0xff] %v2006
        %2013 = vst.msk [vmem:[#allocation2 + $0x18] sm:$0xff] %vm1266, %v2007
        %2014 = vst [vmem:[#allocation2 + $0x30] sm:$0xff] %v2008
        %2015 = vst [vmem:[#allocation2 + $0x38] sm:$0xff] %v2009
        %2016 = vst.msk [vmem:[#allocation2 + $0x40] sm:$0xff] %vm1266, %v2010
        %p2017 = scmp.eq.s32.totalorder %s31, 1
        // Predicated region
        $region73: #{tpu_custom_call.1} parent=67 // pred_check
          %p2018 = pneg %p2017
        $region74: #{tpu_custom_call.1} parent=67 // pred_check_branch
          %2020 = sbr.rel (%p2018) target = $region76
        $region75: #{tpu_custom_call.1} parent=67 // pred_region
          %v2021 = vld [vmem:[%s10] sm:$0xff]
          %v2022 = vld [vmem:[%s10 + $0x8] sm:$0xff]
          %v2023 = vld [vmem:[#allocation2] sm:$0xff]
          %v2024 = vld [vmem:[#allocation2 + $0x8] sm:$0xff]
          %v2025 = vld [vmem:[#allocation2 + $0x10] sm:$0xff]
          %v2026 = vld [vmem:[#allocation2 + $0x18] sm:$0xff]
          %v2027 = vld [vmem:[#allocation2 + $0x28] sm:$0xff]
          %v2028 = vld [vmem:[#allocation2 + $0x30] sm:$0xff]
          %v2029 = vld [vmem:[#allocation2 + $0x38] sm:$0xff]
          %v2030 = vld [vmem:[#allocation2 + $0x40] sm:$0xff]
          %v2031 = vpack.c.bf16 %v2024, %v2023
          %v2032 = vpack.c.bf16 %v2026, %v2025
          %v2033 = vpack.c.bf16 %v2028, %v2027
          %v2034 = vpack.c.bf16 %v2030, %v2029
          %2039 = vrot.lane.b32.xlu0 %v2031, 19
          %v2040 = vpop.permute.xlu0 %2039
          %2041 = vrot.lane.b32.xlu0 %v2032, 19
          %v2042 = vpop.permute.xlu0 %2041
          %2043 = vrot.lane.b32.xlu0 %v2033, 19
          %v2044 = vpop.permute.xlu0 %2043
          %2045 = vrot.lane.b32.xlu0 %v2034, 19
          %v2046 = vpop.permute.xlu0 %2045
          %v2047 = vrot.slane %v2040, 4
          %v2048 = vrot.slane %v2042, 4
          %v2049 = vrot.slane %v2044, 4
          %v2050 = vrot.slane %v2046, 4
          %v2051 = vsel %vm640, %v2047, %v2048
          %v2052 = vsel %vm642, %v2040, %v2051
          %v2053 = vsel %vm642, %v2042, %v2048
          %v2054 = vsel %vm640, %v2049, %v2050
          %v2055 = vsel %vm642, %v2044, %v2054
          %v2056 = vsel %vm642, %v2046, %v2050
          %2061 = vst [vmem:[#allocation4] sm:$0xff] %v2052
          %2062 = vst.msk [vmem:[#allocation4 + $0x8] sm:$0xf] %vm653, %v2053
          %2063 = vst [vmem:[#allocation4 + $0xc] sm:$0xff] %v2055
          %2064 = vst.msk [vmem:[#allocation4 + $0x14] sm:$0xf] %vm653, %v2056
          %v2065 = vld [vmem:[#allocation2] sm:$0xff]
          %v2066 = vld [vmem:[#allocation2 + $0x8] sm:$0xff]
          %v2067 = vld [vmem:[#allocation2 + $0x10] sm:$0xff]
          %v2068 = vld [vmem:[#allocation2 + $0x18] sm:$0xff]
          %v2069 = vld [vmem:[#allocation2 + $0x28] sm:$0xff]
          %v2070 = vld [vmem:[#allocation2 + $0x30] sm:$0xff]
          %v2071 = vld [vmem:[#allocation2 + $0x38] sm:$0xff]
          %v2072 = vld [vmem:[#allocation2 + $0x40] sm:$0xff]
          %v2073 = vpack.c.bf16 %v2066, %v2065
          %v2074 = vpack.c.bf16 %v2068, %v2067
          %v2075 = vpack.c.bf16 %v2070, %v2069
          %v2076 = vpack.c.bf16 %v2072, %v2071
          %2081 = vrot.lane.b32.xlu0 %v2073, 18
          %v2082 = vpop.permute.xlu0 %2081
          %2083 = vrot.lane.b32.xlu0 %v2074, 18
          %v2084 = vpop.permute.xlu0 %2083
          %2085 = vrot.lane.b32.xlu0 %v2075, 18
          %v2086 = vpop.permute.xlu0 %2085
          %2087 = vrot.lane.b32.xlu0 %v2076, 18
          %v2088 = vpop.permute.xlu0 %2087
          %v2089 = vrot.slane %v2082, 4
          %v2090 = vrot.slane %v2084, 4
          %v2091 = vrot.slane %v2086, 4
          %v2092 = vrot.slane %v2088, 4
          %v2093 = vsel %vm640, %v2089, %v2090
          %v2094 = vsel %vm686, %v2082, %v2093
          %v2095 = vsel %vm686, %v2084, %v2090
          %v2096 = vsel %vm640, %v2091, %v2092
          %v2097 = vsel %vm686, %v2086, %v2096
          %v2098 = vsel %vm686, %v2088, %v2092
          %2103 = vst [vmem:[#allocation4 + $0x18] sm:$0xff] %v2094
          %2104 = vst.msk [vmem:[#allocation4 + $0x20] sm:$0xf] %vm653, %v2095
          %2105 = vst [vmem:[#allocation4 + $0x24] sm:$0xff] %v2097
          %2106 = vst.msk [vmem:[#allocation4 + $0x2c] sm:$0xf] %vm653, %v2098
          %v2107 = vld [vmem:[#allocation2] sm:$0xff]
          %v2108 = vld [vmem:[#allocation2 + $0x8] sm:$0xff]
          %v2109 = vld [vmem:[#allocation2 + $0x10] sm:$0xff]
          %v2110 = vld [vmem:[#allocation2 + $0x18] sm:$0xff]
          %v2111 = vld [vmem:[#allocation2 + $0x28] sm:$0xff]
          %v2112 = vld [vmem:[#allocation2 + $0x30] sm:$0xff]
          %v2113 = vld [vmem:[#allocation2 + $0x38] sm:$0xff]
          %v2114 = vld [vmem:[#allocation2 + $0x40] sm:$0xff]
          %v2115 = vpack.c.bf16 %v2108, %v2107
          %v2116 = vpack.c.bf16 %v2110, %v2109
          %v2117 = vpack.c.bf16 %v2112, %v2111
          %v2118 = vpack.c.bf16 %v2114, %v2113
          %2123 = vrot.lane.b32.xlu0 %v2115, 17
          %v2124 = vpop.permute.xlu0 %2123
          %2125 = vrot.lane.b32.xlu0 %v2116, 17
          %v2126 = vpop.permute.xlu0 %2125
          %2127 = vrot.lane.b32.xlu0 %v2117, 17
          %v2128 = vpop.permute.xlu0 %2127
          %2129 = vrot.lane.b32.xlu0 %v2118, 17
          %v2130 = vpop.permute.xlu0 %2129
          %v2131 = vrot.slane %v2124, 4
          %v2132 = vrot.slane %v2126, 4
          %v2133 = vrot.slane %v2128, 4
          %v2134 = vrot.slane %v2130, 4
          %v2135 = vsel %vm640, %v2131, %v2132
          %v2136 = vsel %vm729, %v2124, %v2135
          %v2137 = vsel %vm729, %v2126, %v2132
          %v2138 = vsel %vm640, %v2133, %v2134
          %v2139 = vsel %vm729, %v2128, %v2138
          %v2140 = vsel %vm729, %v2130, %v2134
          %2145 = vst [vmem:[#allocation4 + $0x30] sm:$0xff] %v2136
          %2146 = vst.msk [vmem:[#allocation4 + $0x38] sm:$0xf] %vm653, %v2137
          %2147 = vst [vmem:[#allocation4 + $0x3c] sm:$0xff] %v2139
          %2148 = vst.msk [vmem:[#allocation4 + $0x44] sm:$0xf] %vm653, %v2140
          %v2149 = vld [vmem:[#allocation2] sm:$0xff]
          %v2150 = vld [vmem:[#allocation2 + $0x8] sm:$0xff]
          %v2151 = vld [vmem:[#allocation2 + $0x10] sm:$0xff]
          %v2152 = vld [vmem:[#allocation2 + $0x18] sm:$0xff]
          %v2153 = vld [vmem:[#allocation2 + $0x28] sm:$0xff]
          %v2154 = vld [vmem:[#allocation2 + $0x30] sm:$0xff]
          %v2155 = vld [vmem:[#allocation2 + $0x38] sm:$0xff]
          %v2156 = vld [vmem:[#allocation2 + $0x40] sm:$0xff]
          %v2157 = vpack.c.bf16 %v2150, %v2149
          %v2158 = vpack.c.bf16 %v2152, %v2151
          %v2159 = vpack.c.bf16 %v2154, %v2153
          %v2160 = vpack.c.bf16 %v2156, %v2155
          %2165 = vrot.lane.b32.xlu0 %v2157, 1
          %v2166 = vpop.permute.xlu0 %2165
          %2167 = vrot.lane.b32.xlu0 %v2158, 1
          %v2168 = vpop.permute.xlu0 %2167
          %2169 = vrot.lane.b32.xlu0 %v2159, 1
          %v2170 = vpop.permute.xlu0 %2169
          %2171 = vrot.lane.b32.xlu0 %v2160, 1
          %v2172 = vpop.permute.xlu0 %2171
          %v2173 = vrot.slane %v2166, 4
          %v2174 = vrot.slane %v2168, 4
          %v2175 = vrot.slane %v2170, 4
          %v2176 = vrot.slane %v2172, 4
          %v2177 = vsel %vm640, %v2173, %v2174
          %v2178 = vsel %vm772, %v2166, %v2177
          %v2179 = vsel %vm772, %v2168, %v2174
          %v2180 = vsel %vm640, %v2175, %v2176
          %v2181 = vsel %vm772, %v2170, %v2180
          %v2182 = vsel %vm772, %v2172, %v2176
          %2187 = vst [vmem:[#allocation4 + $0x48] sm:$0xff] %v2178
          %2188 = vst.msk [vmem:[#allocation4 + $0x50] sm:$0xf] %vm653, %v2179
          %2189 = vst [vmem:[#allocation4 + $0x54] sm:$0xff] %v2181
          %2190 = vst.msk [vmem:[#allocation4 + $0x5c] sm:$0xf] %vm653, %v2182
          %v2191 = vld [vmem:[#allocation2 + $0x8] sm:$0xff]
          %v2192 = vld [vmem:[#allocation2 + $0x10] sm:$0xff]
          %v2193 = vld [vmem:[#allocation2 + $0x18] sm:$0xff]
          %v2194 = vld [vmem:[#allocation2 + $0x30] sm:$0xff]
          %v2195 = vld [vmem:[#allocation2 + $0x38] sm:$0xff]
          %v2196 = vld [vmem:[#allocation2 + $0x40] sm:$0xff]
          %v2197 = vpack.c.bf16 %v2192, %v2191
          %v2198 = vpack.c.bf16 %v2193, %v2193
          %v2199 = vpack.c.bf16 %v2195, %v2194
          %v2200 = vpack.c.bf16 %v2196, %v2196
          %2201 = vst [vmem:[#allocation4 + $0x60] sm:$0xff] %v2197
          %2202 = vst.msk [vmem:[#allocation4 + $0x68] sm:$0xf] %vm653, %v2198
          %2203 = vst [vmem:[#allocation4 + $0x6c] sm:$0xff] %v2199
          %2204 = vst.msk [vmem:[#allocation4 + $0x74] sm:$0xf] %vm653, %v2200
          %v2205 = vld [vmem:[#allocation2 + $0x8] sm:$0xff]
          %v2206 = vld [vmem:[#allocation2 + $0x10] sm:$0xff]
          %v2207 = vld [vmem:[#allocation2 + $0x18] sm:$0xff]
          %v2208 = vld [vmem:[#allocation2 + $0x30] sm:$0xff]
          %v2209 = vld [vmem:[#allocation2 + $0x38] sm:$0xff]
          %v2210 = vld [vmem:[#allocation2 + $0x40] sm:$0xff]
          %v2211 = vpack.c.bf16 %v2206, %v2205
          %v2212 = vpack.c.bf16 %v2207, %v2207
          %v2213 = vpack.c.bf16 %v2209, %v2208
          %v2214 = vpack.c.bf16 %v2210, %v2210
          %2219 = vrot.lane.b32.xlu0 %v2211, 127
          %v2220 = vpop.permute.xlu0 %2219
          %2221 = vrot.lane.b32.xlu0 %v2212, 127
          %v2222 = vpop.permute.xlu0 %2221
          %2223 = vrot.lane.b32.xlu0 %v2213, 127
          %v2224 = vpop.permute.xlu0 %2223
          %2225 = vrot.lane.b32.xlu0 %v2214, 127
          %v2226 = vpop.permute.xlu0 %2225
          %v2227 = vrot.slane %v2220, 4
          %v2228 = vrot.slane %v2222, 4
          %v2229 = vrot.slane %v2224, 4
          %v2230 = vrot.slane %v2226, 4
          %v2231 = vsel %vm640, %v2227, %v2228
          %v2232 = vsel %vm827, %v2220, %v2231
          %v2233 = vsel %vm640, %v2229, %v2230
          %v2234 = vsel %vm827, %v2224, %v2233
          %2239 = vst [vmem:[#allocation4 + $0x78] sm:$0xff] %v2232
          %2240 = vst.msk [vmem:[#allocation4 + $0x80] sm:$0xf] %vm653, %v2222
          %2241 = vst [vmem:[#allocation4 + $0x84] sm:$0xff] %v2234
          %2242 = vst.msk [vmem:[#allocation4 + $0x8c] sm:$0xf] %vm653, %v2226
          %v2243 = vld [vmem:[#allocation2 + $0x8] sm:$0xff]
          %v2244 = vld [vmem:[#allocation2 + $0x10] sm:$0xff]
          %v2245 = vld [vmem:[#allocation2 + $0x18] sm:$0xff]
          %v2246 = vld [vmem:[#allocation2 + $0x30] sm:$0xff]
          %v2247 = vld [vmem:[#allocation2 + $0x38] sm:$0xff]
          %v2248 = vld [vmem:[#allocation2 + $0x40] sm:$0xff]
          %v2249 = vpack.c.bf16 %v2244, %v2243
          %v2250 = vpack.c.bf16 %v2245, %v2245
          %v2251 = vpack.c.bf16 %v2247, %v2246
          %v2252 = vpack.c.bf16 %v2248, %v2248
          %2257 = vrot.lane.b32.xlu0 %v2249, 111
          %v2258 = vpop.permute.xlu0 %2257
          %2259 = vrot.lane.b32.xlu0 %v2250, 111
          %v2260 = vpop.permute.xlu0 %2259
          %2261 = vrot.lane.b32.xlu0 %v2251, 111
          %v2262 = vpop.permute.xlu0 %2261
          %2263 = vrot.lane.b32.xlu0 %v2252, 111
          %v2264 = vpop.permute.xlu0 %2263
          %v2265 = vrot.slane %v2258, 4
          %v2266 = vrot.slane %v2260, 4
          %v2267 = vrot.slane %v2262, 4
          %v2268 = vrot.slane %v2264, 4
          %v2269 = vsel %vm640, %v2265, %v2266
          %v2270 = vsel %vm866, %v2258, %v2269
          %v2271 = vsel %vm640, %v2267, %v2268
          %v2272 = vsel %vm866, %v2262, %v2271
          %2277 = vst [vmem:[#allocation4 + $0x90] sm:$0xff] %v2270
          %2278 = vst.msk [vmem:[#allocation4 + $0x98] sm:$0xf] %vm653, %v2260
          %2279 = vst [vmem:[#allocation4 + $0x9c] sm:$0xff] %v2272
          %2280 = vst.msk [vmem:[#allocation4 + $0xa4] sm:$0xf] %vm653, %v2264
          %v2281 = vld [vmem:[#allocation2 + $0x8] sm:$0xff]
          %v2282 = vld [vmem:[#allocation2 + $0x10] sm:$0xff]
          %v2283 = vld [vmem:[#allocation2 + $0x18] sm:$0xff]
          %v2284 = vld [vmem:[#allocation2 + $0x30] sm:$0xff]
          %v2285 = vld [vmem:[#allocation2 + $0x38] sm:$0xff]
          %v2286 = vld [vmem:[#allocation2 + $0x40] sm:$0xff]
          %v2287 = vpack.c.bf16 %v2282, %v2281
          %v2288 = vpack.c.bf16 %v2283, %v2283
          %v2289 = vpack.c.bf16 %v2285, %v2284
          %v2290 = vpack.c.bf16 %v2286, %v2286
          %2295 = vrot.lane.b32.xlu0 %v2287, 110
          %v2296 = vpop.permute.xlu0 %2295
          %2297 = vrot.lane.b32.xlu0 %v2288, 110
          %v2298 = vpop.permute.xlu0 %2297
          %2299 = vrot.lane.b32.xlu0 %v2289, 110
          %v2300 = vpop.permute.xlu0 %2299
          %2301 = vrot.lane.b32.xlu0 %v2290, 110
          %v2302 = vpop.permute.xlu0 %2301
          %v2303 = vrot.slane %v2296, 4
          %v2304 = vrot.slane %v2298, 4
          %v2305 = vrot.slane %v2300, 4
          %v2306 = vrot.slane %v2302, 4
          %v2307 = vsel %vm640, %v2303, %v2304
          %v2308 = vsel %vm905, %v2296, %v2307
          %v2309 = vsel %vm640, %v2305, %v2306
          %v2310 = vsel %vm905, %v2300, %v2309
          %2315 = vst [vmem:[#allocation4 + $0xa8] sm:$0xff] %v2308
          %2316 = vst.msk [vmem:[#allocation4 + $0xb0] sm:$0xf] %vm653, %v2298
          %2317 = vst [vmem:[#allocation4 + $0xb4] sm:$0xff] %v2310
          %2318 = vst.msk [vmem:[#allocation4 + $0xbc] sm:$0xf] %vm653, %v2302
          %v2319 = vld [vmem:[#allocation2 + $0x8] sm:$0xff]
          %v2320 = vld [vmem:[#allocation2 + $0x10] sm:$0xff]
          %v2321 = vld [vmem:[#allocation2 + $0x18] sm:$0xff]
          %v2322 = vld [vmem:[#allocation2 + $0x30] sm:$0xff]
          %v2323 = vld [vmem:[#allocation2 + $0x38] sm:$0xff]
          %v2324 = vld [vmem:[#allocation2 + $0x40] sm:$0xff]
          %v2325 = vpack.c.bf16 %v2320, %v2319
          %v2326 = vpack.c.bf16 %v2321, %v2321
          %v2327 = vpack.c.bf16 %v2323, %v2322
          %v2328 = vpack.c.bf16 %v2324, %v2324
          %2333 = vrot.lane.b32.xlu0 %v2325, 109
          %v2334 = vpop.permute.xlu0 %2333
          %2335 = vrot.lane.b32.xlu0 %v2326, 109
          %v2336 = vpop.permute.xlu0 %2335
          %2337 = vrot.lane.b32.xlu0 %v2327, 109
          %v2338 = vpop.permute.xlu0 %2337
          %2339 = vrot.lane.b32.xlu0 %v2328, 109
          %v2340 = vpop.permute.xlu0 %2339
          %v2341 = vrot.slane %v2334, 4
          %v2342 = vrot.slane %v2336, 4
          %v2343 = vrot.slane %v2338, 4
          %v2344 = vrot.slane %v2340, 4
          %v2345 = vsel %vm640, %v2341, %v2342
          %v2346 = vsel %vm944, %v2334, %v2345
          %v2347 = vsel %vm640, %v2343, %v2344
          %v2348 = vsel %vm944, %v2338, %v2347
          %2353 = vst [vmem:[#allocation4 + $0xc0] sm:$0xff] %v2346
          %2354 = vst.msk [vmem:[#allocation4 + $0xc8] sm:$0xf] %vm653, %v2336
          %2355 = vst [vmem:[#allocation4 + $0xcc] sm:$0xff] %v2348
          %2356 = vst.msk [vmem:[#allocation4 + $0xd4] sm:$0xf] %vm653, %v2340
          %v2357 = vld [vmem:[#allocation4] sm:$0xff]
          %v2358 = vld [vmem:[#allocation4 + $0x8] sm:$0xf]
          %v2359 = vld [vmem:[#allocation4 + $0xc] sm:$0xff]
          %v2360 = vld [vmem:[#allocation4 + $0x14] sm:$0xf]
          %v2361 = vld [vmem:[#allocation4 + $0x18] sm:$0xff]
          %v2362 = vld [vmem:[#allocation4 + $0x20] sm:$0xf]
          %v2363 = vld [vmem:[#allocation4 + $0x24] sm:$0xff]
          %v2364 = vld [vmem:[#allocation4 + $0x2c] sm:$0xf]
          %v2365 = vld [vmem:[#allocation4 + $0x30] sm:$0xff]
          %v2366 = vld [vmem:[#allocation4 + $0x38] sm:$0xf]
          %v2367 = vld [vmem:[#allocation4 + $0x3c] sm:$0xff]
          %v2368 = vld [vmem:[#allocation4 + $0x44] sm:$0xf]
          %v2369 = vld [vmem:[#allocation4 + $0x48] sm:$0xff]
          %v2370 = vld [vmem:[#allocation4 + $0x50] sm:$0xf]
          %v2371 = vld [vmem:[#allocation4 + $0x54] sm:$0xff]
          %v2372 = vld [vmem:[#allocation4 + $0x5c] sm:$0xf]
          %v2373 = vld [vmem:[#allocation4 + $0x60] sm:$0xff]
          %v2374 = vld [vmem:[#allocation4 + $0x68] sm:$0xf]
          %v2375 = vld [vmem:[#allocation4 + $0x6c] sm:$0xff]
          %v2376 = vld [vmem:[#allocation4 + $0x74] sm:$0xf]
          %v2377 = vld [vmem:[#allocation4 + $0x78] sm:$0xff]
          %v2378 = vld [vmem:[#allocation4 + $0x80] sm:$0xf]
          %v2379 = vld [vmem:[#allocation4 + $0x84] sm:$0xff]
          %v2380 = vld [vmem:[#allocation4 + $0x8c] sm:$0xf]
          %v2381 = vld [vmem:[#allocation4 + $0x90] sm:$0xff]
          %v2382 = vld [vmem:[#allocation4 + $0x98] sm:$0xf]
          %v2383 = vld [vmem:[#allocation4 + $0x9c] sm:$0xff]
          %v2384 = vld [vmem:[#allocation4 + $0xa4] sm:$0xf]
          %v2385 = vld [vmem:[#allocation4 + $0xa8] sm:$0xff]
          %v2386 = vld [vmem:[#allocation4 + $0xb0] sm:$0xf]
          %v2387 = vld [vmem:[#allocation4 + $0xb4] sm:$0xff]
          %v2388 = vld [vmem:[#allocation4 + $0xbc] sm:$0xf]
          %v2389 = vld [vmem:[#allocation4 + $0xc0] sm:$0xff]
          %v2390 = vld [vmem:[#allocation4 + $0xc8] sm:$0xf]
          %v2391 = vld [vmem:[#allocation4 + $0xcc] sm:$0xff]
          %v2392 = vld [vmem:[#allocation4 + $0xd4] sm:$0xf]
          %v2393 = vld [vmem:[%s11] sm:$0xff]
          %v2394 = vld [vmem:[%s11 + $0x8] sm:$0xff]
          %2396 = vset.pattern.permute.xlu0 0
          %2397 = vperm.xlu0 %2396, %v2393
          %v2398 = vpop.permute.xlu0 %2397
          %2401 = vset.pattern.permute.xlu0 0
          %2402 = vperm.xlu0 %2401, %v2394
          %v2403 = vpop.permute.xlu0 %2402
          %v2407 = vunpack.c.l.b16 %v2021
          %v2408 = vunpack.c.h.b16 %v2021
          %v2409 = vunpack.c.l.b16 %v2022
          %v2410 = vunpack.c.h.b16 %v2022
          %v2411 = vpack.c.b16 %v2409, %v2407
          %v2412 = vpack.c.b16 %v2410, %v2408
          %v2450 = vunpack.c.l.b16 %v2357
          %v2451 = vunpack.c.h.b16 %v2357
          %v2452 = vunpack.c.l.b16 %v2358
          %v2453 = vunpack.c.l.b16 %v2359
          %v2454 = vunpack.c.h.b16 %v2359
          %v2455 = vunpack.c.l.b16 %v2360
          %v2456 = vunpack.c.l.b16 %v2361
          %v2457 = vunpack.c.h.b16 %v2361
          %v2458 = vunpack.c.l.b16 %v2362
          %v2459 = vunpack.c.l.b16 %v2363
          %v2460 = vunpack.c.h.b16 %v2363
          %v2461 = vunpack.c.l.b16 %v2364
          %v2462 = vunpack.c.l.b16 %v2365
          %v2463 = vunpack.c.h.b16 %v2365
          %v2464 = vunpack.c.l.b16 %v2366
          %v2465 = vunpack.c.l.b16 %v2367
          %v2466 = vunpack.c.h.b16 %v2367
          %v2467 = vunpack.c.l.b16 %v2368
          %v2468 = vunpack.c.l.b16 %v2369
          %v2469 = vunpack.c.h.b16 %v2369
          %v2470 = vunpack.c.l.b16 %v2370
          %v2471 = vunpack.c.l.b16 %v2371
          %v2472 = vunpack.c.h.b16 %v2371
          %v2473 = vunpack.c.l.b16 %v2372
          %v2474 = vunpack.c.l.b16 %v2373
          %v2475 = vunpack.c.h.b16 %v2373
          %v2476 = vunpack.c.l.b16 %v2374
          %v2477 = vunpack.c.l.b16 %v2375
          %v2478 = vunpack.c.h.b16 %v2375
          %v2479 = vunpack.c.l.b16 %v2376
          %v2480 = vunpack.c.l.b16 %v2377
          %v2481 = vunpack.c.h.b16 %v2377
          %v2482 = vunpack.c.l.b16 %v2378
          %v2483 = vunpack.c.l.b16 %v2379
          %v2484 = vunpack.c.h.b16 %v2379
          %v2485 = vunpack.c.l.b16 %v2380
          %v2486 = vunpack.c.l.b16 %v2381
          %v2487 = vunpack.c.h.b16 %v2381
          %v2488 = vunpack.c.l.b16 %v2382
          %v2489 = vunpack.c.l.b16 %v2383
          %v2490 = vunpack.c.h.b16 %v2383
          %v2491 = vunpack.c.l.b16 %v2384
          %v2492 = vunpack.c.l.b16 %v2385
          %v2493 = vunpack.c.h.b16 %v2385
          %v2494 = vunpack.c.l.b16 %v2386
          %v2495 = vunpack.c.l.b16 %v2387
          %v2496 = vunpack.c.h.b16 %v2387
          %v2497 = vunpack.c.l.b16 %v2388
          %v2498 = vunpack.c.l.b16 %v2389
          %v2499 = vunpack.c.h.b16 %v2389
          %v2500 = vunpack.c.l.b16 %v2390
          %v2501 = vunpack.c.l.b16 %v2391
          %v2502 = vunpack.c.h.b16 %v2391
          %v2503 = vunpack.c.l.b16 %v2392
          %v2504 = vpack.c.b16 %v2453, %v2450
          %v2505 = vpack.c.b16 %v2454, %v2451
          %v2506 = vpack.c.b16 %v2455, %v2452
          %v2507 = vpack.c.b16 %v2459, %v2456
          %v2508 = vpack.c.b16 %v2460, %v2457
          %v2509 = vpack.c.b16 %v2461, %v2458
          %v2510 = vpack.c.b16 %v2465, %v2462
          %v2511 = vpack.c.b16 %v2466, %v2463
          %v2512 = vpack.c.b16 %v2467, %v2464
          %v2513 = vpack.c.b16 %v2471, %v2468
          %v2514 = vpack.c.b16 %v2472, %v2469
          %v2515 = vpack.c.b16 %v2473, %v2470
          %v2516 = vpack.c.b16 %v2477, %v2474
          %v2517 = vpack.c.b16 %v2478, %v2475
          %v2518 = vpack.c.b16 %v2479, %v2476
          %v2519 = vpack.c.b16 %v2483, %v2480
          %v2520 = vpack.c.b16 %v2484, %v2481
          %v2521 = vpack.c.b16 %v2485, %v2482
          %v2522 = vpack.c.b16 %v2489, %v2486
          %v2523 = vpack.c.b16 %v2490, %v2487
          %v2524 = vpack.c.b16 %v2491, %v2488
          %v2525 = vpack.c.b16 %v2495, %v2492
          %v2526 = vpack.c.b16 %v2496, %v2493
          %v2527 = vpack.c.b16 %v2497, %v2494
          %v2528 = vpack.c.b16 %v2501, %v2498
          %v2529 = vpack.c.b16 %v2502, %v2499
          %v2530 = vpack.c.b16 %v2503, %v2500
          %v2559 = vsel %vm1157, %v2412, 0
          %2561 = vmatpush.bf16.msra.mxu0 %v2525
          %2562 = vmatpush.bf16.msra.mxu0 %v2522
          %2563 = vmatpush.bf16.msra.mxu0 %v2519
          %2564 = vmatpush.bf16.msra.mxu0 %v2516
          %2565 = vmatpush.bf16.msra.mxu0 %v2513
          %2566 = vmatpush.bf16.msra.mxu0 %v2510
          %2567 = vmatpush.bf16.msra.mxu0 %v2507
          %2568 = vmatpush.bf16.msra.mxu0 %v2504
          %2569 = vmatmul.bf16.gmra.mxu0 %v2411
          %v2570 = vpop.f32.mrf.mxu0
          %v2571 = vadd.f32 %v2398, %v2570
          %v2572 = vpop.f32.mrf.mxu0
          %v2573 = vadd.f32 %v2403, %v2572
          %2574 = vdwg.mxu0
          %2575 = vmatpush.bf16.msra.mxu0 0
          %2576 = vmatpush.bf16.msra.mxu0 0
          %2577 = vmatpush.bf16.msra.mxu0 0
          %2578 = vmatpush.bf16.msra.mxu0 0
          %2579 = vmatpush.bf16.msra.mxu0 0
          %2580 = vmatpush.bf16.msra.mxu0 0
          %2581 = vmatpush.bf16.msra.mxu0 0
          %2582 = vmatpush.bf16.msra.mxu0 %v2528
          %2583 = vmatmul.bf16.gmra.mxu0 %v2559
          %v2584 = vpop.f32.mrf.mxu0
          %v2585 = vadd.f32 %v2571, %v2584
          %v2586 = vpop.f32.mrf.mxu0
          %v2587 = vadd.f32 %v2573, %v2586
          %2588 = vdwg.mxu0
          %2589 = vmatpush.bf16.msra.mxu0 %v2526
          %2590 = vmatpush.bf16.msra.mxu0 %v2523
          %2591 = vmatpush.bf16.msra.mxu0 %v2520
          %2592 = vmatpush.bf16.msra.mxu0 %v2517
          %2593 = vmatpush.bf16.msra.mxu0 %v2514
          %2594 = vmatpush.bf16.msra.mxu0 %v2511
          %2595 = vmatpush.bf16.msra.mxu0 %v2508
          %2596 = vmatpush.bf16.msra.mxu0 %v2505
          %2597 = vmatmul.bf16.gmra.mxu0 %v2411
          %v2598 = vpop.f32.mrf.mxu0
          %v2599 = vadd.f32 %v2398, %v2598
          %v2600 = vpop.f32.mrf.mxu0
          %v2601 = vadd.f32 %v2403, %v2600
          %2602 = vdwg.mxu0
          %2603 = vmatpush.bf16.msra.mxu0 0
          %2604 = vmatpush.bf16.msra.mxu0 0
          %2605 = vmatpush.bf16.msra.mxu0 0
          %2606 = vmatpush.bf16.msra.mxu0 0
          %2607 = vmatpush.bf16.msra.mxu0 0
          %2608 = vmatpush.bf16.msra.mxu0 0
          %2609 = vmatpush.bf16.msra.mxu0 0
          %2610 = vmatpush.bf16.msra.mxu0 %v2529
          %2611 = vmatmul.bf16.gmra.mxu0 %v2559
          %v2612 = vpop.f32.mrf.mxu0
          %v2613 = vadd.f32 %v2599, %v2612
          %v2614 = vpop.f32.mrf.mxu0
          %v2615 = vadd.f32 %v2601, %v2614
          %2616 = vdwg.mxu0
          %2617 = vmatpush.bf16.msra.mxu0 %v2527
          %2618 = vmatpush.bf16.msra.mxu0 %v2524
          %2619 = vmatpush.bf16.msra.mxu0 %v2521
          %2620 = vmatpush.bf16.msra.mxu0 %v2518
          %2621 = vmatpush.bf16.msra.mxu0 %v2515
          %2622 = vmatpush.bf16.msra.mxu0 %v2512
          %2623 = vmatpush.bf16.msra.mxu0 %v2509
          %2624 = vmatpush.bf16.msra.mxu0 %v2506
          %2625 = vmatmul.bf16.gmra.mxu0 %v2411
          %v2626 = vpop.f32.mrf.mxu0
          %v2627 = vadd.f32 %v2398, %v2626
          %v2628 = vpop.f32.mrf.mxu0
          %v2629 = vadd.f32 %v2403, %v2628
          %2630 = vdwg.mxu0
          %2631 = vmatpush.bf16.msra.mxu0 0
          %2632 = vmatpush.bf16.msra.mxu0 0
          %2633 = vmatpush.bf16.msra.mxu0 0
          %2634 = vmatpush.bf16.msra.mxu0 0
          %2635 = vmatpush.bf16.msra.mxu0 0
          %2636 = vmatpush.bf16.msra.mxu0 0
          %2637 = vmatpush.bf16.msra.mxu0 0
          %2638 = vmatpush.bf16.msra.mxu0 %v2530
          %2639 = vmatmul.bf16.gmra.mxu0 %v2559
          %v2640 = vpop.f32.mrf.mxu0
          %v2641 = vadd.f32 %v2627, %v2640
          %v2642 = vpop.f32.mrf.mxu0
          %v2643 = vadd.f32 %v2629, %v2642
          %2644 = vdwg.mxu0
          %v2645 = vmul.f32 %v2585, %v1252
          %v2646 = vmul.f32 %v2613, %v1253
          %v2647 = vmul.f32 %v2641, %v1254
          %v2648 = vmul.f32 %v2587, %v1252
          %v2649 = vmul.f32 %v2615, %v1253
          %v2650 = vmul.f32 %v2643, %v1254
          %v2651 = vld [vmem:[%s539] sm:$0xff]
          %v2652 = vld [vmem:[%s539 + $0x8] sm:$0xff]
          %v2653 = vld [vmem:[%s539 + $0x10] sm:$0xff]
          %v2654 = vld [vmem:[%s539 + $0x18] sm:$0xff]
          %v2655 = vld [vmem:[%s539 + $0x20] sm:$0xff]
          %v2656 = vld [vmem:[%s539 + $0x28] sm:$0xff]
          %v2657 = vadd.f32 %v2645, %v2651
          %v2658 = vadd.f32 %v2646, %v2652
          %v2659 = vadd.f32 %v2647, %v2653
          %v2660 = vadd.f32 %v2648, %v2654
          %v2661 = vadd.f32 %v2649, %v2655
          %v2662 = vadd.f32 %v2650, %v2656
          %2663 = vst [vmem:[%s534] sm:$0xff] %v2657
          %2664 = vst [vmem:[%s534 + $0x8] sm:$0xff] %v2658
          %2665 = vst.msk [vmem:[%s534 + $0x10] sm:$0xff] %vm1266, %v2659
          %2666 = vst [vmem:[%s534 + $0x18] sm:$0xff] %v2660
          %2667 = vst [vmem:[%s534 + $0x20] sm:$0xff] %v2661
          %2668 = vst.msk [vmem:[%s534 + $0x28] sm:$0xff] %vm1266, %v2662
        $region76: #{tpu_custom_call.1} parent=67 // pred_fallthru
          _
        %s2669 = sand.u32 %s343, 1
        %s2670 = scalar_lea.sflag [#allocation6], %s2669
        %s2671 = sand.u32 %s343, 1
        %s2672 = smul.addr %s2671, 48
        %s2673 = scalar_lea.vmem [#allocation5], %s2672
        // Predicated region
        $region77: #{tpu_custom_call.1} parent=67 // pred_check
          %p2674 = pneg %p353
        $region78: #{tpu_custom_call.1} parent=67 // pred_check_branch
          %2676 = sbr.rel (%p2674) target = $region80
        $region79: #{tpu_custom_call.1} parent=67 // pred_region
          %2678 = vsyncadd %s2670, 0
          %s2679 = smul.addr %s30, 6
          %s2680 = smul.addr %s2679, 8
          %s2681 = scalar_lea.hbm %s12, %s2680
          %s2682 = sshll.u32 %s2673, 4
          %s2683 = int_to_ptr.vmem [resolvable:$true] %s2682
          %s2684 = sshll.u32 %s2681, 4
          %s2685 = int_to_ptr.hbm [resolvable:$true] %s2684
          %2690 = dma.vmem_to_hbm [thread:$0]  %s2683, 768, %s2685, %s2670, 384, 384, 24
        $region80: #{tpu_custom_call.1} parent=67 // pred_fallthru
          _
      $region68: #{tpu_custom_call.1} parent=5 // pred_fallthru
        _
      %p2691 = scmp.le.s32.totalorder 2, %s21
      // Predicated region
      $region81: #{tpu_custom_call.1} parent=5 // pred_check
        %p2692 = pneg %p2691
      $region82: #{tpu_custom_call.1} parent=5 // pred_check_branch
        %2694 = sbr.rel (%p2692) target = $region84
      $region83: #{tpu_custom_call.1} parent=5 // pred_region
        %s2695 = ssub.s32 %s21, 2
        // Predicated region
        $region85: #{tpu_custom_call.1} parent=83 // pred_check
          %p2696 = pneg %p359
        $region86: #{tpu_custom_call.1} parent=83 // pred_check_branch
          %2698 = sbr.rel (%p2696) target = $region88
        $region87: #{tpu_custom_call.1} parent=83 // pred_region
          %s2699 = sand.u32 %s344, 1
          %s2700 = scalar_lea.sflag [#allocation6], %s2699
          %s2701 = sand.u32 %s344, 1
          %s2702 = smul.addr %s2701, 48
          %s2703 = scalar_lea.vmem [#allocation5], %s2702
          %2705 = dma.done %s2700, 768
        $region88: #{tpu_custom_call.1} parent=83 // pred_fallthru
          _
      $region84: #{tpu_custom_call.1} parent=5 // pred_fallthru
        _
    $region6: #{tpu_custom_call.1} parent=1 // loop_footer
      %s25 = sadd.s32 1, %s21
    $region7: #{tpu_custom_call.1} parent=1 // loop_footer_branch
      %20 = sbr.rel target = $region3
    $region8: #{tpu_custom_call.1} parent=1 // loop_exit
      _
    %2706 = vsyncpa [#allocation6], 1
    %s2707 = scalar_lea.sflag [#allocation6], 1
    %2708 = vsyncpa %s2707, 1

</llo_original>
